<compile_context>
chip_gen: v6e
topology: v6e:2x2x1
jax: 0.10.0
libtpu: 0.0.40
codegen_flags: <defaults>
</compile_context>

<pallas_src>
import functools
import random

import jax
import jax.numpy as jnp
from jax.experimental import pallas as pl
from jax.experimental.pallas import tpu as pltpu


# ----------------------------------------------------------------------------
# small helpers
# ----------------------------------------------------------------------------
def _round_up(x, m):
    return ((x + m - 1) // m) * m


def _lstm_gates(gates, c_prev, hp):
    """gates: [B, 4*hp] (i, f, g, o); returns (h_new, c_new). Lane-aligned slices."""
    i_g = jax.nn.sigmoid(gates[:, 0 * hp:1 * hp])
    f_g = jax.nn.sigmoid(gates[:, 1 * hp:2 * hp])
    g_g = jnp.tanh(gates[:, 2 * hp:3 * hp])
    o_g = jax.nn.sigmoid(gates[:, 3 * hp:4 * hp])
    c_new = f_g * c_prev + i_g * g_g
    h_new = o_g * jnp.tanh(c_new)
    return h_new, c_new


# ----------------------------------------------------------------------------
# Pallas kernels
# ----------------------------------------------------------------------------
def _linear_kernel(x_ref, w_ref, b_ref, o_ref):
    o_ref[...] = (jnp.dot(x_ref[...], w_ref[...],
                          preferred_element_type=jnp.float32) + b_ref[...])


def linear(x, w, b):
    """Single-block matmul (used for the hoisted layer-0 input projection)."""
    return pl.pallas_call(
        _linear_kernel,
        out_shape=jax.ShapeDtypeStruct((x.shape[0], w.shape[1]), jnp.float32),
    )(x, w, b)


def _encoder_kernel(gx0_ref, wih_ref, whh_ref, b_ref, h_ref, c_ref):
    """One grid step == one encoder timestep over the full layer stack.

    h_ref / c_ref have constant output index_maps, so they stay resident in
    VMEM across the whole time grid and double as the recurrent state.
    gx0_ref already contains x @ W_ih[0] + b[0] (hoisted, non-recurrent);
    wih_ref[0] is therefore unused inside the kernel.
    """
    t = pl.program_id(0)
    n_layers = whh_ref.shape[0]
    hp = whh_ref.shape[1]

    @pl.when(t == 0)
    def _init():
        h_ref[...] = jnp.zeros_like(h_ref)
        c_ref[...] = jnp.zeros_like(c_ref)

    layer_in = None
    for l in range(n_layers):
        h_prev = h_ref[l]
        c_prev = c_ref[l]
        if l == 0:
            gates = gx0_ref[0] + jnp.dot(
                h_prev, whh_ref[l], preferred_element_type=jnp.float32)
        else:
            gates = (jnp.dot(layer_in, wih_ref[l],
                             preferred_element_type=jnp.float32)
                     + jnp.dot(h_prev, whh_ref[l],
                               preferred_element_type=jnp.float32)
                     + b_ref[l])
        h_new, c_new = _lstm_gates(gates, c_prev, hp)
        h_ref[l] = h_new
        c_ref[l] = c_new
        layer_in = h_new


def _decoder_kernel(sel_ref, teach_ref, embp_ref, wih_ref, whh_ref, b_ref,
                    h0_ref, c0_ref, fcw_ref, fcb_ref, out_ref,
                    h_sc, c_sc, prev_sc, *, vocab):
    """One grid step == one decoded timestep (all layers + output projection).

    Teacher-forcing decisions arrive via scalar prefetch (SMEM).  The greedy
    (argmax) feedback path is computed from the previous step's logits kept in
    VMEM scratch.  embp_ref holds emb @ W_ih[0] (precomputed), so embedding
    lookup + layer-0 input projection are a single one-hot matmul on the MXU;
    wih_ref[0] is unused inside the kernel.
    """
    i = pl.program_id(0)
    n_layers = whh_ref.shape[0]
    hp = whh_ref.shape[1]
    bp, vp = prev_sc.shape

    @pl.when(i == 0)
    def _init():
        h_sc[...] = h0_ref[...]
        c_sc[...] = c0_ref[...]
        prev_sc[...] = jnp.zeros_like(prev_sc)

    # ---- choose input token: teacher-forced vs argmax(previous logits) ----
    lane_i = jax.lax.broadcasted_iota(jnp.int32, (bp, vp), 1)
    lane_f = lane_i.astype(jnp.float32)
    prev = jnp.where(lane_i < vocab, prev_sc[...], -1e30)   # mask padded vocab
    maxv = jnp.max(prev, axis=-1, keepdims=True)
    idx = jnp.min(jnp.where(prev == maxv, lane_f, float(vp)),
                  axis=-1, keepdims=True)                   # first-max tie-break
    top1_oh = (lane_f == idx).astype(jnp.float32)
    tf = (sel_ref[i] > 0).astype(jnp.float32)
    inp_oh = tf * teach_ref[0] + (1.0 - tf) * top1_oh       # [BP, VP] one-hot

    # ---- stacked LSTM layers, state resident in VMEM scratch ----
    layer_in = None
    for l in range(n_layers):
        if l == 0:
            # fused (embedding lookup + input projection): one-hot @ (emb@Wih0)
            gates = (jnp.dot(inp_oh, embp_ref[...],
                             preferred_element_type=jnp.float32)
                     + jnp.dot(h_sc[l], whh_ref[l],
                               preferred_element_type=jnp.float32)
                     + b_ref[l])
        else:
            gates = (jnp.dot(layer_in, wih_ref[l],
                             preferred_element_type=jnp.float32)
                     + jnp.dot(h_sc[l], whh_ref[l],
                               preferred_element_type=jnp.float32)
                     + b_ref[l])
        h_new, c_new = _lstm_gates(gates, c_sc[l], hp)
        h_sc[l] = h_new
        c_sc[l] = c_new
        layer_in = h_new

    # ---- fused output projection (lane-dense padded vocab) ----
    logits = (jnp.dot(layer_in, fcw_ref[...],
                      preferred_element_type=jnp.float32) + fcb_ref[...])
    out_ref[0] = logits
    prev_sc[...] = logits


# ----------------------------------------------------------------------------
# pallas_call wrappers (fused recurrences)
# ----------------------------------------------------------------------------
def encoder_recurrence(gx0, wih, whh, b):
    s, bp, g4 = gx0.shape
    n_layers = whh.shape[0]
    hp = whh.shape[1]
    grid_spec = pltpu.PrefetchScalarGridSpec(
        num_scalar_prefetch=0,
        grid=(s,),
        in_specs=[
            pl.BlockSpec((1, bp, g4), lambda t: (t, 0, 0)),   # per-step gates
            pl.BlockSpec(wih.shape, lambda t: (0, 0, 0)),     # weights resident
            pl.BlockSpec(whh.shape, lambda t: (0, 0, 0)),     # weights resident
            pl.BlockSpec(b.shape, lambda t: (0, 0, 0)),       # bias resident
        ],
        out_specs=(
            pl.BlockSpec((n_layers, bp, hp), lambda t: (0, 0, 0)),  # h state
            pl.BlockSpec((n_layers, bp, hp), lambda t: (0, 0, 0)),  # c state
        ),
    )
    return pl.pallas_call(
        _encoder_kernel,
        grid_spec=grid_spec,
        out_shape=(jax.ShapeDtypeStruct((n_layers, bp, hp), jnp.float32),
                   jax.ShapeDtypeStruct((n_layers, bp, hp), jnp.float32)),
        compiler_params=pltpu.CompilerParams(
            dimension_semantics=("arbitrary",)),
    )(gx0, wih, whh, b)


def decoder_recurrence(sel_mask, teach_oh, emb_proj, wih, whh, b, h0, c0,
                       fc_w, fc_b, vocab):
    t_steps, bp, vp = teach_oh.shape
    n_layers = whh.shape[0]
    hp = whh.shape[1]
    kernel = functools.partial(_decoder_kernel, vocab=vocab)
    grid_spec = pltpu.PrefetchScalarGridSpec(
        num_scalar_prefetch=1,                                # sel_mask -> SMEM
        grid=(t_steps,),
        in_specs=[
            pl.BlockSpec((1, bp, vp), lambda i, sel: (i, 0, 0)),    # teacher one-hots
            pl.BlockSpec(emb_proj.shape, lambda i, sel: (0, 0)),    # resident
            pl.BlockSpec(wih.shape, lambda i, sel: (0, 0, 0)),      # resident
            pl.BlockSpec(whh.shape, lambda i, sel: (0, 0, 0)),      # resident
            pl.BlockSpec(b.shape, lambda i, sel: (0, 0, 0)),        # resident
            pl.BlockSpec(h0.shape, lambda i, sel: (0, 0, 0)),       # resident
            pl.BlockSpec(c0.shape, lambda i, sel: (0, 0, 0)),       # resident
            pl.BlockSpec(fc_w.shape, lambda i, sel: (0, 0)),        # resident
            pl.BlockSpec(fc_b.shape, lambda i, sel: (0, 0)),        # resident
        ],
        out_specs=pl.BlockSpec((1, bp, vp), lambda i, sel: (i, 0, 0)),
        scratch_shapes=[pltpu.VMEM((n_layers, bp, hp), jnp.float32),
                        pltpu.VMEM((n_layers, bp, hp), jnp.float32),
                        pltpu.VMEM((bp, vp), jnp.float32)],
    )
    return pl.pallas_call(
        kernel,
        grid_spec=grid_spec,
        out_shape=jax.ShapeDtypeStruct((t_steps, bp, vp), jnp.float32),
        compiler_params=pltpu.CompilerParams(
            dimension_semantics=("arbitrary",)),
    )(sel_mask, teach_oh, emb_proj, wih, whh, b, h0, c0, fc_w, fc_b)


# ----------------------------------------------------------------------------
# parameter construction (logical, unpadded) + padded packing for the kernels
# ----------------------------------------------------------------------------
def _uniform(key, shape, scale=0.1):
    return jax.random.uniform(key, shape, jnp.float32, -scale, scale)


def init_lstm_stack(key, input_dim, hidden_dim, n_layers):
    layers = []
    for l in range(n_layers):
        key, k1, k2, k3 = jax.random.split(key, 4)
        in_dim = input_dim if l == 0 else hidden_dim
        layers.append({
            "wih": _uniform(k1, (in_dim, 4 * hidden_dim)),
            "whh": _uniform(k2, (hidden_dim, 4 * hidden_dim)),
            # TODO(synk): PyTorch nn.LSTM has b_ih + b_hh; pre-sum when porting
            # real weights (single synthetic bias used here).
            "b": _uniform(k3, (1, 4 * hidden_dim)),
        })
    return layers, key


def init_encoder(key, vocab, emb_dim, hidden_dim, n_layers):
    key, ke = jax.random.split(key)
    emb = _uniform(ke, (vocab, emb_dim))
    layers, key = init_lstm_stack(key, emb_dim, hidden_dim, n_layers)
    return {"embedding": emb, "layers": layers,
            "hidden_dim": hidden_dim, "n_layers": n_layers}, key


def init_decoder(key, vocab, emb_dim, hidden_dim, n_layers):
    key, ke, kw, kb = jax.random.split(key, 4)
    emb = _uniform(ke, (vocab, emb_dim))
    layers, key = init_lstm_stack(key, emb_dim, hidden_dim, n_layers)
    fc_w = _uniform(kw, (hidden_dim, vocab))
    fc_b = _uniform(kb, (1, vocab))
    return {"embedding": emb, "layers": layers, "fc_w": fc_w, "fc_b": fc_b,
            "hidden_dim": hidden_dim, "n_layers": n_layers,
            "output_dim": vocab}, key


def _pad2(x, rows, cols):
    return jnp.pad(x, ((0, rows - x.shape[0]), (0, cols - x.shape[1])))


def _pad_gate_mat(w, in_p, h, hp):
    """[in, 4h] -> [in_p, 4hp]: each i/f/g/o block is zero-padded independently."""
    inn = w.shape[0]
    w4 = w.reshape(inn, 4, h)
    w4 = jnp.pad(w4, ((0, in_p - inn), (0, 0), (0, hp - h)))
    return w4.reshape(in_p, 4 * hp)


def _pad_gate_bias(b, h, hp):
    b4 = b.reshape(1, 4, h)
    b4 = jnp.pad(b4, ((0, 0), (0, 0), (0, hp - h)))
    return b4.reshape(1, 4 * hp)


def pack_lstm_stack(layers, in_p, h, hp):
    wih = jnp.stack([_pad_gate_mat(lp["wih"], in_p, h, hp) for lp in layers])
    whh = jnp.stack([_pad_gate_mat(lp["whh"], hp, h, hp) for lp in layers])
    b = jnp.stack([_pad_gate_bias(lp["b"], h, hp) for lp in layers])
    return wih, whh, b


def pack_encoder(params, ep, hp):
    h = params["hidden_dim"]
    emb = _pad2(params["embedding"], params["embedding"].shape[0], ep)
    wih, whh, b = pack_lstm_stack(params["layers"], hp, h, hp)
    return {"emb": emb, "wih": wih, "whh": whh, "b": b}


def pack_decoder(params, ep, hp, vp):
    h = params["hidden_dim"]
    emb = _pad2(params["embedding"], vp, ep)          # rows padded for one-hot matmul
    wih, whh, b = pack_lstm_stack(params["layers"], hp, h, hp)
    fc_w = _pad2(params["fc_w"], hp, vp)
    fc_b = _pad2(params["fc_b"], 1, vp)
    # precompute emb @ W_ih[0]: fuses embedding lookup + layer-0 input
    # projection into a single one-hot matmul inside the decoder kernel
    emb_proj = jnp.dot(emb, wih[0], preferred_element_type=jnp.float32)
    return {"emb_proj": emb_proj, "wih": wih, "whh": whh, "b": b,
            "fc_w": fc_w, "fc_b": fc_b}


# ----------------------------------------------------------------------------
# full forward (jit'ed; glue is JAX, hot recurrences are the fused kernels)
# ----------------------------------------------------------------------------
@functools.partial(jax.jit, static_argnames=("batch", "vocab"))
def seq2seq_forward(enc_k, dec_k, src, trg, sel_mask, *, batch, vocab):
    s = src.shape[0]
    t_len = trg.shape[0]
    hp = enc_k["whh"].shape[1]
    ep = enc_k["emb"].shape[1]
    vp = dec_k["fc_w"].shape[1]
    bp = max(8, _round_up(batch, 8))

    # ----- encoder -----
    emb = jnp.take(enc_k["emb"], src, axis=0)                    # [S, B, EP]
    emb = jnp.pad(emb, ((0, 0), (0, bp - batch), (0, 0)))        # [S, BP, EP]
    # hoisted non-recurrent layer-0 input projection (+ bias), one big matmul
    gx0 = linear(emb.reshape(s * bp, ep), enc_k["wih"][0], enc_k["b"][0])
    gx0 = gx0.reshape(s, bp, 4 * hp)
    h_enc, c_enc = encoder_recurrence(gx0, enc_k["wih"], enc_k["whh"],
                                      enc_k["b"])

    # ----- decoder -----
    teach_oh = jax.nn.one_hot(trg[:t_len - 1], vp, dtype=jnp.float32)
    teach_oh = jnp.pad(teach_oh, ((0, 0), (0, bp - batch), (0, 0)))
    logits = decoder_recurrence(sel_mask, teach_oh, dec_k["emb_proj"],
                                dec_k["wih"], dec_k["whh"], dec_k["b"],
                                h_enc, c_enc, dec_k["fc_w"], dec_k["fc_b"],
                                vocab)
    out = logits[:, :batch, :vocab]
    zeros0 = jnp.zeros((1, batch, vocab), jnp.float32)           # outputs[0] = 0
    return jnp.concatenate([zeros0, out], axis=0)


# ----------------------------------------------------------------------------
# pure-JAX reference (unpadded), mirrors the original PyTorch forward
# ----------------------------------------------------------------------------
def _lstm_cell_ref(x, h, c, lp):
    gates = x @ lp["wih"] + h @ lp["whh"] + lp["b"]
    hd = h.shape[-1]
    i = jax.nn.sigmoid(gates[:, 0 * hd:1 * hd])
    f = jax.nn.sigmoid(gates[:, 1 * hd:2 * hd])
    g = jnp.tanh(gates[:, 2 * hd:3 * hd])
    o = jax.nn.sigmoid(gates[:, 3 * hd:4 * hd])
    c_new = f * c + i * g
    return o * jnp.tanh(c_new), c_new


def seq2seq_reference(enc_p, dec_p, src, trg, sel_host):
    s, b = src.shape
    t_len = trg.shape[0]
    hd = enc_p["hidden_dim"]
    n_layers = enc_p["n_layers"]
    v = dec_p["output_dim"]
    h = [jnp.zeros((b, hd), jnp.float32) for _ in range(n_layers)]
    c = [jnp.zeros((b, hd), jnp.float32) for _ in range(n_layers)]
    emb = jnp.take(enc_p["embedding"], src, axis=0)
    for t in range(s):
        x = emb[t]
        for l, lp in enumerate(enc_p["layers"]):
            h[l], c[l] = _lstm_cell_ref(x, h[l], c[l], lp)
            x = h[l]
    outputs = [jnp.zeros((b, v), jnp.float32)]
    inp = trg[0]
    for t in range(1, t_len):
        x = jnp.take(dec_p["embedding"], inp, axis=0)
        for l, lp in enumerate(dec_p["layers"]):
            h[l], c[l] = _lstm_cell_ref(x, h[l], c[l], lp)
            x = h[l]
        out = x @ dec_p["fc_w"] + dec_p["fc_b"]
        outputs.append(out)
        if t < t_len - 1:
            top1 = jnp.argmax(out, axis=1).astype(trg.dtype)
            inp = trg[t] if sel_host[t] else top1
    return jnp.stack(outputs, axis=0)


# ----------------------------------------------------------------------------
if __name__ == "__main__":
    SRC_VOCAB = 16
    TRG_VOCAB = 16
    ENC_EMB = 16
    DEC_EMB = 16
    HIDDEN = 32
    N_LAYERS = 2
    BATCH = 4
    SRC_LEN = 6
    TRG_LEN = 8
    TEACHER_FORCING_RATIO = 0.5

    key = jax.random.PRNGKey(0)
    enc_params, key = init_encoder(key, SRC_VOCAB, ENC_EMB, HIDDEN, N_LAYERS)
    dec_params, key = init_decoder(key, TRG_VOCAB, DEC_EMB, HIDDEN, N_LAYERS)

    key, ks, kt = jax.random.split(key, 3)
    src = jax.random.randint(ks, (SRC_LEN, BATCH), 0, SRC_VOCAB, jnp.int32)
    trg = jax.random.randint(kt, (TRG_LEN, BATCH), 0, TRG_VOCAB, jnp.int32)

    # Host-side teacher-forcing decisions precomputed as a mask so the whole
    # forward can be jitted; sel[0]=1 because the first decoder input is trg[0].
    random.seed(0)
    sel_host = [1] + [int(random.random() < TEACHER_FORCING_RATIO)
                      for _ in range(1, TRG_LEN - 1)]
    sel_mask = jnp.asarray(sel_host, dtype=jnp.int32)

    # padded (lane/sublane-aligned) kernel parameters
    hp = _round_up(HIDDEN, 128)
    ep = _round_up(max(ENC_EMB, DEC_EMB), 128)
    vp = _round_up(TRG_VOCAB, 128)
    assert ep == hp, "stacked LSTM weight layout assumes padded emb == padded hidden"
    enc_k = pack_encoder(enc_params, ep, hp)
    dec_k = pack_decoder(dec_params, ep, hp, vp)

    # TODO(synk): nn.LSTM inter-layer dropout omitted (identity in eval); bf16
    # MXU operands (v6e/v7x) left as f32 at these tiny shapes.
    outputs = seq2seq_forward(enc_k, dec_k, src, trg, sel_mask,
                              batch=BATCH, vocab=TRG_VOCAB)
    jax.block_until_ready(outputs)
    assert outputs.shape == (TRG_LEN, BATCH, TRG_VOCAB)

    ref = seq2seq_reference(enc_params, dec_params, src, trg, sel_host)
    assert bool(jnp.allclose(outputs, ref, rtol=1e-3, atol=1e-3)), \
        "Pallas forward diverges from pure-JAX reference"

    print("KERNEL_OK")
</pallas_src>

<mosaic_0001>
module attributes {stable_mosaic.version = 11 : i64} {
  func.func @_linear_kernel(%arg0: memref<48x128xf32, #tpu.memory_space<vmem>>, %arg1: memref<128x512xf32, #tpu.memory_space<vmem>>, %arg2: memref<1x512xf32, #tpu.memory_space<vmem>>, %arg3: memref<48x512xf32, #tpu.memory_space<vmem>>) attributes {dimension_semantics = [], scalar_prefetch = 0 : i64, scratch_operands = 0 : i64, tpu.core_type = #tpu.core_type<tc>} {
    %c0 = arith.constant 0 : index
    %c0_0 = arith.constant 0 : index
    %0 = vector.load %arg0[%c0, %c0_0] : memref<48x128xf32, #tpu.memory_space<vmem>>, vector<48x128xf32>
    %c0_1 = arith.constant 0 : index
    %c0_2 = arith.constant 0 : index
    %1 = vector.load %arg1[%c0_1, %c0_2] : memref<128x512xf32, #tpu.memory_space<vmem>>, vector<128x512xf32>
    %cst = arith.constant dense<0.000000e+00> : vector<48x512xf32>
    %2 = tpu.matmul %0, %1, %cst {dimension_numbers = #tpu.dot_dimension_numbers<[1], [0], [0], [1], [0, 0, 1, 1], [], []>} : vector<48x128xf32>, vector<128x512xf32>, vector<48x512xf32> -> vector<48x512xf32>
    %c0_3 = arith.constant 0 : index
    %c0_4 = arith.constant 0 : index
    %3 = vector.load %arg2[%c0_3, %c0_4] : memref<1x512xf32, #tpu.memory_space<vmem>>, vector<1x512xf32>
    %4 = vector.broadcast %3 : vector<1x512xf32> to vector<48x512xf32>
    %5 = arith.addf %2, %4 : vector<48x512xf32>
    %c0_5 = arith.constant 0 : index
    %c0_6 = arith.constant 0 : index
    %6 = vector.load %arg3[%c0_5, %c0_6] : memref<48x512xf32, #tpu.memory_space<vmem>>, vector<48x512xf32>
    tpu.vector_store %arg3[%c0_5, %c0_6], %5 {strides = array<i32>} : memref<48x512xf32, #tpu.memory_space<vmem>>, vector<48x512xf32>,
    return
  }
}

module attributes {stable_mosaic.version = 11 : i64} {
  func.func @_encoder_kernel(%arg0: i32, %arg1: memref<1x8x512xf32, #tpu.memory_space<vmem>>, %arg2: memref<2x128x512xf32, #tpu.memory_space<vmem>>, %arg3: memref<2x128x512xf32, #tpu.memory_space<vmem>>, %arg4: memref<2x1x512xf32, #tpu.memory_space<vmem>>, %arg5: memref<2x8x128xf32, #tpu.memory_space<vmem>>, %arg6: memref<2x8x128xf32, #tpu.memory_space<vmem>>) attributes {dimension_semantics = [#tpu.dimension_semantics<arbitrary>], iteration_bounds = array<i64: 6>, scalar_prefetch = 0 : i64, scratch_operands = 0 : i64, tpu.core_type = #tpu.core_type<tc>, window_params = [{transform_indices = @transform_0, window_bounds = array<i64: 1, 8, 512>}, {pipeline_mode = #tpu.pipeline_mode<synchronous>, transform_indices = @transform_1, window_bounds = array<i64: 2, 128, 512>}, {pipeline_mode = #tpu.pipeline_mode<synchronous>, transform_indices = @transform_2, window_bounds = array<i64: 2, 128, 512>}, {pipeline_mode = #tpu.pipeline_mode<synchronous>, transform_indices = @transform_3, window_bounds = array<i64: 2, 1, 512>}, {pipeline_mode = #tpu.pipeline_mode<synchronous>, transform_indices = @transform_4, window_bounds = array<i64: 2, 8, 128>}, {pipeline_mode = #tpu.pipeline_mode<synchronous>, transform_indices = @transform_5, window_bounds = array<i64: 2, 8, 128>}]} {
    %c0_i32 = arith.constant 0 : i32
    %0 = arith.cmpi eq, %arg0, %c0_i32 : i32
    %1 = arith.extui %0 : i1 to i32
    %c0_i32_0 = arith.constant 0 : i32
    %2 = arith.cmpi ne, %1, %c0_i32_0 : i32
    scf.if %2 {
      %cst_46 = arith.constant 0.000000e+00 : f32
      %90 = vector.broadcast %cst_46 : f32 to vector<2x8x128xf32>
      %c0_47 = arith.constant 0 : index
      %c0_48 = arith.constant 0 : index
      %c0_49 = arith.constant 0 : index
      %91 = vector.load %arg5[%c0_47, %c0_48, %c0_49] : memref<2x8x128xf32, #tpu.memory_space<vmem>>, vector<2x8x128xf32>
      tpu.vector_store %arg5[%c0_47, %c0_48, %c0_49], %90 {strides = array<i32>} : memref<2x8x128xf32, #tpu.memory_space<vmem>>, vector<2x8x128xf32>,
      %cst_50 = arith.constant 0.000000e+00 : f32
      %92 = vector.broadcast %cst_50 : f32 to vector<2x8x128xf32>
      %c0_51 = arith.constant 0 : index
      %c0_52 = arith.constant 0 : index
      %c0_53 = arith.constant 0 : index
      %93 = vector.load %arg6[%c0_51, %c0_52, %c0_53] : memref<2x8x128xf32, #tpu.memory_space<vmem>>, vector<2x8x128xf32>
      tpu.vector_store %arg6[%c0_51, %c0_52, %c0_53], %92 {strides = array<i32>} : memref<2x8x128xf32, #tpu.memory_space<vmem>>, vector<2x8x128xf32>,
    } else {
    }
    %c0 = arith.constant 0 : index
    %c0_1 = arith.constant 0 : index
    %c0_2 = arith.constant 0 : index
    %3 = vector.load %arg5[%c0, %c0_1, %c0_2] : memref<2x8x128xf32, #tpu.memory_space<vmem>>, vector<1x8x128xf32>
    %4 = vector.shape_cast %3 : vector<1x8x128xf32> to vector<8x128xf32>
    %c0_3 = arith.constant 0 : index
    %c0_4 = arith.constant 0 : index
    %c0_5 = arith.constant 0 : index
    %5 = vector.load %arg6[%c0_3, %c0_4, %c0_5] : memref<2x8x128xf32, #tpu.memory_space<vmem>>, vector<1x8x128xf32>
    %6 = vector.shape_cast %5 : vector<1x8x128xf32> to vector<8x128xf32>
    %c0_6 = arith.constant 0 : index
    %c0_7 = arith.constant 0 : index
    %c0_8 = arith.constant 0 : index
    %7 = vector.load %arg1[%c0_6, %c0_7, %c0_8] : memref<1x8x512xf32, #tpu.memory_space<vmem>>, vector<1x8x512xf32>
    %8 = vector.shape_cast %7 : vector<1x8x512xf32> to vector<8x512xf32>
    %c0_9 = arith.constant 0 : index
    %c0_10 = arith.constant 0 : index
    %c0_11 = arith.constant 0 : index
    %9 = vector.load %arg3[%c0_9, %c0_10, %c0_11] : memref<2x128x512xf32, #tpu.memory_space<vmem>>, vector<1x128x512xf32>
    %10 = vector.shape_cast %9 : vector<1x128x512xf32> to vector<128x512xf32>
    %cst = arith.constant dense<0.000000e+00> : vector<8x512xf32>
    %11 = tpu.matmul %4, %10, %cst {dimension_numbers = #tpu.dot_dimension_numbers<[1], [0], [0], [1], [0, 0, 1, 1], [], []>} : vector<8x128xf32>, vector<128x512xf32>, vector<8x512xf32> -> vector<8x512xf32>
    %12 = arith.addf %8, %11 : vector<8x512xf32>
    %13 = vector.extract_strided_slice %12 {offsets = [0, 0], sizes = [8, 128], strides = [1, 1]} : vector<8x512xf32> to vector<8x128xf32>
    %14 = arith.negf %13 : vector<8x128xf32>
    %15 = math.exp %14 : vector<8x128xf32>
    %cst_12 = arith.constant 1.000000e+00 : f32
    %16 = vector.broadcast %cst_12 : f32 to vector<8x128xf32>
    %17 = arith.addf %16, %15 : vector<8x128xf32>
    %18 = arith.divf %16, %17 : vector<8x128xf32>
    %19 = vector.extract_strided_slice %12 {offsets = [0, 128], sizes = [8, 128], strides = [1, 1]} : vector<8x512xf32> to vector<8x128xf32>
    %20 = arith.negf %19 : vector<8x128xf32>
    %21 = math.exp %20 : vector<8x128xf32>
    %cst_13 = arith.constant 1.000000e+00 : f32
    %22 = vector.broadcast %cst_13 : f32 to vector<8x128xf32>
    %23 = arith.addf %22, %21 : vector<8x128xf32>
    %24 = arith.divf %22, %23 : vector<8x128xf32>
    %25 = vector.extract_strided_slice %12 {offsets = [0, 256], sizes = [8, 128], strides = [1, 1]} : vector<8x512xf32> to vector<8x128xf32>
    %26 = math.tanh %25 : vector<8x128xf32>
    %27 = vector.extract_strided_slice %12 {offsets = [0, 384], sizes = [8, 128], strides = [1, 1]} : vector<8x512xf32> to vector<8x128xf32>
    %28 = arith.negf %27 : vector<8x128xf32>
    %29 = math.exp %28 : vector<8x128xf32>
    %cst_14 = arith.constant 1.000000e+00 : f32
    %30 = vector.broadcast %cst_14 : f32 to vector<8x128xf32>
    %31 = arith.addf %30, %29 : vector<8x128xf32>
    %32 = arith.divf %30, %31 : vector<8x128xf32>
    %33 = arith.mulf %24, %6 : vector<8x128xf32>
    %34 = arith.mulf %18, %26 : vector<8x128xf32>
    %35 = arith.addf %33, %34 : vector<8x128xf32>
    %36 = math.tanh %35 : vector<8x128xf32>
    %37 = arith.mulf %32, %36 : vector<8x128xf32>
    %c0_15 = arith.constant 0 : index
    %c0_16 = arith.constant 0 : index
    %c0_17 = arith.constant 0 : index
    %38 = vector.load %arg5[%c0_15, %c0_16, %c0_17] : memref<2x8x128xf32, #tpu.memory_space<vmem>>, vector<1x8x128xf32>
    %39 = vector.shape_cast %38 : vector<1x8x128xf32> to vector<8x128xf32>
    %40 = vector.shape_cast %37 : vector<8x128xf32> to vector<1x8x128xf32>
    tpu.vector_store %arg5[%c0_15, %c0_16, %c0_17], %40 {strides = array<i32>} : memref<2x8x128xf32, #tpu.memory_space<vmem>>, vector<1x8x128xf32>,
    %c0_18 = arith.constant 0 : index
    %c0_19 = arith.constant 0 : index
    %c0_20 = arith.constant 0 : index
    %41 = vector.load %arg6[%c0_18, %c0_19, %c0_20] : memref<2x8x128xf32, #tpu.memory_space<vmem>>, vector<1x8x128xf32>
    %42 = vector.shape_cast %41 : vector<1x8x128xf32> to vector<8x128xf32>
    %43 = vector.shape_cast %35 : vector<8x128xf32> to vector<1x8x128xf32>
    tpu.vector_store %arg6[%c0_18, %c0_19, %c0_20], %43 {strides = array<i32>} : memref<2x8x128xf32, #tpu.memory_space<vmem>>, vector<1x8x128xf32>,
    %c1 = arith.constant 1 : index
    %c0_21 = arith.constant 0 : index
    %c0_22 = arith.constant 0 : index
    %44 = vector.load %arg5[%c1, %c0_21, %c0_22] : memref<2x8x128xf32, #tpu.memory_space<vmem>>, vector<1x8x128xf32>
    %45 = vector.shape_cast %44 : vector<1x8x128xf32> to vector<8x128xf32>
    %c1_23 = arith.constant 1 : index
    %c0_24 = arith.constant 0 : index
    %c0_25 = arith.constant 0 : index
    %46 = vector.load %arg6[%c1_23, %c0_24, %c0_25] : memref<2x8x128xf32, #tpu.memory_space<vmem>>, vector<1x8x128xf32>
    %47 = vector.shape_cast %46 : vector<1x8x128xf32> to vector<8x128xf32>
    %c1_26 = arith.constant 1 : index
    %c0_27 = arith.constant 0 : index
    %c0_28 = arith.constant 0 : index
    %48 = vector.load %arg2[%c1_26, %c0_27, %c0_28] : memref<2x128x512xf32, #tpu.memory_space<vmem>>, vector<1x128x512xf32>
    %49 = vector.shape_cast %48 : vector<1x128x512xf32> to vector<128x512xf32>
    %cst_29 = arith.constant dense<0.000000e+00> : vector<8x512xf32>
    %50 = tpu.matmul %37, %49, %cst_29 {dimension_numbers = #tpu.dot_dimension_numbers<[1], [0], [0], [1], [0, 0, 1, 1], [], []>} : vector<8x128xf32>, vector<128x512xf32>, vector<8x512xf32> -> vector<8x512xf32>
    %c1_30 = arith.constant 1 : index
    %c0_31 = arith.constant 0 : index
    %c0_32 = arith.constant 0 : index
    %51 = vector.load %arg3[%c1_30, %c0_31, %c0_32] : memref<2x128x512xf32, #tpu.memory_space<vmem>>, vector<1x128x512xf32>
    %52 = vector.shape_cast %51 : vector<1x128x512xf32> to vector<128x512xf32>
    %cst_33 = arith.constant dense<0.000000e+00> : vector<8x512xf32>
    %53 = tpu.matmul %45, %52, %cst_33 {dimension_numbers = #tpu.dot_dimension_numbers<[1], [0], [0], [1], [0, 0, 1, 1], [], []>} : vector<8x128xf32>, vector<128x512xf32>, vector<8x512xf32> -> vector<8x512xf32>
    %54 = arith.addf %50, %53 : vector<8x512xf32>
    %c1_34 = arith.constant 1 : index
    %c0_35 = arith.constant 0 : index
    %c0_36 = arith.constant 0 : index
    %55 = vector.load %arg4[%c1_34, %c0_35, %c0_36] : memref<2x1x512xf32, #tpu.memory_space<vmem>>, vector<1x1x512xf32>
    %56 = vector.shape_cast %55 : vector<1x1x512xf32> to vector<1x512xf32>
    %57 = vector.broadcast %56 : vector<1x512xf32> to vector<8x512xf32>
    %58 = arith.addf %54, %57 : vector<8x512xf32>
    %59 = vector.extract_strided_slice %58 {offsets = [0, 0], sizes = [8, 128], strides = [1, 1]} : vector<8x512xf32> to vector<8x128xf32>
    %60 = arith.negf %59 : vector<8x128xf32>
    %61 = math.exp %60 : vector<8x128xf32>
    %cst_37 = arith.constant 1.000000e+00 : f32
    %62 = vector.broadcast %cst_37 : f32 to vector<8x128xf32>
    %63 = arith.addf %62, %61 : vector<8x128xf32>
    %64 = arith.divf %62, %63 : vector<8x128xf32>
    %65 = vector.extract_strided_slice %58 {offsets = [0, 128], sizes = [8, 128], strides = [1, 1]} : vector<8x512xf32> to vector<8x128xf32>
    %66 = arith.negf %65 : vector<8x128xf32>
    %67 = math.exp %66 : vector<8x128xf32>
    %cst_38 = arith.constant 1.000000e+00 : f32
    %68 = vector.broadcast %cst_38 : f32 to vector<8x128xf32>
    %69 = arith.addf %68, %67 : vector<8x128xf32>
    %70 = arith.divf %68, %69 : vector<8x128xf32>
    %71 = vector.extract_strided_slice %58 {offsets = [0, 256], sizes = [8, 128], strides = [1, 1]} : vector<8x512xf32> to vector<8x128xf32>
    %72 = math.tanh %71 : vector<8x128xf32>
    %73 = vector.extract_strided_slice %58 {offsets = [0, 384], sizes = [8, 128], strides = [1, 1]} : vector<8x512xf32> to vector<8x128xf32>
    %74 = arith.negf %73 : vector<8x128xf32>
    %75 = math.exp %74 : vector<8x128xf32>
    %cst_39 = arith.constant 1.000000e+00 : f32
    %76 = vector.broadcast %cst_39 : f32 to vector<8x128xf32>
    %77 = arith.addf %76, %75 : vector<8x128xf32>
    %78 = arith.divf %76, %77 : vector<8x128xf32>
    %79 = arith.mulf %70, %47 : vector<8x128xf32>
    %80 = arith.mulf %64, %72 : vector<8x128xf32>
    %81 = arith.addf %79, %80 : vector<8x128xf32>
    %82 = math.tanh %81 : vector<8x128xf32>
    %83 = arith.mulf %78, %82 : vector<8x128xf32>
    %c1_40 = arith.constant 1 : index
    %c0_41 = arith.constant 0 : index
    %c0_42 = arith.constant 0 : index
    %84 = vector.load %arg5[%c1_40, %c0_41, %c0_42] : memref<2x8x128xf32, #tpu.memory_space<vmem>>, vector<1x8x128xf32>
    %85 = vector.shape_cast %84 : vector<1x8x128xf32> to vector<8x128xf32>
    %86 = vector.shape_cast %83 : vector<8x128xf32> to vector<1x8x128xf32>
    tpu.vector_store %arg5[%c1_40, %c0_41, %c0_42], %86 {strides = array<i32>} : memref<2x8x128xf32, #tpu.memory_space<vmem>>, vector<1x8x128xf32>,
    %c1_43 = arith.constant 1 : index
    %c0_44 = arith.constant 0 : index
    %c0_45 = arith.constant 0 : index
    %87 = vector.load %arg6[%c1_43, %c0_44, %c0_45] : memref<2x8x128xf32, #tpu.memory_space<vmem>>, vector<1x8x128xf32>
    %88 = vector.shape_cast %87 : vector<1x8x128xf32> to vector<8x128xf32>
    %89 = vector.shape_cast %81 : vector<8x128xf32> to vector<1x8x128xf32>
    tpu.vector_store %arg6[%c1_43, %c0_44, %c0_45], %89 {strides = array<i32>} : memref<2x8x128xf32, #tpu.memory_space<vmem>>, vector<1x8x128xf32>,
    return
  }
  func.func @transform_0(%arg0: i32) -> (i32, i32, i32) {
    %c0_i32 = arith.constant 0 : i32
    %c0_i32_0 = arith.constant 0 : i32
    %c0_i32_1 = arith.constant 0 : i32
    return %arg0, %c0_i32, %c0_i32_0 : i32, i32, i32
  }
  func.func @transform_1(%arg0: i32) -> (i32, i32, i32) {
    %c0_i32 = arith.constant 0 : i32
    %c0_i32_0 = arith.constant 0 : i32
    %c0_i32_1 = arith.constant 0 : i32
    %c0_i32_2 = arith.constant 0 : i32
    return %c0_i32, %c0_i32_0, %c0_i32_1 : i32, i32, i32
  }
  func.func @transform_2(%arg0: i32) -> (i32, i32, i32) {
    %c0_i32 = arith.constant 0 : i32
    %c0_i32_0 = arith.constant 0 : i32
    %c0_i32_1 = arith.constant 0 : i32
    %c0_i32_2 = arith.constant 0 : i32
    return %c0_i32, %c0_i32_0, %c0_i32_1 : i32, i32, i32
  }
  func.func @transform_3(%arg0: i32) -> (i32, i32, i32) {
    %c0_i32 = arith.constant 0 : i32
    %c0_i32_0 = arith.constant 0 : i32
    %c0_i32_1 = arith.constant 0 : i32
    %c0_i32_2 = arith.constant 0 : i32
    return %c0_i32, %c0_i32_0, %c0_i32_1 : i32, i32, i32
  }
  func.func @transform_4(%arg0: i32) -> (i32, i32, i32) {
    %c0_i32 = arith.constant 0 : i32
    %c0_i32_0 = arith.constant 0 : i32
    %c0_i32_1 = arith.constant 0 : i32
    %c0_i32_2 = arith.constant 0 : i32
    return %c0_i32, %c0_i32_0, %c0_i32_1 : i32, i32, i32
  }
  func.func @transform_5(%arg0: i32) -> (i32, i32, i32) {
    %c0_i32 = arith.constant 0 : i32
    %c0_i32_0 = arith.constant 0 : i32
    %c0_i32_1 = arith.constant 0 : i32
    %c0_i32_2 = arith.constant 0 : i32
    return %c0_i32, %c0_i32_0, %c0_i32_1 : i32, i32, i32
  }
}

module attributes {stable_mosaic.version = 11 : i64} {
  func.func @_decoder_kernel(%arg0: i32, %arg1: memref<7xi32, #tpu.memory_space<smem>>, %arg2: memref<1x8x128xf32, #tpu.memory_space<vmem>>, %arg3: memref<128x512xf32, #tpu.memory_space<vmem>>, %arg4: memref<2x128x512xf32, #tpu.memory_space<vmem>>, %arg5: memref<2x128x512xf32, #tpu.memory_space<vmem>>, %arg6: memref<2x1x512xf32, #tpu.memory_space<vmem>>, %arg7: memref<2x8x128xf32, #tpu.memory_space<vmem>>, %arg8: memref<2x8x128xf32, #tpu.memory_space<vmem>>, %arg9: memref<128x128xf32, #tpu.memory_space<vmem>>, %arg10: memref<1x128xf32, #tpu.memory_space<vmem>>, %arg11: memref<1x8x128xf32, #tpu.memory_space<vmem>>, %arg12: memref<2x8x128xf32, #tpu.memory_space<vmem>>, %arg13: memref<2x8x128xf32, #tpu.memory_space<vmem>>, %arg14: memref<8x128xf32, #tpu.memory_space<vmem>>) attributes {dimension_semantics = [#tpu.dimension_semantics<arbitrary>], iteration_bounds = array<i64: 7>, scalar_prefetch = 1 : i64, scratch_operands = 3 : i64, tpu.core_type = #tpu.core_type<tc>, window_params = [{transform_indices = @transform_0, window_bounds = array<i64: 1, 8, 128>}, {pipeline_mode = #tpu.pipeline_mode<synchronous>, transform_indices = @transform_1, window_bounds = array<i64: 128, 512>}, {pipeline_mode = #tpu.pipeline_mode<synchronous>, transform_indices = @transform_2, window_bounds = array<i64: 2, 128, 512>}, {pipeline_mode = #tpu.pipeline_mode<synchronous>, transform_indices = @transform_3, window_bounds = array<i64: 2, 128, 512>}, {pipeline_mode = #tpu.pipeline_mode<synchronous>, transform_indices = @transform_4, window_bounds = array<i64: 2, 1, 512>}, {pipeline_mode = #tpu.pipeline_mode<synchronous>, transform_indices = @transform_5, window_bounds = array<i64: 2, 8, 128>}, {pipeline_mode = #tpu.pipeline_mode<synchronous>, transform_indices = @transform_6, window_bounds = array<i64: 2, 8, 128>}, {pipeline_mode = #tpu.pipeline_mode<synchronous>, transform_indices = @transform_7, window_bounds = array<i64: 128, 128>}, {pipeline_mode = #tpu.pipeline_mode<synchronous>, transform_indices = @transform_8, window_bounds = array<i64: 1, 128>}, {transform_indices = @transform_9, window_bounds = array<i64: 1, 8, 128>}]} {
    %c0_i32 = arith.constant 0 : i32
    %0 = arith.cmpi eq, %arg0, %c0_i32 : i32
    %1 = arith.extui %0 : i1 to i32
    %c0_i32_0 = arith.constant 0 : i32
    %2 = arith.cmpi ne, %1, %c0_i32_0 : i32
    scf.if %2 {
      %c0_70 = arith.constant 0 : index
      %c0_71 = arith.constant 0 : index
      %c0_72 = arith.constant 0 : index
      %135 = vector.load %arg7[%c0_70, %c0_71, %c0_72] : memref<2x8x128xf32, #tpu.memory_space<vmem>>, vector<2x8x128xf32>
      %c0_73 = arith.constant 0 : index
      %c0_74 = arith.constant 0 : index
      %c0_75 = arith.constant 0 : index
      %136 = vector.load %arg12[%c0_73, %c0_74, %c0_75] : memref<2x8x128xf32, #tpu.memory_space<vmem>>, vector<2x8x128xf32>
      tpu.vector_store %arg12[%c0_73, %c0_74, %c0_75], %135 {strides = array<i32>} : memref<2x8x128xf32, #tpu.memory_space<vmem>>, vector<2x8x128xf32>,
      %c0_76 = arith.constant 0 : index
      %c0_77 = arith.constant 0 : index
      %c0_78 = arith.constant 0 : index
      %137 = vector.load %arg8[%c0_76, %c0_77, %c0_78] : memref<2x8x128xf32, #tpu.memory_space<vmem>>, vector<2x8x128xf32>
      %c0_79 = arith.constant 0 : index
      %c0_80 = arith.constant 0 : index
      %c0_81 = arith.constant 0 : index
      %138 = vector.load %arg13[%c0_79, %c0_80, %c0_81] : memref<2x8x128xf32, #tpu.memory_space<vmem>>, vector<2x8x128xf32>
      tpu.vector_store %arg13[%c0_79, %c0_80, %c0_81], %137 {strides = array<i32>} : memref<2x8x128xf32, #tpu.memory_space<vmem>>, vector<2x8x128xf32>,
      %cst_82 = arith.constant 0.000000e+00 : f32
      %139 = vector.broadcast %cst_82 : f32 to vector<8x128xf32>
      %c0_83 = arith.constant 0 : index
      %c0_84 = arith.constant 0 : index
      %140 = vector.load %arg14[%c0_83, %c0_84] : memref<8x128xf32, #tpu.memory_space<vmem>>, vector<8x128xf32>
      tpu.vector_store %arg14[%c0_83, %c0_84], %139 {strides = array<i32>} : memref<8x128xf32, #tpu.memory_space<vmem>>, vector<8x128xf32>,
    } else {
    }
    %3 = tpu.iota {dimensions = array<i32: 1>} : vector<8x128xi32>
    %4 = arith.sitofp %3 : vector<8x128xi32> to vector<8x128xf32>
    %c16_i32 = arith.constant 16 : i32
    %5 = vector.broadcast %c16_i32 : i32 to vector<8x128xi32>
    %6 = arith.cmpi slt, %3, %5 : vector<8x128xi32>
    %c0 = arith.constant 0 : index
    %c0_1 = arith.constant 0 : index
    %7 = vector.load %arg14[%c0, %c0_1] : memref<8x128xf32, #tpu.memory_space<vmem>>, vector<8x128xf32>
    %cst = arith.constant -1.000000e+30 : f32
    %8 = vector.broadcast %cst : f32 to vector<8x128xf32>
    %9 = arith.select %6, %7, %8 : vector<8x128xi1>, vector<8x128xf32>
    %cst_2 = arith.constant dense<0xFF800000> : vector<8xf32>
    %10 = vector.multi_reduction <maximumf>, %9, %cst_2 [1] : vector<8x128xf32> to vector<8xf32>
    %11 = vector.shape_cast %10 : vector<8xf32> to vector<8x1xf32>
    %12 = vector.broadcast %11 : vector<8x1xf32> to vector<8x128xf32>
    %13 = arith.cmpf oeq, %9, %12 : vector<8x128xf32>
    %cst_3 = arith.constant 1.280000e+02 : f32
    %14 = vector.broadcast %cst_3 : f32 to vector<8x128xf32>
    %15 = arith.select %13, %4, %14 : vector<8x128xi1>, vector<8x128xf32>
    %cst_4 = arith.constant dense<0x7F800000> : vector<8xf32>
    %16 = vector.multi_reduction <minimumf>, %15, %cst_4 [1] : vector<8x128xf32> to vector<8xf32>
    %17 = vector.shape_cast %16 : vector<8xf32> to vector<8x1xf32>
    %18 = vector.broadcast %17 : vector<8x1xf32> to vector<8x128xf32>
    %19 = arith.cmpf oeq, %4, %18 : vector<8x128xf32>
    %20 = arith.extui %19 : vector<8x128xi1> to vector<8x128xi32>
    %21 = arith.sitofp %20 : vector<8x128xi32> to vector<8x128xf32>
    %22 = arith.index_cast %arg0 : i32 to index
    %23 = memref.load %arg1[%22] : memref<7xi32, #tpu.memory_space<smem>>
    %c0_i32_5 = arith.constant 0 : i32
    %24 = arith.cmpi sgt, %23, %c0_i32_5 : i32
    %25 = arith.extui %24 : i1 to i32
    %26 = arith.sitofp %25 : i32 to f32
    %c0_6 = arith.constant 0 : index
    %c0_7 = arith.constant 0 : index
    %c0_8 = arith.constant 0 : index
    %27 = vector.load %arg2[%c0_6, %c0_7, %c0_8] : memref<1x8x128xf32, #tpu.memory_space<vmem>>, vector<1x8x128xf32>
    %28 = vector.shape_cast %27 : vector<1x8x128xf32> to vector<8x128xf32>
    %29 = vector.broadcast %26 : f32 to vector<8x128xf32>
    %30 = arith.mulf %29, %28 : vector<8x128xf32>
    %cst_9 = arith.constant 1.000000e+00 : f32
    %31 = arith.subf %cst_9, %26 : f32
    %32 = vector.broadcast %31 : f32 to vector<8x128xf32>
    %33 = arith.mulf %32, %21 : vector<8x128xf32>
    %34 = arith.addf %30, %33 : vector<8x128xf32>
    %c0_10 = arith.constant 0 : index
    %c0_11 = arith.constant 0 : index
    %35 = vector.load %arg3[%c0_10, %c0_11] : memref<128x512xf32, #tpu.memory_space<vmem>>, vector<128x512xf32>
    %cst_12 = arith.constant dense<0.000000e+00> : vector<8x512xf32>
    %36 = tpu.matmul %34, %35, %cst_12 {dimension_numbers = #tpu.dot_dimension_numbers<[1], [0], [0], [1], [0, 0, 1, 1], [], []>} : vector<8x128xf32>, vector<128x512xf32>, vector<8x512xf32> -> vector<8x512xf32>
    %c0_13 = arith.constant 0 : index
    %c0_14 = arith.constant 0 : index
    %c0_15 = arith.constant 0 : index
    %37 = vector.load %arg12[%c0_13, %c0_14, %c0_15] : memref<2x8x128xf32, #tpu.memory_space<vmem>>, vector<1x8x128xf32>
    %38 = vector.shape_cast %37 : vector<1x8x128xf32> to vector<8x128xf32>
    %c0_16 = arith.constant 0 : index
    %c0_17 = arith.constant 0 : index
    %c0_18 = arith.constant 0 : index
    %39 = vector.load %arg5[%c0_16, %c0_17, %c0_18] : memref<2x128x512xf32, #tpu.memory_space<vmem>>, vector<1x128x512xf32>
    %40 = vector.shape_cast %39 : vector<1x128x512xf32> to vector<128x512xf32>
    %cst_19 = arith.constant dense<0.000000e+00> : vector<8x512xf32>
    %41 = tpu.matmul %38, %40, %cst_19 {dimension_numbers = #tpu.dot_dimension_numbers<[1], [0], [0], [1], [0, 0, 1, 1], [], []>} : vector<8x128xf32>, vector<128x512xf32>, vector<8x512xf32> -> vector<8x512xf32>
    %42 = arith.addf %36, %41 : vector<8x512xf32>
    %c0_20 = arith.constant 0 : index
    %c0_21 = arith.constant 0 : index
    %c0_22 = arith.constant 0 : index
    %43 = vector.load %arg6[%c0_20, %c0_21, %c0_22] : memref<2x1x512xf32, #tpu.memory_space<vmem>>, vector<1x1x512xf32>
    %44 = vector.shape_cast %43 : vector<1x1x512xf32> to vector<1x512xf32>
    %45 = vector.broadcast %44 : vector<1x512xf32> to vector<8x512xf32>
    %46 = arith.addf %42, %45 : vector<8x512xf32>
    %c0_23 = arith.constant 0 : index
    %c0_24 = arith.constant 0 : index
    %c0_25 = arith.constant 0 : index
    %47 = vector.load %arg13[%c0_23, %c0_24, %c0_25] : memref<2x8x128xf32, #tpu.memory_space<vmem>>, vector<1x8x128xf32>
    %48 = vector.shape_cast %47 : vector<1x8x128xf32> to vector<8x128xf32>
    %49 = vector.extract_strided_slice %46 {offsets = [0, 0], sizes = [8, 128], strides = [1, 1]} : vector<8x512xf32> to vector<8x128xf32>
    %50 = arith.negf %49 : vector<8x128xf32>
    %51 = math.exp %50 : vector<8x128xf32>
    %cst_26 = arith.constant 1.000000e+00 : f32
    %52 = vector.broadcast %cst_26 : f32 to vector<8x128xf32>
    %53 = arith.addf %52, %51 : vector<8x128xf32>
    %54 = arith.divf %52, %53 : vector<8x128xf32>
    %55 = vector.extract_strided_slice %46 {offsets = [0, 128], sizes = [8, 128], strides = [1, 1]} : vector<8x512xf32> to vector<8x128xf32>
    %56 = arith.negf %55 : vector<8x128xf32>
    %57 = math.exp %56 : vector<8x128xf32>
    %cst_27 = arith.constant 1.000000e+00 : f32
    %58 = vector.broadcast %cst_27 : f32 to vector<8x128xf32>
    %59 = arith.addf %58, %57 : vector<8x128xf32>
    %60 = arith.divf %58, %59 : vector<8x128xf32>
    %61 = vector.extract_strided_slice %46 {offsets = [0, 256], sizes = [8, 128], strides = [1, 1]} : vector<8x512xf32> to vector<8x128xf32>
    %62 = math.tanh %61 : vector<8x128xf32>
    %63 = vector.extract_strided_slice %46 {offsets = [0, 384], sizes = [8, 128], strides = [1, 1]} : vector<8x512xf32> to vector<8x128xf32>
    %64 = arith.negf %63 : vector<8x128xf32>
    %65 = math.exp %64 : vector<8x128xf32>
    %cst_28 = arith.constant 1.000000e+00 : f32
    %66 = vector.broadcast %cst_28 : f32 to vector<8x128xf32>
    %67 = arith.addf %66, %65 : vector<8x128xf32>
    %68 = arith.divf %66, %67 : vector<8x128xf32>
    %69 = arith.mulf %60, %48 : vector<8x128xf32>
    %70 = arith.mulf %54, %62 : vector<8x128xf32>
    %71 = arith.addf %69, %70 : vector<8x128xf32>
    %72 = math.tanh %71 : vector<8x128xf32>
    %73 = arith.mulf %68, %72 : vector<8x128xf32>
    %c0_29 = arith.constant 0 : index
    %c0_30 = arith.constant 0 : index
    %c0_31 = arith.constant 0 : index
    %74 = vector.load %arg12[%c0_29, %c0_30, %c0_31] : memref<2x8x128xf32, #tpu.memory_space<vmem>>, vector<1x8x128xf32>
    %75 = vector.shape_cast %74 : vector<1x8x128xf32> to vector<8x128xf32>
    %76 = vector.shape_cast %73 : vector<8x128xf32> to vector<1x8x128xf32>
    tpu.vector_store %arg12[%c0_29, %c0_30, %c0_31], %76 {strides = array<i32>} : memref<2x8x128xf32, #tpu.memory_space<vmem>>, vector<1x8x128xf32>,
    %c0_32 = arith.constant 0 : index
    %c0_33 = arith.constant 0 : index
    %c0_34 = arith.constant 0 : index
    %77 = vector.load %arg13[%c0_32, %c0_33, %c0_34] : memref<2x8x128xf32, #tpu.memory_space<vmem>>, vector<1x8x128xf32>
    %78 = vector.shape_cast %77 : vector<1x8x128xf32> to vector<8x128xf32>
    %79 = vector.shape_cast %71 : vector<8x128xf32> to vector<1x8x128xf32>
    tpu.vector_store %arg13[%c0_32, %c0_33, %c0_34], %79 {strides = array<i32>} : memref<2x8x128xf32, #tpu.memory_space<vmem>>, vector<1x8x128xf32>,
    %c1 = arith.constant 1 : index
    %c0_35 = arith.constant 0 : index
    %c0_36 = arith.constant 0 : index
    %80 = vector.load %arg4[%c1, %c0_35, %c0_36] : memref<2x128x512xf32, #tpu.memory_space<vmem>>, vector<1x128x512xf32>
    %81 = vector.shape_cast %80 : vector<1x128x512xf32> to vector<128x512xf32>
    %cst_37 = arith.constant dense<0.000000e+00> : vector<8x512xf32>
    %82 = tpu.matmul %73, %81, %cst_37 {dimension_numbers = #tpu.dot_dimension_numbers<[1], [0], [0], [1], [0, 0, 1, 1], [], []>} : vector<8x128xf32>, vector<128x512xf32>, vector<8x512xf32> -> vector<8x512xf32>
    %c1_38 = arith.constant 1 : index
    %c0_39 = arith.constant 0 : index
    %c0_40 = arith.constant 0 : index
    %83 = vector.load %arg12[%c1_38, %c0_39, %c0_40] : memref<2x8x128xf32, #tpu.memory_space<vmem>>, vector<1x8x128xf32>
    %84 = vector.shape_cast %83 : vector<1x8x128xf32> to vector<8x128xf32>
    %c1_41 = arith.constant 1 : index
    %c0_42 = arith.constant 0 : index
    %c0_43 = arith.constant 0 : index
    %85 = vector.load %arg5[%c1_41, %c0_42, %c0_43] : memref<2x128x512xf32, #tpu.memory_space<vmem>>, vector<1x128x512xf32>
    %86 = vector.shape_cast %85 : vector<1x128x512xf32> to vector<128x512xf32>
    %cst_44 = arith.constant dense<0.000000e+00> : vector<8x512xf32>
    %87 = tpu.matmul %84, %86, %cst_44 {dimension_numbers = #tpu.dot_dimension_numbers<[1], [0], [0], [1], [0, 0, 1, 1], [], []>} : vector<8x128xf32>, vector<128x512xf32>, vector<8x512xf32> -> vector<8x512xf32>
    %88 = arith.addf %82, %87 : vector<8x512xf32>
    %c1_45 = arith.constant 1 : index
    %c0_46 = arith.constant 0 : index
    %c0_47 = arith.constant 0 : index
    %89 = vector.load %arg6[%c1_45, %c0_46, %c0_47] : memref<2x1x512xf32, #tpu.memory_space<vmem>>, vector<1x1x512xf32>
    %90 = vector.shape_cast %89 : vector<1x1x512xf32> to vector<1x512xf32>
    %91 = vector.broadcast %90 : vector<1x512xf32> to vector<8x512xf32>
    %92 = arith.addf %88, %91 : vector<8x512xf32>
    %c1_48 = arith.constant 1 : index
    %c0_49 = arith.constant 0 : index
    %c0_50 = arith.constant 0 : index
    %93 = vector.load %arg13[%c1_48, %c0_49, %c0_50] : memref<2x8x128xf32, #tpu.memory_space<vmem>>, vector<1x8x128xf32>
    %94 = vector.shape_cast %93 : vector<1x8x128xf32> to vector<8x128xf32>
    %95 = vector.extract_strided_slice %92 {offsets = [0, 0], sizes = [8, 128], strides = [1, 1]} : vector<8x512xf32> to vector<8x128xf32>
    %96 = arith.negf %95 : vector<8x128xf32>
    %97 = math.exp %96 : vector<8x128xf32>
    %cst_51 = arith.constant 1.000000e+00 : f32
    %98 = vector.broadcast %cst_51 : f32 to vector<8x128xf32>
    %99 = arith.addf %98, %97 : vector<8x128xf32>
    %100 = arith.divf %98, %99 : vector<8x128xf32>
    %101 = vector.extract_strided_slice %92 {offsets = [0, 128], sizes = [8, 128], strides = [1, 1]} : vector<8x512xf32> to vector<8x128xf32>
    %102 = arith.negf %101 : vector<8x128xf32>
    %103 = math.exp %102 : vector<8x128xf32>
    %cst_52 = arith.constant 1.000000e+00 : f32
    %104 = vector.broadcast %cst_52 : f32 to vector<8x128xf32>
    %105 = arith.addf %104, %103 : vector<8x128xf32>
    %106 = arith.divf %104, %105 : vector<8x128xf32>
    %107 = vector.extract_strided_slice %92 {offsets = [0, 256], sizes = [8, 128], strides = [1, 1]} : vector<8x512xf32> to vector<8x128xf32>
    %108 = math.tanh %107 : vector<8x128xf32>
    %109 = vector.extract_strided_slice %92 {offsets = [0, 384], sizes = [8, 128], strides = [1, 1]} : vector<8x512xf32> to vector<8x128xf32>
    %110 = arith.negf %109 : vector<8x128xf32>
    %111 = math.exp %110 : vector<8x128xf32>
    %cst_53 = arith.constant 1.000000e+00 : f32
    %112 = vector.broadcast %cst_53 : f32 to vector<8x128xf32>
    %113 = arith.addf %112, %111 : vector<8x128xf32>
    %114 = arith.divf %112, %113 : vector<8x128xf32>
    %115 = arith.mulf %106, %94 : vector<8x128xf32>
    %116 = arith.mulf %100, %108 : vector<8x128xf32>
    %117 = arith.addf %115, %116 : vector<8x128xf32>
    %118 = math.tanh %117 : vector<8x128xf32>
    %119 = arith.mulf %114, %118 : vector<8x128xf32>
    %c1_54 = arith.constant 1 : index
    %c0_55 = arith.constant 0 : index
    %c0_56 = arith.constant 0 : index
    %120 = vector.load %arg12[%c1_54, %c0_55, %c0_56] : memref<2x8x128xf32, #tpu.memory_space<vmem>>, vector<1x8x128xf32>
    %121 = vector.shape_cast %120 : vector<1x8x128xf32> to vector<8x128xf32>
    %122 = vector.shape_cast %119 : vector<8x128xf32> to vector<1x8x128xf32>
    tpu.vector_store %arg12[%c1_54, %c0_55, %c0_56], %122 {strides = array<i32>} : memref<2x8x128xf32, #tpu.memory_space<vmem>>, vector<1x8x128xf32>,
    %c1_57 = arith.constant 1 : index
    %c0_58 = arith.constant 0 : index
    %c0_59 = arith.constant 0 : index
    %123 = vector.load %arg13[%c1_57, %c0_58, %c0_59] : memref<2x8x128xf32, #tpu.memory_space<vmem>>, vector<1x8x128xf32>
    %124 = vector.shape_cast %123 : vector<1x8x128xf32> to vector<8x128xf32>
    %125 = vector.shape_cast %117 : vector<8x128xf32> to vector<1x8x128xf32>
    tpu.vector_store %arg13[%c1_57, %c0_58, %c0_59], %125 {strides = array<i32>} : memref<2x8x128xf32, #tpu.memory_space<vmem>>, vector<1x8x128xf32>,
    %c0_60 = arith.constant 0 : index
    %c0_61 = arith.constant 0 : index
    %126 = vector.load %arg9[%c0_60, %c0_61] : memref<128x128xf32, #tpu.memory_space<vmem>>, vector<128x128xf32>
    %cst_62 = arith.constant dense<0.000000e+00> : vector<8x128xf32>
    %127 = tpu.matmul %119, %126, %cst_62 {dimension_numbers = #tpu.dot_dimension_numbers<[1], [0], [0], [1], [0, 0, 1, 1], [], []>} : vector<8x128xf32>, vector<128x128xf32>, vector<8x128xf32> -> vector<8x128xf32>
    %c0_63 = arith.constant 0 : index
    %c0_64 = arith.constant 0 : index
    %128 = vector.load %arg10[%c0_63, %c0_64] : memref<1x128xf32, #tpu.memory_space<vmem>>, vector<1x128xf32>
    %129 = vector.broadcast %128 : vector<1x128xf32> to vector<8x128xf32>
    %130 = arith.addf %127, %129 : vector<8x128xf32>
    %c0_65 = arith.constant 0 : index
    %c0_66 = arith.constant 0 : index
    %c0_67 = arith.constant 0 : index
    %131 = vector.load %arg11[%c0_65, %c0_66, %c0_67] : memref<1x8x128xf32, #tpu.memory_space<vmem>>, vector<1x8x128xf32>
    %132 = vector.shape_cast %131 : vector<1x8x128xf32> to vector<8x128xf32>
    %133 = vector.shape_cast %130 : vector<8x128xf32> to vector<1x8x128xf32>
    tpu.vector_store %arg11[%c0_65, %c0_66, %c0_67], %133 {strides = array<i32>} : memref<1x8x128xf32, #tpu.memory_space<vmem>>, vector<1x8x128xf32>,
    %c0_68 = arith.constant 0 : index
    %c0_69 = arith.constant 0 : index
    %134 = vector.load %arg14[%c0_68, %c0_69] : memref<8x128xf32, #tpu.memory_space<vmem>>, vector<8x128xf32>
    tpu.vector_store %arg14[%c0_68, %c0_69], %130 {strides = array<i32>} : memref<8x128xf32, #tpu.memory_space<vmem>>, vector<8x128xf32>,
    return
  }
  func.func @transform_0(%arg0: i32, %arg1: memref<7xi32, #tpu.memory_space<smem>>) -> (i32, i32, i32) {
    %c0_i32 = arith.constant 0 : i32
    %c0_i32_0 = arith.constant 0 : i32
    %c0_i32_1 = arith.constant 0 : i32
    return %arg0, %c0_i32, %c0_i32_0 : i32, i32, i32
  }
  func.func @transform_1(%arg0: i32, %arg1: memref<7xi32, #tpu.memory_space<smem>>) -> (i32, i32) {
    %c0_i32 = arith.constant 0 : i32
    %c0_i32_0 = arith.constant 0 : i32
    %c0_i32_1 = arith.constant 0 : i32
    return %c0_i32, %c0_i32_0 : i32, i32
  }
  func.func @transform_2(%arg0: i32, %arg1: memref<7xi32, #tpu.memory_space<smem>>) -> (i32, i32, i32) {
    %c0_i32 = arith.constant 0 : i32
    %c0_i32_0 = arith.constant 0 : i32
    %c0_i32_1 = arith.constant 0 : i32
    %c0_i32_2 = arith.constant 0 : i32
    return %c0_i32, %c0_i32_0, %c0_i32_1 : i32, i32, i32
  }
  func.func @transform_3(%arg0: i32, %arg1: memref<7xi32, #tpu.memory_space<smem>>) -> (i32, i32, i32) {
    %c0_i32 = arith.constant 0 : i32
    %c0_i32_0 = arith.constant 0 : i32
    %c0_i32_1 = arith.constant 0 : i32
    %c0_i32_2 = arith.constant 0 : i32
    return %c0_i32, %c0_i32_0, %c0_i32_1 : i32, i32, i32
  }
  func.func @transform_4(%arg0: i32, %arg1: memref<7xi32, #tpu.memory_space<smem>>) -> (i32, i32, i32) {
    %c0_i32 = arith.constant 0 : i32
    %c0_i32_0 = arith.constant 0 : i32
    %c0_i32_1 = arith.constant 0 : i32
    %c0_i32_2 = arith.constant 0 : i32
    return %c0_i32, %c0_i32_0, %c0_i32_1 : i32, i32, i32
  }
  func.func @transform_5(%arg0: i32, %arg1: memref<7xi32, #tpu.memory_space<smem>>) -> (i32, i32, i32) {
    %c0_i32 = arith.constant 0 : i32
    %c0_i32_0 = arith.constant 0 : i32
    %c0_i32_1 = arith.constant 0 : i32
    %c0_i32_2 = arith.constant 0 : i32
    return %c0_i32, %c0_i32_0, %c0_i32_1 : i32, i32, i32
  }
  func.func @transform_6(%arg0: i32, %arg1: memref<7xi32, #tpu.memory_space<smem>>) -> (i32, i32, i32) {
    %c0_i32 = arith.constant 0 : i32
    %c0_i32_0 = arith.constant 0 : i32
    %c0_i32_1 = arith.constant 0 : i32
    %c0_i32_2 = arith.constant 0 : i32
    return %c0_i32, %c0_i32_0, %c0_i32_1 : i32, i32, i32
  }
  func.func @transform_7(%arg0: i32, %arg1: memref<7xi32, #tpu.memory_space<smem>>) -> (i32, i32) {
    %c0_i32 = arith.constant 0 : i32
    %c0_i32_0 = arith.constant 0 : i32
    %c0_i32_1 = arith.constant 0 : i32
    return %c0_i32, %c0_i32_0 : i32, i32
  }
  func.func @transform_8(%arg0: i32, %arg1: memref<7xi32, #tpu.memory_space<smem>>) -> (i32, i32) {
    %c0_i32 = arith.constant 0 : i32
    %c0_i32_0 = arith.constant 0 : i32
    %c0_i32_1 = arith.constant 0 : i32
    return %c0_i32, %c0_i32_0 : i32, i32
  }
  func.func @transform_9(%arg0: i32, %arg1: memref<7xi32, #tpu.memory_space<smem>>) -> (i32, i32, i32) {
    %c0_i32 = arith.constant 0 : i32
    %c0_i32_0 = arith.constant 0 : i32
    %c0_i32_1 = arith.constant 0 : i32
    return %arg0, %c0_i32, %c0_i32_0 : i32, i32, i32
  }
}

</mosaic_0001>

<llo_original>
// kernel: seq2seq_forward.3
$region0: #{seq2seq_forward.3}
  #allocation0 [shape = 'u32[]', space=smem, size = 0x4, offset = 0x4, fixed_abs, tag = 'smem constant byte address 0x4 - core index']
  #allocation1 [shape = 'u32[144,128]{1,0:T(1,128)}', space=vmem, size = 0x12000, scoped, tag = 'internal scratch']
  %s0 = inlined_call_operand.vmem [shape: f32[48,128], index: 0, kind: input, shape index: {}]
  %s1 = inlined_call_operand.vmem [shape: f32[128,512], index: 1, kind: input, shape index: {}]
  %s2 = inlined_call_operand.vmem [shape: f32[1,512], index: 2, kind: input, shape index: {}]
  %s3 = inlined_call_operand.vmem [shape: f32[48,512], index: 3, kind: output, shape index: {}]
  %s4 = sld [smem:[#allocation0]]
  $region22: #{seq2seq_forward.3} parent=0
    _
  %s6 = ssub.s32 1, %s4
  %s7 = scalar_select 0, %s6, %s4
  // Predicated region
  $region2: #{seq2seq_forward.3} parent=0 // pred_check
    _
  $region3: #{seq2seq_forward.3} parent=0 // pred_check_branch
    %9 = sbr.rel (0) target = $region5
  $region4: #{seq2seq_forward.3} parent=0 // pred_region
    _
  $region5: #{seq2seq_forward.3} parent=0 // pred_fallthru
    _
  // Predicated region
  $region6: #{seq2seq_forward.3} parent=0 // pred_check
    _
  $region7: #{seq2seq_forward.3} parent=0 // pred_check_branch
    %11 = sbr.rel (0) target = $region9
  $region8: #{seq2seq_forward.3} parent=0 // pred_region
    _
  $region9: #{seq2seq_forward.3} parent=0 // pred_fallthru
    _
  // Predicated region
  $region10: #{seq2seq_forward.3} parent=0 // pred_check
    _
  $region11: #{seq2seq_forward.3} parent=0 // pred_check_branch
    %13 = sbr.rel (0) target = $region13
  $region12: #{seq2seq_forward.3} parent=0 // pred_region
    _
  $region13: #{seq2seq_forward.3} parent=0 // pred_fallthru
    _
  %v14 = vld [vmem:[%s0] sm:$0xff]
  %v15 = vld [vmem:[%s0 + $0x8] sm:$0xff]
  %v16 = vld [vmem:[%s0 + $0x10] sm:$0xff]
  %v17 = vld [vmem:[%s0 + $0x18] sm:$0xff]
  %v18 = vld [vmem:[%s0 + $0x20] sm:$0xff]
  %v19 = vld [vmem:[%s0 + $0x28] sm:$0xff]
  %v20 = vld [vmem:[%s1] sm:$0xff]
  %v21 = vld [vmem:[%s1 + $0x8] sm:$0xff]
  %v22 = vld [vmem:[%s1 + $0x10] sm:$0xff]
  %v23 = vld [vmem:[%s1 + $0x18] sm:$0xff]
  %v24 = vld [vmem:[%s1 + $0x20] sm:$0xff]
  %v25 = vld [vmem:[%s1 + $0x28] sm:$0xff]
  %v26 = vld [vmem:[%s1 + $0x30] sm:$0xff]
  %v27 = vld [vmem:[%s1 + $0x38] sm:$0xff]
  %v28 = vld [vmem:[%s1 + $0x40] sm:$0xff]
  %v29 = vld [vmem:[%s1 + $0x48] sm:$0xff]
  %v30 = vld [vmem:[%s1 + $0x50] sm:$0xff]
  %v31 = vld [vmem:[%s1 + $0x58] sm:$0xff]
  %v32 = vld [vmem:[%s1 + $0x60] sm:$0xff]
  %v33 = vld [vmem:[%s1 + $0x68] sm:$0xff]
  %v34 = vld [vmem:[%s1 + $0x70] sm:$0xff]
  %v35 = vld [vmem:[%s1 + $0x78] sm:$0xff]
  %v36 = vld [vmem:[%s1 + $0x80] sm:$0xff]
  %v37 = vld [vmem:[%s1 + $0x88] sm:$0xff]
  %v38 = vld [vmem:[%s1 + $0x90] sm:$0xff]
  %v39 = vld [vmem:[%s1 + $0x98] sm:$0xff]
  %v40 = vld [vmem:[%s1 + $0xa0] sm:$0xff]
  %v41 = vld [vmem:[%s1 + $0xa8] sm:$0xff]
  %v42 = vld [vmem:[%s1 + $0xb0] sm:$0xff]
  %v43 = vld [vmem:[%s1 + $0xb8] sm:$0xff]
  %v44 = vld [vmem:[%s1 + $0xc0] sm:$0xff]
  %v45 = vld [vmem:[%s1 + $0xc8] sm:$0xff]
  %v46 = vld [vmem:[%s1 + $0xd0] sm:$0xff]
  %v47 = vld [vmem:[%s1 + $0xd8] sm:$0xff]
  %v48 = vld [vmem:[%s1 + $0xe0] sm:$0xff]
  %v49 = vld [vmem:[%s1 + $0xe8] sm:$0xff]
  %v50 = vld [vmem:[%s1 + $0xf0] sm:$0xff]
  %v51 = vld [vmem:[%s1 + $0xf8] sm:$0xff]
  %v52 = vld [vmem:[%s1 + $0x100] sm:$0xff]
  %v53 = vld [vmem:[%s1 + $0x108] sm:$0xff]
  %v54 = vld [vmem:[%s1 + $0x110] sm:$0xff]
  %v55 = vld [vmem:[%s1 + $0x118] sm:$0xff]
  %v56 = vld [vmem:[%s1 + $0x120] sm:$0xff]
  %v57 = vld [vmem:[%s1 + $0x128] sm:$0xff]
  %v58 = vld [vmem:[%s1 + $0x130] sm:$0xff]
  %v59 = vld [vmem:[%s1 + $0x138] sm:$0xff]
  %v60 = vld [vmem:[%s1 + $0x140] sm:$0xff]
  %v61 = vld [vmem:[%s1 + $0x148] sm:$0xff]
  %v62 = vld [vmem:[%s1 + $0x150] sm:$0xff]
  %v63 = vld [vmem:[%s1 + $0x158] sm:$0xff]
  %v64 = vld [vmem:[%s1 + $0x160] sm:$0xff]
  %v65 = vld [vmem:[%s1 + $0x168] sm:$0xff]
  %v66 = vld [vmem:[%s1 + $0x170] sm:$0xff]
  %v67 = vld [vmem:[%s1 + $0x178] sm:$0xff]
  %v68 = vld [vmem:[%s1 + $0x180] sm:$0xff]
  %v69 = vld [vmem:[%s1 + $0x188] sm:$0xff]
  %v70 = vld [vmem:[%s1 + $0x190] sm:$0xff]
  %v71 = vld [vmem:[%s1 + $0x198] sm:$0xff]
  %v72 = vld [vmem:[%s1 + $0x1a0] sm:$0xff]
  %v73 = vld [vmem:[%s1 + $0x1a8] sm:$0xff]
  %v74 = vld [vmem:[%s1 + $0x1b0] sm:$0xff]
  %v75 = vld [vmem:[%s1 + $0x1b8] sm:$0xff]
  %v76 = vld [vmem:[%s1 + $0x1c0] sm:$0xff]
  %v77 = vld [vmem:[%s1 + $0x1c8] sm:$0xff]
  %v78 = vld [vmem:[%s1 + $0x1d0] sm:$0xff]
  %v79 = vld [vmem:[%s1 + $0x1d8] sm:$0xff]
  %v80 = vld [vmem:[%s1 + $0x1e0] sm:$0xff]
  %v81 = vld [vmem:[%s1 + $0x1e8] sm:$0xff]
  %v82 = vld [vmem:[%s1 + $0x1f0] sm:$0xff]
  %v83 = vld [vmem:[%s1 + $0x1f8] sm:$0xff]
  %v84 = vld [vmem:[%s2] sm:$0xf]
  %v86 = vlaneseq
  %v87 = vshrl.u32 %v86, 7
  %v88 = vsub.s32 0, %v87
  %v89 = vrot.slane %v84, %v88
  %v90 = vlaneseq
  %v91 = vshrl.u32 %v90, 7
  %v92 = vsub.s32 1, %v91
  %v93 = vrot.slane %v84, %v92
  %v94 = vlaneseq
  %v95 = vshrl.u32 %v94, 7
  %v96 = vsub.s32 2, %v95
  %v97 = vrot.slane %v84, %v96
  %v98 = vlaneseq
  %v99 = vshrl.u32 %v98, 7
  %v100 = vsub.s32 3, %v99
  %v101 = vrot.slane %v84, %v100
  %106 = vmatprep.subr.mxu0 %v81
  %107 = vmatpush1.msra.mxu0 %v80
  %108 = vmatprep.subr.mxu0 %v77
  %109 = vmatpush1.msra.mxu0 %v76
  %110 = vmatprep.subr.mxu0 %v73
  %111 = vmatpush1.msra.mxu0 %v72
  %112 = vmatprep.subr.mxu0 %v69
  %113 = vmatpush1.msra.mxu0 %v68
  %114 = vmatprep.subr.mxu0 %v65
  %115 = vmatpush1.msra.mxu0 %v64
  %116 = vmatprep.subr.mxu0 %v61
  %117 = vmatpush1.msra.mxu0 %v60
  %118 = vmatprep.subr.mxu0 %v57
  %119 = vmatpush1.msra.mxu0 %v56
  %120 = vmatprep.subr.mxu0 %v53
  %121 = vmatpush1.msra.mxu0 %v52
  %122 = vmatprep.subr.mxu0 %v49
  %123 = vmatpush1.msra.mxu0 %v48
  %124 = vmatprep.subr.mxu0 %v45
  %125 = vmatpush1.msra.mxu0 %v44
  %126 = vmatprep.subr.mxu0 %v41
  %127 = vmatpush1.msra.mxu0 %v40
  %128 = vmatprep.subr.mxu0 %v37
  %129 = vmatpush1.msra.mxu0 %v36
  %130 = vmatprep.subr.mxu0 %v33
  %131 = vmatpush1.msra.mxu0 %v32
  %132 = vmatprep.subr.mxu0 %v29
  %133 = vmatpush1.msra.mxu0 %v28
  %134 = vmatprep.subr.mxu0 %v25
  %135 = vmatpush1.msra.mxu0 %v24
  %136 = vmatprep.subr.mxu0 %v21
  %137 = vmatpush1.msra.mxu0 %v20
  %138 = vmatprep.subr.mxu0 0.0
  %139 = vmatpush2.msra.mxu0 0.0
  %140 = vmatprep.subr.mxu0 0.0
  %141 = vmatpush2.msra.mxu0 0.0
  %142 = vmatprep.subr.mxu0 0.0
  %143 = vmatpush2.msra.mxu0 0.0
  %144 = vmatprep.subr.mxu0 0.0
  %145 = vmatpush2.msra.mxu0 0.0
  %146 = vmatprep.subr.mxu0 0.0
  %147 = vmatpush2.msra.mxu0 0.0
  %148 = vmatprep.subr.mxu0 0.0
  %149 = vmatpush2.msra.mxu0 0.0
  %150 = vmatprep.subr.mxu0 0.0
  %151 = vmatpush2.msra.mxu0 0.0
  %152 = vmatprep.subr.mxu0 0.0
  %153 = vmatpush2.msra.mxu0 0.0
  %154 = vmatprep.subr.mxu0 0.0
  %155 = vmatpush2.msra.mxu0 0.0
  %156 = vmatprep.subr.mxu0 0.0
  %157 = vmatpush2.msra.mxu0 0.0
  %158 = vmatprep.subr.mxu0 0.0
  %159 = vmatpush2.msra.mxu0 0.0
  %160 = vmatprep.subr.mxu0 0.0
  %161 = vmatpush2.msra.mxu0 0.0
  %162 = vmatprep.subr.mxu0 0.0
  %163 = vmatpush2.msra.mxu0 0.0
  %164 = vmatprep.subr.mxu0 0.0
  %165 = vmatpush2.msra.mxu0 0.0
  %166 = vmatprep.subr.mxu0 0.0
  %167 = vmatpush2.msra.mxu0 0.0
  %168 = vmatprep.subr.mxu0 0.0
  %169 = vmatpush2.msra.mxu0 0.0
  %170 = vmatprep.mubr.f32.mxu0 0.0
  %171 = vmatmul.mubr.f32.gmra.mxu0 %v14
  %v172 = vpop.f32.mrf.mxu0
  %v173 = vadd.f32 %v89, %v172
  %v174 = vpop.f32.mrf.mxu0
  %v175 = vadd.f32 %v93, %v174
  %176 = vmatprep.mubr.f32.mxu0 0.0
  %177 = vmatmul.mubr.f32.gmra.mxu0 %v15
  %v178 = vpop.f32.mrf.mxu0
  %v179 = vadd.f32 %v89, %v178
  %v180 = vpop.f32.mrf.mxu0
  %v181 = vadd.f32 %v93, %v180
  %182 = vmatprep.mubr.f32.mxu0 0.0
  %183 = vmatmul.mubr.f32.gmra.mxu0 %v16
  %v184 = vpop.f32.mrf.mxu0
  %v185 = vadd.f32 %v89, %v184
  %v186 = vpop.f32.mrf.mxu0
  %v187 = vadd.f32 %v93, %v186
  %188 = vmatprep.mubr.f32.mxu0 0.0
  %189 = vmatmul.mubr.f32.gmra.mxu0 %v17
  %v190 = vpop.f32.mrf.mxu0
  %v191 = vadd.f32 %v89, %v190
  %v192 = vpop.f32.mrf.mxu0
  %v193 = vadd.f32 %v93, %v192
  %194 = vmatprep.mubr.f32.mxu0 0.0
  %195 = vmatmul.mubr.f32.gmra.mxu0 %v18
  %v196 = vpop.f32.mrf.mxu0
  %v197 = vadd.f32 %v89, %v196
  %v198 = vpop.f32.mrf.mxu0
  %v199 = vadd.f32 %v93, %v198
  %200 = vmatprep.mubr.f32.mxu0 0.0
  %201 = vmatmul.mubr.f32.gmra.mxu0 %v19
  %v202 = vpop.f32.mrf.mxu0
  %v203 = vadd.f32 %v89, %v202
  %v204 = vpop.f32.mrf.mxu0
  %v205 = vadd.f32 %v93, %v204
  %206 = vdwg.mxu0
  %207 = vmatprep.subr.mxu0 %v83
  %208 = vmatpush1.msra.mxu0 %v82
  %209 = vmatprep.subr.mxu0 %v79
  %210 = vmatpush1.msra.mxu0 %v78
  %211 = vmatprep.subr.mxu0 %v75
  %212 = vmatpush1.msra.mxu0 %v74
  %213 = vmatprep.subr.mxu0 %v71
  %214 = vmatpush1.msra.mxu0 %v70
  %215 = vmatprep.subr.mxu0 %v67
  %216 = vmatpush1.msra.mxu0 %v66
  %217 = vmatprep.subr.mxu0 %v63
  %218 = vmatpush1.msra.mxu0 %v62
  %219 = vmatprep.subr.mxu0 %v59
  %220 = vmatpush1.msra.mxu0 %v58
  %221 = vmatprep.subr.mxu0 %v55
  %222 = vmatpush1.msra.mxu0 %v54
  %223 = vmatprep.subr.mxu0 %v51
  %224 = vmatpush1.msra.mxu0 %v50
  %225 = vmatprep.subr.mxu0 %v47
  %226 = vmatpush1.msra.mxu0 %v46
  %227 = vmatprep.subr.mxu0 %v43
  %228 = vmatpush1.msra.mxu0 %v42
  %229 = vmatprep.subr.mxu0 %v39
  %230 = vmatpush1.msra.mxu0 %v38
  %231 = vmatprep.subr.mxu0 %v35
  %232 = vmatpush1.msra.mxu0 %v34
  %233 = vmatprep.subr.mxu0 %v31
  %234 = vmatpush1.msra.mxu0 %v30
  %235 = vmatprep.subr.mxu0 %v27
  %236 = vmatpush1.msra.mxu0 %v26
  %237 = vmatprep.subr.mxu0 %v23
  %238 = vmatpush1.msra.mxu0 %v22
  %239 = vmatprep.subr.mxu0 0.0
  %240 = vmatpush2.msra.mxu0 0.0
  %241 = vmatprep.subr.mxu0 0.0
  %242 = vmatpush2.msra.mxu0 0.0
  %243 = vmatprep.subr.mxu0 0.0
  %244 = vmatpush2.msra.mxu0 0.0
  %245 = vmatprep.subr.mxu0 0.0
  %246 = vmatpush2.msra.mxu0 0.0
  %247 = vmatprep.subr.mxu0 0.0
  %248 = vmatpush2.msra.mxu0 0.0
  %249 = vmatprep.subr.mxu0 0.0
  %250 = vmatpush2.msra.mxu0 0.0
  %251 = vmatprep.subr.mxu0 0.0
  %252 = vmatpush2.msra.mxu0 0.0
  %253 = vmatprep.subr.mxu0 0.0
  %254 = vmatpush2.msra.mxu0 0.0
  %255 = vmatprep.subr.mxu0 0.0
  %256 = vmatpush2.msra.mxu0 0.0
  %257 = vmatprep.subr.mxu0 0.0
  %258 = vmatpush2.msra.mxu0 0.0
  %259 = vmatprep.subr.mxu0 0.0
  %260 = vmatpush2.msra.mxu0 0.0
  %261 = vmatprep.subr.mxu0 0.0
  %262 = vmatpush2.msra.mxu0 0.0
  %263 = vmatprep.subr.mxu0 0.0
  %264 = vmatpush2.msra.mxu0 0.0
  %265 = vmatprep.subr.mxu0 0.0
  %266 = vmatpush2.msra.mxu0 0.0
  %267 = vmatprep.subr.mxu0 0.0
  %268 = vmatpush2.msra.mxu0 0.0
  %269 = vmatprep.subr.mxu0 0.0
  %270 = vmatpush2.msra.mxu0 0.0
  %271 = vmatprep.mubr.f32.mxu0 0.0
  %272 = vmatmul.mubr.f32.gmra.mxu0 %v14
  %v273 = vpop.f32.mrf.mxu0
  %v274 = vadd.f32 %v97, %v273
  %v275 = vpop.f32.mrf.mxu0
  %v276 = vadd.f32 %v101, %v275
  %277 = vmatprep.mubr.f32.mxu0 0.0
  %278 = vmatmul.mubr.f32.gmra.mxu0 %v15
  %v279 = vpop.f32.mrf.mxu0
  %v280 = vadd.f32 %v97, %v279
  %v281 = vpop.f32.mrf.mxu0
  %v282 = vadd.f32 %v101, %v281
  %283 = vmatprep.mubr.f32.mxu0 0.0
  %284 = vmatmul.mubr.f32.gmra.mxu0 %v16
  %v285 = vpop.f32.mrf.mxu0
  %v286 = vadd.f32 %v97, %v285
  %v287 = vpop.f32.mrf.mxu0
  %v288 = vadd.f32 %v101, %v287
  %289 = vmatprep.mubr.f32.mxu0 0.0
  %290 = vmatmul.mubr.f32.gmra.mxu0 %v17
  %v291 = vpop.f32.mrf.mxu0
  %v292 = vadd.f32 %v97, %v291
  %v293 = vpop.f32.mrf.mxu0
  %v294 = vadd.f32 %v101, %v293
  %295 = vmatprep.mubr.f32.mxu0 0.0
  %296 = vmatmul.mubr.f32.gmra.mxu0 %v18
  %v297 = vpop.f32.mrf.mxu0
  %v298 = vadd.f32 %v97, %v297
  %v299 = vpop.f32.mrf.mxu0
  %v300 = vadd.f32 %v101, %v299
  %301 = vmatprep.mubr.f32.mxu0 0.0
  %302 = vmatmul.mubr.f32.gmra.mxu0 %v19
  %v303 = vpop.f32.mrf.mxu0
  %v304 = vadd.f32 %v97, %v303
  %v305 = vpop.f32.mrf.mxu0
  %v306 = vadd.f32 %v101, %v305
  %307 = vdwg.mxu0
  %308 = vst [vmem:[%s3] sm:$0xff] %v173
  %309 = vst [vmem:[%s3 + $0x8] sm:$0xff] %v175
  %310 = vst [vmem:[%s3 + $0x10] sm:$0xff] %v274
  %311 = vst [vmem:[%s3 + $0x18] sm:$0xff] %v276
  %312 = vst [vmem:[%s3 + $0x20] sm:$0xff] %v179
  %313 = vst [vmem:[%s3 + $0x28] sm:$0xff] %v181
  %314 = vst [vmem:[%s3 + $0x30] sm:$0xff] %v280
  %315 = vst [vmem:[%s3 + $0x38] sm:$0xff] %v282
  %316 = vst [vmem:[%s3 + $0x40] sm:$0xff] %v185
  %317 = vst [vmem:[%s3 + $0x48] sm:$0xff] %v187
  %318 = vst [vmem:[%s3 + $0x50] sm:$0xff] %v286
  %319 = vst [vmem:[%s3 + $0x58] sm:$0xff] %v288
  %320 = vst [vmem:[%s3 + $0x60] sm:$0xff] %v191
  %321 = vst [vmem:[%s3 + $0x68] sm:$0xff] %v193
  %322 = vst [vmem:[%s3 + $0x70] sm:$0xff] %v292
  %323 = vst [vmem:[%s3 + $0x78] sm:$0xff] %v294
  %324 = vst [vmem:[%s3 + $0x80] sm:$0xff] %v197
  %325 = vst [vmem:[%s3 + $0x88] sm:$0xff] %v199
  %326 = vst [vmem:[%s3 + $0x90] sm:$0xff] %v298
  %327 = vst [vmem:[%s3 + $0x98] sm:$0xff] %v300
  %328 = vst [vmem:[%s3 + $0xa0] sm:$0xff] %v203
  %329 = vst [vmem:[%s3 + $0xa8] sm:$0xff] %v205
  %330 = vst [vmem:[%s3 + $0xb0] sm:$0xff] %v304
  %331 = vst [vmem:[%s3 + $0xb8] sm:$0xff] %v306
  // Predicated region
  $region14: #{seq2seq_forward.3} parent=0 // pred_check
    _
  $region15: #{seq2seq_forward.3} parent=0 // pred_check_branch
    %333 = sbr.rel (0) target = $region17
  $region16: #{seq2seq_forward.3} parent=0 // pred_region
    _
  $region17: #{seq2seq_forward.3} parent=0 // pred_fallthru
    _
  // Predicated region
  $region18: #{seq2seq_forward.3} parent=0 // pred_check
    _
  $region19: #{seq2seq_forward.3} parent=0 // pred_check_branch
    %335 = sbr.rel (0) target = $region21
  $region20: #{seq2seq_forward.3} parent=0 // pred_region
    _
  $region21: #{seq2seq_forward.3} parent=0 // pred_fallthru
    _

// kernel: seq2seq_forward.4
$region0: #{seq2seq_forward.4}
  #allocation0 [shape = 'u32[]', space=smem, size = 0x4, offset = 0x4, fixed_abs, tag = 'smem constant byte address 0x4 - core index']
  #allocation1 [shape = 'u32[144,128]{1,0:T(1,128)}', space=vmem, size = 0x12000, scoped, tag = 'internal scratch']
  %s0 = inlined_call_operand.vmem [shape: f32[6,8,512], index: 0, kind: input, shape index: {}]
  %s1 = inlined_call_operand.vmem [shape: f32[2,128,512], index: 1, kind: input, shape index: {}]
  %s2 = inlined_call_operand.vmem [shape: f32[2,128,512], index: 2, kind: input, shape index: {}]
  %s3 = inlined_call_operand.vmem [shape: f32[2,1,512], index: 3, kind: input, shape index: {}]
  %s4 = inlined_call_operand.vmem [shape: f32[2,8,128], index: 4, kind: output, shape index: {0}]
  %s5 = inlined_call_operand.vmem [shape: f32[2,8,128], index: 5, kind: output, shape index: {1}]
  %6 = xla_tuple %s4, %s5
  %s7 = sld [smem:[#allocation0]]
  $region61: #{seq2seq_forward.4} parent=0
    _
  %s9 = ssub.s32 1, %s7
  %s10 = scalar_select 0, %s9, %s7
  loop: start=0, step=1, limit=8
  $region2: #{seq2seq_forward.4} parent=0 // loop_pre_header
    _
  $region3: #{seq2seq_forward.4} parent=0 // loop_header
    %s12 = sphi 0, %s16
    %p13 = scmp.ge.s32.totalorder %s12, 8
    %s22 = sphi 0, %s24
    %s25 = sphi 0, %s22
    %s26 = sphi 0, %s25
    %s42 = sphi 0, %s26
    %s46 = sphi 0, %s46
    %s48 = sphi 0, %s46
    %s49 = sphi 0, %s48
    %s63 = sphi 0, %s49
    %s67 = sphi 0, %s67
    %s69 = sphi 0, %s67
    %s70 = sphi 0, %s69
    %s84 = sphi 0, %s70
    %s88 = sphi 0, %s88
    %s90 = sphi 0, %s88
    %s91 = sphi 0, %s90
    %s105 = sphi 0, %s91
    %s109 = sphi 0, %s109
    %s111 = sphi 0, %s109
    %s112 = sphi 0, %s111
    %s126 = sphi 0, %s112
    %s130 = sphi 0, %s130
    %s132 = sphi 0, %s130
    %s133 = sphi 0, %s132
    %s147 = sphi 0, %s133
  $region4: #{seq2seq_forward.4} parent=0 // loop_header_branch
    %15 = sbr.rel (%p13) target = $region8
  $region5: #{seq2seq_forward.4} parent=0 // loop_body
    %s17 = ssub.s32 %s12, 1
    %s18 = ssub.s32 %s12, 2
    %s19 = sadd.s32 %s12, 1
    %s20 = ssub.s32 %s12, %s19
    %p21 = scmp.eq.s32.totalorder %s20, 0
    %s23 = sadd.s32 %s22, 1
    %s24 = scalar_select %p21, %s22, %s23
    %p27 = pneg %p21
    %p28 = scmp.eq.s32.totalorder %s12, 5
    %p29 = por %p27, %p28
    %p30 = scmp.ne.s32.totalorder %s22, %s25
    %p31 = scmp.eq.s32.totalorder %s12, 0
    %p32 = por %p30, %p31
    %p33 = scmp.ne.s32.totalorder %s22, %s25
    %p34 = scmp.eq.s32.totalorder %s17, 5
    %p35 = por %p33, %p34
    %p36 = scmp.ne.s32.totalorder %s25, %s26
    %p37 = scmp.eq.s32.totalorder %s17, 0
    %p38 = por %p36, %p37
    %p39 = scmp.ne.s32.totalorder %s25, %s26
    %p40 = scmp.eq.s32.totalorder %s18, 5
    %p41 = por %p39, %p40
    %p43 = scmp.ne.s32.totalorder %s26, %s42
    %p44 = scmp.eq.s32.totalorder %s18, 0
    %p45 = por %p43, %p44
    %s47 = sadd.s32 %s46, 1
    %p50 = scmp.eq.s32.totalorder %s12, 5
    %p51 = scmp.ne.s32.totalorder %s46, %s48
    %p52 = scmp.eq.s32.totalorder %s12, 0
    %p53 = por %p51, %p52
    %p54 = scmp.ne.s32.totalorder %s46, %s48
    %p55 = scmp.eq.s32.totalorder %s17, 5
    %p56 = por %p54, %p55
    %p57 = scmp.ne.s32.totalorder %s48, %s49
    %p58 = scmp.eq.s32.totalorder %s17, 0
    %p59 = por %p57, %p58
    %p60 = scmp.ne.s32.totalorder %s48, %s49
    %p61 = scmp.eq.s32.totalorder %s18, 5
    %p62 = por %p60, %p61
    %p64 = scmp.ne.s32.totalorder %s49, %s63
    %p65 = scmp.eq.s32.totalorder %s18, 0
    %p66 = por %p64, %p65
    %s68 = sadd.s32 %s67, 1
    %p71 = scmp.eq.s32.totalorder %s12, 5
    %p72 = scmp.ne.s32.totalorder %s67, %s69
    %p73 = scmp.eq.s32.totalorder %s12, 0
    %p74 = por %p72, %p73
    %p75 = scmp.ne.s32.totalorder %s67, %s69
    %p76 = scmp.eq.s32.totalorder %s17, 5
    %p77 = por %p75, %p76
    %p78 = scmp.ne.s32.totalorder %s69, %s70
    %p79 = scmp.eq.s32.totalorder %s17, 0
    %p80 = por %p78, %p79
    %p81 = scmp.ne.s32.totalorder %s69, %s70
    %p82 = scmp.eq.s32.totalorder %s18, 5
    %p83 = por %p81, %p82
    %p85 = scmp.ne.s32.totalorder %s70, %s84
    %p86 = scmp.eq.s32.totalorder %s18, 0
    %p87 = por %p85, %p86
    %s89 = sadd.s32 %s88, 1
    %p92 = scmp.eq.s32.totalorder %s12, 5
    %p93 = scmp.ne.s32.totalorder %s88, %s90
    %p94 = scmp.eq.s32.totalorder %s12, 0
    %p95 = por %p93, %p94
    %p96 = scmp.ne.s32.totalorder %s88, %s90
    %p97 = scmp.eq.s32.totalorder %s17, 5
    %p98 = por %p96, %p97
    %p99 = scmp.ne.s32.totalorder %s90, %s91
    %p100 = scmp.eq.s32.totalorder %s17, 0
    %p101 = por %p99, %p100
    %p102 = scmp.ne.s32.totalorder %s90, %s91
    %p103 = scmp.eq.s32.totalorder %s18, 5
    %p104 = por %p102, %p103
    %p106 = scmp.ne.s32.totalorder %s91, %s105
    %p107 = scmp.eq.s32.totalorder %s18, 0
    %p108 = por %p106, %p107
    %s110 = sadd.s32 %s109, 1
    %p113 = scmp.eq.s32.totalorder %s12, 5
    %p114 = scmp.ne.s32.totalorder %s109, %s111
    %p115 = scmp.eq.s32.totalorder %s12, 0
    %p116 = por %p114, %p115
    %p117 = scmp.ne.s32.totalorder %s109, %s111
    %p118 = scmp.eq.s32.totalorder %s17, 5
    %p119 = por %p117, %p118
    %p120 = scmp.ne.s32.totalorder %s111, %s112
    %p121 = scmp.eq.s32.totalorder %s17, 0
    %p122 = por %p120, %p121
    %p123 = scmp.ne.s32.totalorder %s111, %s112
    %p124 = scmp.eq.s32.totalorder %s18, 5
    %p125 = por %p123, %p124
    %p127 = scmp.ne.s32.totalorder %s112, %s126
    %p128 = scmp.eq.s32.totalorder %s18, 0
    %p129 = por %p127, %p128
    %s131 = sadd.s32 %s130, 1
    %p134 = scmp.eq.s32.totalorder %s12, 5
    %p135 = scmp.ne.s32.totalorder %s130, %s132
    %p136 = scmp.eq.s32.totalorder %s12, 0
    %p137 = por %p135, %p136
    %p138 = scmp.ne.s32.totalorder %s130, %s132
    %p139 = scmp.eq.s32.totalorder %s17, 5
    %p140 = por %p138, %p139
    %p141 = scmp.ne.s32.totalorder %s132, %s133
    %p142 = scmp.eq.s32.totalorder %s17, 0
    %p143 = por %p141, %p142
    %p144 = scmp.ne.s32.totalorder %s132, %s133
    %p145 = scmp.eq.s32.totalorder %s18, 5
    %p146 = por %p144, %p145
    %p148 = scmp.ne.s32.totalorder %s133, %s147
    %p149 = scmp.eq.s32.totalorder %s18, 0
    %p150 = por %p148, %p149
    %p151 = scmp.le.s32.totalorder 1, %s12
    %p152 = scmp.lt.s32.totalorder %s12, 7
    %p153 = pnand %p151, %p152
    %p154 = pneg %p153
    // Predicated region
    $region9: #{seq2seq_forward.4} parent=5 // pred_check
      _
    $region10: #{seq2seq_forward.4} parent=5 // pred_check_branch
      %156 = sbr.rel (%p153) target = $region12
    $region11: #{seq2seq_forward.4} parent=5 // pred_region
      %s157 = ssub.s32 %s12, 1
      // Predicated region
      $region13: #{seq2seq_forward.4} parent=11 // pred_check
        %p158 = pneg %p59
      $region14: #{seq2seq_forward.4} parent=11 // pred_check_branch
        %160 = sbr.rel (%p158) target = $region16
      $region15: #{seq2seq_forward.4} parent=11 // pred_region
        _
      $region16: #{seq2seq_forward.4} parent=11 // pred_fallthru
        _
      // Predicated region
      $region17: #{seq2seq_forward.4} parent=11 // pred_check
        %p161 = pneg %p80
      $region18: #{seq2seq_forward.4} parent=11 // pred_check_branch
        %163 = sbr.rel (%p161) target = $region20
      $region19: #{seq2seq_forward.4} parent=11 // pred_region
        _
      $region20: #{seq2seq_forward.4} parent=11 // pred_fallthru
        _
      // Predicated region
      $region21: #{seq2seq_forward.4} parent=11 // pred_check
        %p164 = pneg %p101
      $region22: #{seq2seq_forward.4} parent=11 // pred_check_branch
        %166 = sbr.rel (%p164) target = $region24
      $region23: #{seq2seq_forward.4} parent=11 // pred_region
        _
      $region24: #{seq2seq_forward.4} parent=11 // pred_fallthru
        _
    $region12: #{seq2seq_forward.4} parent=5 // pred_fallthru
      _
    %p167 = scmp.lt.s32.totalorder %s12, 6
    // Predicated region
    $region25: #{seq2seq_forward.4} parent=5 // pred_check
      %p168 = pneg %p167
    $region26: #{seq2seq_forward.4} parent=5 // pred_check_branch
      %170 = sbr.rel (%p168) target = $region28
    $region27: #{seq2seq_forward.4} parent=5 // pred_region
      // Predicated region
      $region29: #{seq2seq_forward.4} parent=27 // pred_check
        %p171 = pneg %p32
      $region30: #{seq2seq_forward.4} parent=27 // pred_check_branch
        %173 = sbr.rel (%p171) target = $region32
      $region31: #{seq2seq_forward.4} parent=27 // pred_region
        %p174 = scmp.lt.s32.totalorder %s12, 5
        %s175 = scalar_select %p174, %s12, 5
        %s176 = smul.addr %s175, 4
        %s177 = smul.addr %s176, 8
        %s178 = scalar_lea.vmem %s0, %s177
      $region32: #{seq2seq_forward.4} parent=27 // pred_fallthru
        _
    $region28: #{seq2seq_forward.4} parent=5 // pred_fallthru
      _
    %p179 = scmp.le.s32.totalorder 1, %s12
    %p180 = scmp.lt.s32.totalorder %s12, 7
    %p181 = pnand %p179, %p180
    %p182 = pneg %p181
    // Predicated region
    $region33: #{seq2seq_forward.4} parent=5 // pred_check
      _
    $region34: #{seq2seq_forward.4} parent=5 // pred_check_branch
      %184 = sbr.rel (%p181) target = $region36
    $region35: #{seq2seq_forward.4} parent=5 // pred_region
      %s185 = ssub.s32 %s12, 1
      %p186 = scmp.lt.s32.totalorder %s17, 5
      %s187 = scalar_select %p186, %s17, 5
      %s188 = smul.addr %s187, 4
      %s189 = smul.addr %s188, 8
      %s190 = scalar_lea.vmem %s0, %s189
      %p191 = pneg %p38
      %p192 = pneg %p35
      %p193 = pneg %p59
      %p194 = pneg %p56
      %p195 = pneg %p80
      %p196 = pneg %p77
      %p197 = pneg %p101
      %p198 = pneg %p98
      %p199 = pneg %p122
      %p200 = pneg %p119
      %p201 = pneg %p143
      %p202 = pneg %p140
      %p203 = scmp.lt.s32.totalorder %s17, 5
      %s204 = scalar_select %p203, %s17, 5
      %s205 = smul.addr %s204, 4
      %s206 = smul.addr %s205, 8
      %s207 = scalar_lea.vmem %s0, %s206
      %p208 = scmp.eq.s32.totalorder %s17, 0
      // Predicated region
      $region37: #{seq2seq_forward.4} parent=35 // pred_check
        %p209 = pneg %p208
      $region38: #{seq2seq_forward.4} parent=35 // pred_check_branch
        %211 = sbr.rel (%p209) target = $region40
      $region39: #{seq2seq_forward.4} parent=35 // pred_region
        %212 = vst [vmem:[%s4] sm:$0xff] 0.0
        %213 = vst [vmem:[%s4 + $0x8] sm:$0xff] 0.0
        %214 = vst [vmem:[%s5] sm:$0xff] 0.0
        %215 = vst [vmem:[%s5 + $0x8] sm:$0xff] 0.0
      $region40: #{seq2seq_forward.4} parent=35 // pred_fallthru
        _
      %v216 = vld [vmem:[%s4] sm:$0xff]
      %v217 = vld [vmem:[%s5] sm:$0xff]
      %v218 = vld [vmem:[%s207] sm:$0xff]
      %v219 = vld [vmem:[%s207 + $0x8] sm:$0xff]
      %v220 = vld [vmem:[%s207 + $0x10] sm:$0xff]
      %v221 = vld [vmem:[%s207 + $0x18] sm:$0xff]
      %v222 = vld [vmem:[%s2] sm:$0xff]
      %v223 = vld [vmem:[%s2 + $0x8] sm:$0xff]
      %v224 = vld [vmem:[%s2 + $0x10] sm:$0xff]
      %v225 = vld [vmem:[%s2 + $0x18] sm:$0xff]
      %v226 = vld [vmem:[%s2 + $0x20] sm:$0xff]
      %v227 = vld [vmem:[%s2 + $0x28] sm:$0xff]
      %v228 = vld [vmem:[%s2 + $0x30] sm:$0xff]
      %v229 = vld [vmem:[%s2 + $0x38] sm:$0xff]
      %v230 = vld [vmem:[%s2 + $0x40] sm:$0xff]
      %v231 = vld [vmem:[%s2 + $0x48] sm:$0xff]
      %v232 = vld [vmem:[%s2 + $0x50] sm:$0xff]
      %v233 = vld [vmem:[%s2 + $0x58] sm:$0xff]
      %v234 = vld [vmem:[%s2 + $0x60] sm:$0xff]
      %v235 = vld [vmem:[%s2 + $0x68] sm:$0xff]
      %v236 = vld [vmem:[%s2 + $0x70] sm:$0xff]
      %v237 = vld [vmem:[%s2 + $0x78] sm:$0xff]
      %v238 = vld [vmem:[%s2 + $0x80] sm:$0xff]
      %v239 = vld [vmem:[%s2 + $0x88] sm:$0xff]
      %v240 = vld [vmem:[%s2 + $0x90] sm:$0xff]
      %v241 = vld [vmem:[%s2 + $0x98] sm:$0xff]
      %v242 = vld [vmem:[%s2 + $0xa0] sm:$0xff]
      %v243 = vld [vmem:[%s2 + $0xa8] sm:$0xff]
      %v244 = vld [vmem:[%s2 + $0xb0] sm:$0xff]
      %v245 = vld [vmem:[%s2 + $0xb8] sm:$0xff]
      %v246 = vld [vmem:[%s2 + $0xc0] sm:$0xff]
      %v247 = vld [vmem:[%s2 + $0xc8] sm:$0xff]
      %v248 = vld [vmem:[%s2 + $0xd0] sm:$0xff]
      %v249 = vld [vmem:[%s2 + $0xd8] sm:$0xff]
      %v250 = vld [vmem:[%s2 + $0xe0] sm:$0xff]
      %v251 = vld [vmem:[%s2 + $0xe8] sm:$0xff]
      %v252 = vld [vmem:[%s2 + $0xf0] sm:$0xff]
      %v253 = vld [vmem:[%s2 + $0xf8] sm:$0xff]
      %v254 = vld [vmem:[%s2 + $0x100] sm:$0xff]
      %v255 = vld [vmem:[%s2 + $0x108] sm:$0xff]
      %v256 = vld [vmem:[%s2 + $0x110] sm:$0xff]
      %v257 = vld [vmem:[%s2 + $0x118] sm:$0xff]
      %v258 = vld [vmem:[%s2 + $0x120] sm:$0xff]
      %v259 = vld [vmem:[%s2 + $0x128] sm:$0xff]
      %v260 = vld [vmem:[%s2 + $0x130] sm:$0xff]
      %v261 = vld [vmem:[%s2 + $0x138] sm:$0xff]
      %v262 = vld [vmem:[%s2 + $0x140] sm:$0xff]
      %v263 = vld [vmem:[%s2 + $0x148] sm:$0xff]
      %v264 = vld [vmem:[%s2 + $0x150] sm:$0xff]
      %v265 = vld [vmem:[%s2 + $0x158] sm:$0xff]
      %v266 = vld [vmem:[%s2 + $0x160] sm:$0xff]
      %v267 = vld [vmem:[%s2 + $0x168] sm:$0xff]
      %v268 = vld [vmem:[%s2 + $0x170] sm:$0xff]
      %v269 = vld [vmem:[%s2 + $0x178] sm:$0xff]
      %v270 = vld [vmem:[%s2 + $0x180] sm:$0xff]
      %v271 = vld [vmem:[%s2 + $0x188] sm:$0xff]
      %v272 = vld [vmem:[%s2 + $0x190] sm:$0xff]
      %v273 = vld [vmem:[%s2 + $0x198] sm:$0xff]
      %v274 = vld [vmem:[%s2 + $0x1a0] sm:$0xff]
      %v275 = vld [vmem:[%s2 + $0x1a8] sm:$0xff]
      %v276 = vld [vmem:[%s2 + $0x1b0] sm:$0xff]
      %v277 = vld [vmem:[%s2 + $0x1b8] sm:$0xff]
      %v278 = vld [vmem:[%s2 + $0x1c0] sm:$0xff]
      %v279 = vld [vmem:[%s2 + $0x1c8] sm:$0xff]
      %v280 = vld [vmem:[%s2 + $0x1d0] sm:$0xff]
      %v281 = vld [vmem:[%s2 + $0x1d8] sm:$0xff]
      %v282 = vld [vmem:[%s2 + $0x1e0] sm:$0xff]
      %v283 = vld [vmem:[%s2 + $0x1e8] sm:$0xff]
      %v284 = vld [vmem:[%s2 + $0x1f0] sm:$0xff]
      %v285 = vld [vmem:[%s2 + $0x1f8] sm:$0xff]
      %286 = vmatprep.subr.mxu0 %v283
      %287 = vmatpush1.msra.mxu0 %v282
      %288 = vmatprep.subr.mxu0 %v279
      %289 = vmatpush1.msra.mxu0 %v278
      %290 = vmatprep.subr.mxu0 %v275
      %291 = vmatpush1.msra.mxu0 %v274
      %292 = vmatprep.subr.mxu0 %v271
      %293 = vmatpush1.msra.mxu0 %v270
      %294 = vmatprep.subr.mxu0 %v267
      %295 = vmatpush1.msra.mxu0 %v266
      %296 = vmatprep.subr.mxu0 %v263
      %297 = vmatpush1.msra.mxu0 %v262
      %298 = vmatprep.subr.mxu0 %v259
      %299 = vmatpush1.msra.mxu0 %v258
      %300 = vmatprep.subr.mxu0 %v255
      %301 = vmatpush1.msra.mxu0 %v254
      %302 = vmatprep.subr.mxu0 %v251
      %303 = vmatpush1.msra.mxu0 %v250
      %304 = vmatprep.subr.mxu0 %v247
      %305 = vmatpush1.msra.mxu0 %v246
      %306 = vmatprep.subr.mxu0 %v243
      %307 = vmatpush1.msra.mxu0 %v242
      %308 = vmatprep.subr.mxu0 %v239
      %309 = vmatpush1.msra.mxu0 %v238
      %310 = vmatprep.subr.mxu0 %v235
      %311 = vmatpush1.msra.mxu0 %v234
      %312 = vmatprep.subr.mxu0 %v231
      %313 = vmatpush1.msra.mxu0 %v230
      %314 = vmatprep.subr.mxu0 %v227
      %315 = vmatpush1.msra.mxu0 %v226
      %316 = vmatprep.subr.mxu0 %v223
      %317 = vmatpush1.msra.mxu0 %v222
      %318 = vmatprep.subr.mxu0 0.0
      %319 = vmatpush2.msra.mxu0 0.0
      %320 = vmatprep.subr.mxu0 0.0
      %321 = vmatpush2.msra.mxu0 0.0
      %322 = vmatprep.subr.mxu0 0.0
      %323 = vmatpush2.msra.mxu0 0.0
      %324 = vmatprep.subr.mxu0 0.0
      %325 = vmatpush2.msra.mxu0 0.0
      %326 = vmatprep.subr.mxu0 0.0
      %327 = vmatpush2.msra.mxu0 0.0
      %328 = vmatprep.subr.mxu0 0.0
      %329 = vmatpush2.msra.mxu0 0.0
      %330 = vmatprep.subr.mxu0 0.0
      %331 = vmatpush2.msra.mxu0 0.0
      %332 = vmatprep.subr.mxu0 0.0
      %333 = vmatpush2.msra.mxu0 0.0
      %334 = vmatprep.subr.mxu0 0.0
      %335 = vmatpush2.msra.mxu0 0.0
      %336 = vmatprep.subr.mxu0 0.0
      %337 = vmatpush2.msra.mxu0 0.0
      %338 = vmatprep.subr.mxu0 0.0
      %339 = vmatpush2.msra.mxu0 0.0
      %340 = vmatprep.subr.mxu0 0.0
      %341 = vmatpush2.msra.mxu0 0.0
      %342 = vmatprep.subr.mxu0 0.0
      %343 = vmatpush2.msra.mxu0 0.0
      %344 = vmatprep.subr.mxu0 0.0
      %345 = vmatpush2.msra.mxu0 0.0
      %346 = vmatprep.subr.mxu0 0.0
      %347 = vmatpush2.msra.mxu0 0.0
      %348 = vmatprep.subr.mxu0 0.0
      %349 = vmatpush2.msra.mxu0 0.0
      %350 = vmatprep.mubr.f32.mxu0 0.0
      %351 = vmatmul.mubr.f32.gmra.mxu0 %v216
      %v352 = vpop.f32.mrf.mxu0
      %v353 = vadd.f32 0.0, %v352
      %v354 = vpop.f32.mrf.mxu0
      %v355 = vadd.f32 0.0, %v354
      %356 = vdwg.mxu0
      %357 = vmatprep.subr.mxu0 %v285
      %358 = vmatpush1.msra.mxu0 %v284
      %359 = vmatprep.subr.mxu0 %v281
      %360 = vmatpush1.msra.mxu0 %v280
      %361 = vmatprep.subr.mxu0 %v277
      %362 = vmatpush1.msra.mxu0 %v276
      %363 = vmatprep.subr.mxu0 %v273
      %364 = vmatpush1.msra.mxu0 %v272
      %365 = vmatprep.subr.mxu0 %v269
      %366 = vmatpush1.msra.mxu0 %v268
      %367 = vmatprep.subr.mxu0 %v265
      %368 = vmatpush1.msra.mxu0 %v264
      %369 = vmatprep.subr.mxu0 %v261
      %370 = vmatpush1.msra.mxu0 %v260
      %371 = vmatprep.subr.mxu0 %v257
      %372 = vmatpush1.msra.mxu0 %v256
      %373 = vmatprep.subr.mxu0 %v253
      %374 = vmatpush1.msra.mxu0 %v252
      %375 = vmatprep.subr.mxu0 %v249
      %376 = vmatpush1.msra.mxu0 %v248
      %377 = vmatprep.subr.mxu0 %v245
      %378 = vmatpush1.msra.mxu0 %v244
      %379 = vmatprep.subr.mxu0 %v241
      %380 = vmatpush1.msra.mxu0 %v240
      %381 = vmatprep.subr.mxu0 %v237
      %382 = vmatpush1.msra.mxu0 %v236
      %383 = vmatprep.subr.mxu0 %v233
      %384 = vmatpush1.msra.mxu0 %v232
      %385 = vmatprep.subr.mxu0 %v229
      %386 = vmatpush1.msra.mxu0 %v228
      %387 = vmatprep.subr.mxu0 %v225
      %388 = vmatpush1.msra.mxu0 %v224
      %389 = vmatprep.subr.mxu0 0.0
      %390 = vmatpush2.msra.mxu0 0.0
      %391 = vmatprep.subr.mxu0 0.0
      %392 = vmatpush2.msra.mxu0 0.0
      %393 = vmatprep.subr.mxu0 0.0
      %394 = vmatpush2.msra.mxu0 0.0
      %395 = vmatprep.subr.mxu0 0.0
      %396 = vmatpush2.msra.mxu0 0.0
      %397 = vmatprep.subr.mxu0 0.0
      %398 = vmatpush2.msra.mxu0 0.0
      %399 = vmatprep.subr.mxu0 0.0
      %400 = vmatpush2.msra.mxu0 0.0
      %401 = vmatprep.subr.mxu0 0.0
      %402 = vmatpush2.msra.mxu0 0.0
      %403 = vmatprep.subr.mxu0 0.0
      %404 = vmatpush2.msra.mxu0 0.0
      %405 = vmatprep.subr.mxu0 0.0
      %406 = vmatpush2.msra.mxu0 0.0
      %407 = vmatprep.subr.mxu0 0.0
      %408 = vmatpush2.msra.mxu0 0.0
      %409 = vmatprep.subr.mxu0 0.0
      %410 = vmatpush2.msra.mxu0 0.0
      %411 = vmatprep.subr.mxu0 0.0
      %412 = vmatpush2.msra.mxu0 0.0
      %413 = vmatprep.subr.mxu0 0.0
      %414 = vmatpush2.msra.mxu0 0.0
      %415 = vmatprep.subr.mxu0 0.0
      %416 = vmatpush2.msra.mxu0 0.0
      %417 = vmatprep.subr.mxu0 0.0
      %418 = vmatpush2.msra.mxu0 0.0
      %419 = vmatprep.subr.mxu0 0.0
      %420 = vmatpush2.msra.mxu0 0.0
      %421 = vmatprep.mubr.f32.mxu0 0.0
      %422 = vmatmul.mubr.f32.gmra.mxu0 %v216
      %v423 = vpop.f32.mrf.mxu0
      %v424 = vadd.f32 0.0, %v423
      %v425 = vpop.f32.mrf.mxu0
      %v426 = vadd.f32 0.0, %v425
      %427 = vdwg.mxu0
      %v428 = vadd.f32 %v218, %v353
      %v429 = vadd.f32 %v219, %v355
      %v430 = vadd.f32 %v220, %v424
      %v431 = vadd.f32 %v221, %v426
      %v432 = vxor.u32 %v428, 2147483648
      %v433 = vmul.f32 %v432, 1.442695
      %v434 = vpow.pop %v433
      %v435 = vadd.f32 %v434, 1.0
      %v436 = vrcp.pop %v435
      %v437 = vmul.f32 1.0, %v436
      %v438 = vxor.u32 %v429, 2147483648
      %v439 = vmul.f32 %v438, 1.442695
      %v440 = vpow.pop %v439
      %v441 = vadd.f32 %v440, 1.0
      %v442 = vrcp.pop %v441
      %v443 = vmul.f32 1.0, %v442
      %v444 = vtanh.pop %v430
      %v445 = vxor.u32 %v431, 2147483648
      %v446 = vmul.f32 %v445, 1.442695
      %v447 = vpow.pop %v446
      %v448 = vadd.f32 %v447, 1.0
      %v449 = vrcp.pop %v448
      %v450 = vmul.f32 1.0, %v449
      %v451 = vmul.f32 %v443, %v217
      %v452 = vmul.f32 %v437, %v444
      %v453 = vadd.f32 %v451, %v452
      %v454 = vtanh.pop %v453
      %v455 = vmul.f32 %v450, %v454
      %456 = vst [vmem:[%s4] sm:$0xff] %v455
      %457 = vst [vmem:[%s5] sm:$0xff] %v453
      %s458 = scalar_lea.vmem %s4, 8
      %v459 = vld [vmem:[%s458] sm:$0xff]
      %s460 = scalar_lea.vmem %s5, 8
      %v461 = vld [vmem:[%s460] sm:$0xff]
      %s462 = scalar_lea.vmem %s1, 512
      %v463 = vld [vmem:[%s462] sm:$0xff]
      %v464 = vld [vmem:[%s462 + $0x8] sm:$0xff]
      %v465 = vld [vmem:[%s462 + $0x10] sm:$0xff]
      %v466 = vld [vmem:[%s462 + $0x18] sm:$0xff]
      %v467 = vld [vmem:[%s462 + $0x20] sm:$0xff]
      %v468 = vld [vmem:[%s462 + $0x28] sm:$0xff]
      %v469 = vld [vmem:[%s462 + $0x30] sm:$0xff]
      %v470 = vld [vmem:[%s462 + $0x38] sm:$0xff]
      %v471 = vld [vmem:[%s462 + $0x40] sm:$0xff]
      %v472 = vld [vmem:[%s462 + $0x48] sm:$0xff]
      %v473 = vld [vmem:[%s462 + $0x50] sm:$0xff]
      %v474 = vld [vmem:[%s462 + $0x58] sm:$0xff]
      %v475 = vld [vmem:[%s462 + $0x60] sm:$0xff]
      %v476 = vld [vmem:[%s462 + $0x68] sm:$0xff]
      %v477 = vld [vmem:[%s462 + $0x70] sm:$0xff]
      %v478 = vld [vmem:[%s462 + $0x78] sm:$0xff]
      %v479 = vld [vmem:[%s462 + $0x80] sm:$0xff]
      %v480 = vld [vmem:[%s462 + $0x88] sm:$0xff]
      %v481 = vld [vmem:[%s462 + $0x90] sm:$0xff]
      %v482 = vld [vmem:[%s462 + $0x98] sm:$0xff]
      %v483 = vld [vmem:[%s462 + $0xa0] sm:$0xff]
      %v484 = vld [vmem:[%s462 + $0xa8] sm:$0xff]
      %v485 = vld [vmem:[%s462 + $0xb0] sm:$0xff]
      %v486 = vld [vmem:[%s462 + $0xb8] sm:$0xff]
      %v487 = vld [vmem:[%s462 + $0xc0] sm:$0xff]
      %v488 = vld [vmem:[%s462 + $0xc8] sm:$0xff]
      %v489 = vld [vmem:[%s462 + $0xd0] sm:$0xff]
      %v490 = vld [vmem:[%s462 + $0xd8] sm:$0xff]
      %v491 = vld [vmem:[%s462 + $0xe0] sm:$0xff]
      %v492 = vld [vmem:[%s462 + $0xe8] sm:$0xff]
      %v493 = vld [vmem:[%s462 + $0xf0] sm:$0xff]
      %v494 = vld [vmem:[%s462 + $0xf8] sm:$0xff]
      %v495 = vld [vmem:[%s462 + $0x100] sm:$0xff]
      %v496 = vld [vmem:[%s462 + $0x108] sm:$0xff]
      %v497 = vld [vmem:[%s462 + $0x110] sm:$0xff]
      %v498 = vld [vmem:[%s462 + $0x118] sm:$0xff]
      %v499 = vld [vmem:[%s462 + $0x120] sm:$0xff]
      %v500 = vld [vmem:[%s462 + $0x128] sm:$0xff]
      %v501 = vld [vmem:[%s462 + $0x130] sm:$0xff]
      %v502 = vld [vmem:[%s462 + $0x138] sm:$0xff]
      %v503 = vld [vmem:[%s462 + $0x140] sm:$0xff]
      %v504 = vld [vmem:[%s462 + $0x148] sm:$0xff]
      %v505 = vld [vmem:[%s462 + $0x150] sm:$0xff]
      %v506 = vld [vmem:[%s462 + $0x158] sm:$0xff]
      %v507 = vld [vmem:[%s462 + $0x160] sm:$0xff]
      %v508 = vld [vmem:[%s462 + $0x168] sm:$0xff]
      %v509 = vld [vmem:[%s462 + $0x170] sm:$0xff]
      %v510 = vld [vmem:[%s462 + $0x178] sm:$0xff]
      %v511 = vld [vmem:[%s462 + $0x180] sm:$0xff]
      %v512 = vld [vmem:[%s462 + $0x188] sm:$0xff]
      %v513 = vld [vmem:[%s462 + $0x190] sm:$0xff]
      %v514 = vld [vmem:[%s462 + $0x198] sm:$0xff]
      %v515 = vld [vmem:[%s462 + $0x1a0] sm:$0xff]
      %v516 = vld [vmem:[%s462 + $0x1a8] sm:$0xff]
      %v517 = vld [vmem:[%s462 + $0x1b0] sm:$0xff]
      %v518 = vld [vmem:[%s462 + $0x1b8] sm:$0xff]
      %v519 = vld [vmem:[%s462 + $0x1c0] sm:$0xff]
      %v520 = vld [vmem:[%s462 + $0x1c8] sm:$0xff]
      %v521 = vld [vmem:[%s462 + $0x1d0] sm:$0xff]
      %v522 = vld [vmem:[%s462 + $0x1d8] sm:$0xff]
      %v523 = vld [vmem:[%s462 + $0x1e0] sm:$0xff]
      %v524 = vld [vmem:[%s462 + $0x1e8] sm:$0xff]
      %v525 = vld [vmem:[%s462 + $0x1f0] sm:$0xff]
      %v526 = vld [vmem:[%s462 + $0x1f8] sm:$0xff]
      %s527 = scalar_lea.vmem %s2, 512
      %v528 = vld [vmem:[%s527] sm:$0xff]
      %v529 = vld [vmem:[%s527 + $0x8] sm:$0xff]
      %v530 = vld [vmem:[%s527 + $0x10] sm:$0xff]
      %v531 = vld [vmem:[%s527 + $0x18] sm:$0xff]
      %v532 = vld [vmem:[%s527 + $0x20] sm:$0xff]
      %v533 = vld [vmem:[%s527 + $0x28] sm:$0xff]
      %v534 = vld [vmem:[%s527 + $0x30] sm:$0xff]
      %v535 = vld [vmem:[%s527 + $0x38] sm:$0xff]
      %v536 = vld [vmem:[%s527 + $0x40] sm:$0xff]
      %v537 = vld [vmem:[%s527 + $0x48] sm:$0xff]
      %v538 = vld [vmem:[%s527 + $0x50] sm:$0xff]
      %v539 = vld [vmem:[%s527 + $0x58] sm:$0xff]
      %v540 = vld [vmem:[%s527 + $0x60] sm:$0xff]
      %v541 = vld [vmem:[%s527 + $0x68] sm:$0xff]
      %v542 = vld [vmem:[%s527 + $0x70] sm:$0xff]
      %v543 = vld [vmem:[%s527 + $0x78] sm:$0xff]
      %v544 = vld [vmem:[%s527 + $0x80] sm:$0xff]
      %v545 = vld [vmem:[%s527 + $0x88] sm:$0xff]
      %v546 = vld [vmem:[%s527 + $0x90] sm:$0xff]
      %v547 = vld [vmem:[%s527 + $0x98] sm:$0xff]
      %v548 = vld [vmem:[%s527 + $0xa0] sm:$0xff]
      %v549 = vld [vmem:[%s527 + $0xa8] sm:$0xff]
      %v550 = vld [vmem:[%s527 + $0xb0] sm:$0xff]
      %v551 = vld [vmem:[%s527 + $0xb8] sm:$0xff]
      %v552 = vld [vmem:[%s527 + $0xc0] sm:$0xff]
      %v553 = vld [vmem:[%s527 + $0xc8] sm:$0xff]
      %v554 = vld [vmem:[%s527 + $0xd0] sm:$0xff]
      %v555 = vld [vmem:[%s527 + $0xd8] sm:$0xff]
      %v556 = vld [vmem:[%s527 + $0xe0] sm:$0xff]
      %v557 = vld [vmem:[%s527 + $0xe8] sm:$0xff]
      %v558 = vld [vmem:[%s527 + $0xf0] sm:$0xff]
      %v559 = vld [vmem:[%s527 + $0xf8] sm:$0xff]
      %v560 = vld [vmem:[%s527 + $0x100] sm:$0xff]
      %v561 = vld [vmem:[%s527 + $0x108] sm:$0xff]
      %v562 = vld [vmem:[%s527 + $0x110] sm:$0xff]
      %v563 = vld [vmem:[%s527 + $0x118] sm:$0xff]
      %v564 = vld [vmem:[%s527 + $0x120] sm:$0xff]
      %v565 = vld [vmem:[%s527 + $0x128] sm:$0xff]
      %v566 = vld [vmem:[%s527 + $0x130] sm:$0xff]
      %v567 = vld [vmem:[%s527 + $0x138] sm:$0xff]
      %v568 = vld [vmem:[%s527 + $0x140] sm:$0xff]
      %v569 = vld [vmem:[%s527 + $0x148] sm:$0xff]
      %v570 = vld [vmem:[%s527 + $0x150] sm:$0xff]
      %v571 = vld [vmem:[%s527 + $0x158] sm:$0xff]
      %v572 = vld [vmem:[%s527 + $0x160] sm:$0xff]
      %v573 = vld [vmem:[%s527 + $0x168] sm:$0xff]
      %v574 = vld [vmem:[%s527 + $0x170] sm:$0xff]
      %v575 = vld [vmem:[%s527 + $0x178] sm:$0xff]
      %v576 = vld [vmem:[%s527 + $0x180] sm:$0xff]
      %v577 = vld [vmem:[%s527 + $0x188] sm:$0xff]
      %v578 = vld [vmem:[%s527 + $0x190] sm:$0xff]
      %v579 = vld [vmem:[%s527 + $0x198] sm:$0xff]
      %v580 = vld [vmem:[%s527 + $0x1a0] sm:$0xff]
      %v581 = vld [vmem:[%s527 + $0x1a8] sm:$0xff]
      %v582 = vld [vmem:[%s527 + $0x1b0] sm:$0xff]
      %v583 = vld [vmem:[%s527 + $0x1b8] sm:$0xff]
      %v584 = vld [vmem:[%s527 + $0x1c0] sm:$0xff]
      %v585 = vld [vmem:[%s527 + $0x1c8] sm:$0xff]
      %v586 = vld [vmem:[%s527 + $0x1d0] sm:$0xff]
      %v587 = vld [vmem:[%s527 + $0x1d8] sm:$0xff]
      %v588 = vld [vmem:[%s527 + $0x1e0] sm:$0xff]
      %v589 = vld [vmem:[%s527 + $0x1e8] sm:$0xff]
      %v590 = vld [vmem:[%s527 + $0x1f0] sm:$0xff]
      %v591 = vld [vmem:[%s527 + $0x1f8] sm:$0xff]
      %592 = vmatprep.subr.mxu0 %v589
      %593 = vmatpush1.msra.mxu0 %v588
      %594 = vmatprep.subr.mxu0 %v585
      %595 = vmatpush1.msra.mxu0 %v584
      %596 = vmatprep.subr.mxu0 %v581
      %597 = vmatpush1.msra.mxu0 %v580
      %598 = vmatprep.subr.mxu0 %v577
      %599 = vmatpush1.msra.mxu0 %v576
      %600 = vmatprep.subr.mxu0 %v573
      %601 = vmatpush1.msra.mxu0 %v572
      %602 = vmatprep.subr.mxu0 %v569
      %603 = vmatpush1.msra.mxu0 %v568
      %604 = vmatprep.subr.mxu0 %v565
      %605 = vmatpush1.msra.mxu0 %v564
      %606 = vmatprep.subr.mxu0 %v561
      %607 = vmatpush1.msra.mxu0 %v560
      %608 = vmatprep.subr.mxu0 %v557
      %609 = vmatpush1.msra.mxu0 %v556
      %610 = vmatprep.subr.mxu0 %v553
      %611 = vmatpush1.msra.mxu0 %v552
      %612 = vmatprep.subr.mxu0 %v549
      %613 = vmatpush1.msra.mxu0 %v548
      %614 = vmatprep.subr.mxu0 %v545
      %615 = vmatpush1.msra.mxu0 %v544
      %616 = vmatprep.subr.mxu0 %v541
      %617 = vmatpush1.msra.mxu0 %v540
      %618 = vmatprep.subr.mxu0 %v537
      %619 = vmatpush1.msra.mxu0 %v536
      %620 = vmatprep.subr.mxu0 %v533
      %621 = vmatpush1.msra.mxu0 %v532
      %622 = vmatprep.subr.mxu0 %v529
      %623 = vmatpush1.msra.mxu0 %v528
      %624 = vmatprep.subr.mxu0 0.0
      %625 = vmatpush2.msra.mxu0 0.0
      %626 = vmatprep.subr.mxu0 0.0
      %627 = vmatpush2.msra.mxu0 0.0
      %628 = vmatprep.subr.mxu0 0.0
      %629 = vmatpush2.msra.mxu0 0.0
      %630 = vmatprep.subr.mxu0 0.0
      %631 = vmatpush2.msra.mxu0 0.0
      %632 = vmatprep.subr.mxu0 0.0
      %633 = vmatpush2.msra.mxu0 0.0
      %634 = vmatprep.subr.mxu0 0.0
      %635 = vmatpush2.msra.mxu0 0.0
      %636 = vmatprep.subr.mxu0 0.0
      %637 = vmatpush2.msra.mxu0 0.0
      %638 = vmatprep.subr.mxu0 0.0
      %639 = vmatpush2.msra.mxu0 0.0
      %640 = vmatprep.subr.mxu0 0.0
      %641 = vmatpush2.msra.mxu0 0.0
      %642 = vmatprep.subr.mxu0 0.0
      %643 = vmatpush2.msra.mxu0 0.0
      %644 = vmatprep.subr.mxu0 0.0
      %645 = vmatpush2.msra.mxu0 0.0
      %646 = vmatprep.subr.mxu0 0.0
      %647 = vmatpush2.msra.mxu0 0.0
      %648 = vmatprep.subr.mxu0 0.0
      %649 = vmatpush2.msra.mxu0 0.0
      %650 = vmatprep.subr.mxu0 0.0
      %651 = vmatpush2.msra.mxu0 0.0
      %652 = vmatprep.subr.mxu0 0.0
      %653 = vmatpush2.msra.mxu0 0.0
      %654 = vmatprep.subr.mxu0 0.0
      %655 = vmatpush2.msra.mxu0 0.0
      %656 = vmatprep.mubr.f32.mxu0 0.0
      %657 = vmatmul.mubr.f32.gmra.mxu0 %v459
      %v658 = vpop.f32.mrf.mxu0
      %v659 = vadd.f32 0.0, %v658
      %v660 = vpop.f32.mrf.mxu0
      %v661 = vadd.f32 0.0, %v660
      %662 = vdwg.mxu0
      %663 = vmatprep.subr.mxu0 %v591
      %664 = vmatpush1.msra.mxu0 %v590
      %665 = vmatprep.subr.mxu0 %v587
      %666 = vmatpush1.msra.mxu0 %v586
      %667 = vmatprep.subr.mxu0 %v583
      %668 = vmatpush1.msra.mxu0 %v582
      %669 = vmatprep.subr.mxu0 %v579
      %670 = vmatpush1.msra.mxu0 %v578
      %671 = vmatprep.subr.mxu0 %v575
      %672 = vmatpush1.msra.mxu0 %v574
      %673 = vmatprep.subr.mxu0 %v571
      %674 = vmatpush1.msra.mxu0 %v570
      %675 = vmatprep.subr.mxu0 %v567
      %676 = vmatpush1.msra.mxu0 %v566
      %677 = vmatprep.subr.mxu0 %v563
      %678 = vmatpush1.msra.mxu0 %v562
      %679 = vmatprep.subr.mxu0 %v559
      %680 = vmatpush1.msra.mxu0 %v558
      %681 = vmatprep.subr.mxu0 %v555
      %682 = vmatpush1.msra.mxu0 %v554
      %683 = vmatprep.subr.mxu0 %v551
      %684 = vmatpush1.msra.mxu0 %v550
      %685 = vmatprep.subr.mxu0 %v547
      %686 = vmatpush1.msra.mxu0 %v546
      %687 = vmatprep.subr.mxu0 %v543
      %688 = vmatpush1.msra.mxu0 %v542
      %689 = vmatprep.subr.mxu0 %v539
      %690 = vmatpush1.msra.mxu0 %v538
      %691 = vmatprep.subr.mxu0 %v535
      %692 = vmatpush1.msra.mxu0 %v534
      %693 = vmatprep.subr.mxu0 %v531
      %694 = vmatpush1.msra.mxu0 %v530
      %695 = vmatprep.subr.mxu0 0.0
      %696 = vmatpush2.msra.mxu0 0.0
      %697 = vmatprep.subr.mxu0 0.0
      %698 = vmatpush2.msra.mxu0 0.0
      %699 = vmatprep.subr.mxu0 0.0
      %700 = vmatpush2.msra.mxu0 0.0
      %701 = vmatprep.subr.mxu0 0.0
      %702 = vmatpush2.msra.mxu0 0.0
      %703 = vmatprep.subr.mxu0 0.0
      %704 = vmatpush2.msra.mxu0 0.0
      %705 = vmatprep.subr.mxu0 0.0
      %706 = vmatpush2.msra.mxu0 0.0
      %707 = vmatprep.subr.mxu0 0.0
      %708 = vmatpush2.msra.mxu0 0.0
      %709 = vmatprep.subr.mxu0 0.0
      %710 = vmatpush2.msra.mxu0 0.0
      %711 = vmatprep.subr.mxu0 0.0
      %712 = vmatpush2.msra.mxu0 0.0
      %713 = vmatprep.subr.mxu0 0.0
      %714 = vmatpush2.msra.mxu0 0.0
      %715 = vmatprep.subr.mxu0 0.0
      %716 = vmatpush2.msra.mxu0 0.0
      %717 = vmatprep.subr.mxu0 0.0
      %718 = vmatpush2.msra.mxu0 0.0
      %719 = vmatprep.subr.mxu0 0.0
      %720 = vmatpush2.msra.mxu0 0.0
      %721 = vmatprep.subr.mxu0 0.0
      %722 = vmatpush2.msra.mxu0 0.0
      %723 = vmatprep.subr.mxu0 0.0
      %724 = vmatpush2.msra.mxu0 0.0
      %725 = vmatprep.subr.mxu0 0.0
      %726 = vmatpush2.msra.mxu0 0.0
      %727 = vmatprep.mubr.f32.mxu0 0.0
      %728 = vmatmul.mubr.f32.gmra.mxu0 %v459
      %v729 = vpop.f32.mrf.mxu0
      %v730 = vadd.f32 0.0, %v729
      %v731 = vpop.f32.mrf.mxu0
      %v732 = vadd.f32 0.0, %v731
      %733 = vdwg.mxu0
      %734 = vmatprep.subr.mxu0 %v524
      %735 = vmatpush1.msra.mxu0 %v523
      %736 = vmatprep.subr.mxu0 %v520
      %737 = vmatpush1.msra.mxu0 %v519
      %738 = vmatprep.subr.mxu0 %v516
      %739 = vmatpush1.msra.mxu0 %v515
      %740 = vmatprep.subr.mxu0 %v512
      %741 = vmatpush1.msra.mxu0 %v511
      %742 = vmatprep.subr.mxu0 %v508
      %743 = vmatpush1.msra.mxu0 %v507
      %744 = vmatprep.subr.mxu0 %v504
      %745 = vmatpush1.msra.mxu0 %v503
      %746 = vmatprep.subr.mxu0 %v500
      %747 = vmatpush1.msra.mxu0 %v499
      %748 = vmatprep.subr.mxu0 %v496
      %749 = vmatpush1.msra.mxu0 %v495
      %750 = vmatprep.subr.mxu0 %v492
      %751 = vmatpush1.msra.mxu0 %v491
      %752 = vmatprep.subr.mxu0 %v488
      %753 = vmatpush1.msra.mxu0 %v487
      %754 = vmatprep.subr.mxu0 %v484
      %755 = vmatpush1.msra.mxu0 %v483
      %756 = vmatprep.subr.mxu0 %v480
      %757 = vmatpush1.msra.mxu0 %v479
      %758 = vmatprep.subr.mxu0 %v476
      %759 = vmatpush1.msra.mxu0 %v475
      %760 = vmatprep.subr.mxu0 %v472
      %761 = vmatpush1.msra.mxu0 %v471
      %762 = vmatprep.subr.mxu0 %v468
      %763 = vmatpush1.msra.mxu0 %v467
      %764 = vmatprep.subr.mxu0 %v464
      %765 = vmatpush1.msra.mxu0 %v463
      %766 = vmatprep.subr.mxu0 0.0
      %767 = vmatpush2.msra.mxu0 0.0
      %768 = vmatprep.subr.mxu0 0.0
      %769 = vmatpush2.msra.mxu0 0.0
      %770 = vmatprep.subr.mxu0 0.0
      %771 = vmatpush2.msra.mxu0 0.0
      %772 = vmatprep.subr.mxu0 0.0
      %773 = vmatpush2.msra.mxu0 0.0
      %774 = vmatprep.subr.mxu0 0.0
      %775 = vmatpush2.msra.mxu0 0.0
      %776 = vmatprep.subr.mxu0 0.0
      %777 = vmatpush2.msra.mxu0 0.0
      %778 = vmatprep.subr.mxu0 0.0
      %779 = vmatpush2.msra.mxu0 0.0
      %780 = vmatprep.subr.mxu0 0.0
      %781 = vmatpush2.msra.mxu0 0.0
      %782 = vmatprep.subr.mxu0 0.0
      %783 = vmatpush2.msra.mxu0 0.0
      %784 = vmatprep.subr.mxu0 0.0
      %785 = vmatpush2.msra.mxu0 0.0
      %786 = vmatprep.subr.mxu0 0.0
      %787 = vmatpush2.msra.mxu0 0.0
      %788 = vmatprep.subr.mxu0 0.0
      %789 = vmatpush2.msra.mxu0 0.0
      %790 = vmatprep.subr.mxu0 0.0
      %791 = vmatpush2.msra.mxu0 0.0
      %792 = vmatprep.subr.mxu0 0.0
      %793 = vmatpush2.msra.mxu0 0.0
      %794 = vmatprep.subr.mxu0 0.0
      %795 = vmatpush2.msra.mxu0 0.0
      %796 = vmatprep.subr.mxu0 0.0
      %797 = vmatpush2.msra.mxu0 0.0
      %798 = vmatprep.mubr.f32.mxu0 0.0
      %799 = vmatmul.mubr.f32.gmra.mxu0 %v455
      %v800 = vpop.f32.mrf.mxu0
      %v801 = vadd.f32 %v659, %v800
      %v802 = vpop.f32.mrf.mxu0
      %v803 = vadd.f32 %v661, %v802
      %804 = vdwg.mxu0
      %805 = vmatprep.subr.mxu0 %v526
      %806 = vmatpush1.msra.mxu0 %v525
      %807 = vmatprep.subr.mxu0 %v522
      %808 = vmatpush1.msra.mxu0 %v521
      %809 = vmatprep.subr.mxu0 %v518
      %810 = vmatpush1.msra.mxu0 %v517
      %811 = vmatprep.subr.mxu0 %v514
      %812 = vmatpush1.msra.mxu0 %v513
      %813 = vmatprep.subr.mxu0 %v510
      %814 = vmatpush1.msra.mxu0 %v509
      %815 = vmatprep.subr.mxu0 %v506
      %816 = vmatpush1.msra.mxu0 %v505
      %817 = vmatprep.subr.mxu0 %v502
      %818 = vmatpush1.msra.mxu0 %v501
      %819 = vmatprep.subr.mxu0 %v498
      %820 = vmatpush1.msra.mxu0 %v497
      %821 = vmatprep.subr.mxu0 %v494
      %822 = vmatpush1.msra.mxu0 %v493
      %823 = vmatprep.subr.mxu0 %v490
      %824 = vmatpush1.msra.mxu0 %v489
      %825 = vmatprep.subr.mxu0 %v486
      %826 = vmatpush1.msra.mxu0 %v485
      %827 = vmatprep.subr.mxu0 %v482
      %828 = vmatpush1.msra.mxu0 %v481
      %829 = vmatprep.subr.mxu0 %v478
      %830 = vmatpush1.msra.mxu0 %v477
      %831 = vmatprep.subr.mxu0 %v474
      %832 = vmatpush1.msra.mxu0 %v473
      %833 = vmatprep.subr.mxu0 %v470
      %834 = vmatpush1.msra.mxu0 %v469
      %835 = vmatprep.subr.mxu0 %v466
      %836 = vmatpush1.msra.mxu0 %v465
      %837 = vmatprep.subr.mxu0 0.0
      %838 = vmatpush2.msra.mxu0 0.0
      %839 = vmatprep.subr.mxu0 0.0
      %840 = vmatpush2.msra.mxu0 0.0
      %841 = vmatprep.subr.mxu0 0.0
      %842 = vmatpush2.msra.mxu0 0.0
      %843 = vmatprep.subr.mxu0 0.0
      %844 = vmatpush2.msra.mxu0 0.0
      %845 = vmatprep.subr.mxu0 0.0
      %846 = vmatpush2.msra.mxu0 0.0
      %847 = vmatprep.subr.mxu0 0.0
      %848 = vmatpush2.msra.mxu0 0.0
      %849 = vmatprep.subr.mxu0 0.0
      %850 = vmatpush2.msra.mxu0 0.0
      %851 = vmatprep.subr.mxu0 0.0
      %852 = vmatpush2.msra.mxu0 0.0
      %853 = vmatprep.subr.mxu0 0.0
      %854 = vmatpush2.msra.mxu0 0.0
      %855 = vmatprep.subr.mxu0 0.0
      %856 = vmatpush2.msra.mxu0 0.0
      %857 = vmatprep.subr.mxu0 0.0
      %858 = vmatpush2.msra.mxu0 0.0
      %859 = vmatprep.subr.mxu0 0.0
      %860 = vmatpush2.msra.mxu0 0.0
      %861 = vmatprep.subr.mxu0 0.0
      %862 = vmatpush2.msra.mxu0 0.0
      %863 = vmatprep.subr.mxu0 0.0
      %864 = vmatpush2.msra.mxu0 0.0
      %865 = vmatprep.subr.mxu0 0.0
      %866 = vmatpush2.msra.mxu0 0.0
      %867 = vmatprep.subr.mxu0 0.0
      %868 = vmatpush2.msra.mxu0 0.0
      %869 = vmatprep.mubr.f32.mxu0 0.0
      %870 = vmatmul.mubr.f32.gmra.mxu0 %v455
      %v871 = vpop.f32.mrf.mxu0
      %v872 = vadd.f32 %v730, %v871
      %v873 = vpop.f32.mrf.mxu0
      %v874 = vadd.f32 %v732, %v873
      %875 = vdwg.mxu0
      %s876 = scalar_lea.vmem %s3, 4
      %v877 = vld [vmem:[%s876] sm:$0xf]
      %v879 = vlaneseq
      %v880 = vshrl.u32 %v879, 7
      %v881 = vsub.s32 0, %v880
      %v882 = vrot.slane %v877, %v881
      %v883 = vlaneseq
      %v884 = vshrl.u32 %v883, 7
      %v885 = vsub.s32 1, %v884
      %v886 = vrot.slane %v877, %v885
      %v887 = vlaneseq
      %v888 = vshrl.u32 %v887, 7
      %v889 = vsub.s32 2, %v888
      %v890 = vrot.slane %v877, %v889
      %v891 = vlaneseq
      %v892 = vshrl.u32 %v891, 7
      %v893 = vsub.s32 3, %v892
      %v894 = vrot.slane %v877, %v893
      %v899 = vadd.f32 %v801, %v882
      %v900 = vadd.f32 %v803, %v886
      %v901 = vadd.f32 %v872, %v890
      %v902 = vadd.f32 %v874, %v894
      %v903 = vxor.u32 %v899, 2147483648
      %v904 = vmul.f32 %v903, 1.442695
      %v905 = vpow.pop %v904
      %v906 = vadd.f32 %v905, 1.0
      %v907 = vrcp.pop %v906
      %v908 = vmul.f32 1.0, %v907
      %v909 = vxor.u32 %v900, 2147483648
      %v910 = vmul.f32 %v909, 1.442695
      %v911 = vpow.pop %v910
      %v912 = vadd.f32 %v911, 1.0
      %v913 = vrcp.pop %v912
      %v914 = vmul.f32 1.0, %v913
      %v915 = vtanh.pop %v901
      %v916 = vxor.u32 %v902, 2147483648
      %v917 = vmul.f32 %v916, 1.442695
      %v918 = vpow.pop %v917
      %v919 = vadd.f32 %v918, 1.0
      %v920 = vrcp.pop %v919
      %v921 = vmul.f32 1.0, %v920
      %v922 = vmul.f32 %v914, %v461
      %v923 = vmul.f32 %v908, %v915
      %v924 = vadd.f32 %v922, %v923
      %v925 = vtanh.pop %v924
      %v926 = vmul.f32 %v921, %v925
      %927 = vst [vmem:[%s458] sm:$0xff] %v926
      %928 = vst [vmem:[%s460] sm:$0xff] %v924
      // Predicated region
      $region41: #{seq2seq_forward.4} parent=35 // pred_check
        %p929 = pneg %p119
      $region42: #{seq2seq_forward.4} parent=35 // pred_check_branch
        %931 = sbr.rel (%p929) target = $region44
      $region43: #{seq2seq_forward.4} parent=35 // pred_region
        _
      $region44: #{seq2seq_forward.4} parent=35 // pred_fallthru
        _
      // Predicated region
      $region45: #{seq2seq_forward.4} parent=35 // pred_check
        %p932 = pneg %p140
      $region46: #{seq2seq_forward.4} parent=35 // pred_check_branch
        %934 = sbr.rel (%p932) target = $region48
      $region47: #{seq2seq_forward.4} parent=35 // pred_region
        _
      $region48: #{seq2seq_forward.4} parent=35 // pred_fallthru
        _
      // Predicated region
      $region49: #{seq2seq_forward.4} parent=35 // pred_check
        %p935 = pneg %p119
      $region50: #{seq2seq_forward.4} parent=35 // pred_check_branch
        %937 = sbr.rel (%p935) target = $region52
      $region51: #{seq2seq_forward.4} parent=35 // pred_region
        _
      $region52: #{seq2seq_forward.4} parent=35 // pred_fallthru
        _
      // Predicated region
      $region53: #{seq2seq_forward.4} parent=35 // pred_check
        %p938 = pneg %p140
      $region54: #{seq2seq_forward.4} parent=35 // pred_check_branch
        %940 = sbr.rel (%p938) target = $region56
      $region55: #{seq2seq_forward.4} parent=35 // pred_region
        _
      $region56: #{seq2seq_forward.4} parent=35 // pred_fallthru
        _
    $region36: #{seq2seq_forward.4} parent=5 // pred_fallthru
      _
    %p941 = scmp.le.s32.totalorder 2, %s12
    // Predicated region
    $region57: #{seq2seq_forward.4} parent=5 // pred_check
      %p942 = pneg %p941
    $region58: #{seq2seq_forward.4} parent=5 // pred_check_branch
      %944 = sbr.rel (%p942) target = $region60
    $region59: #{seq2seq_forward.4} parent=5 // pred_region
      %s945 = ssub.s32 %s12, 2
    $region60: #{seq2seq_forward.4} parent=5 // pred_fallthru
      _
  $region6: #{seq2seq_forward.4} parent=0 // loop_footer
    %s16 = sadd.s32 1, %s12
  $region7: #{seq2seq_forward.4} parent=0 // loop_footer_branch
    %11 = sbr.rel target = $region3
  $region8: #{seq2seq_forward.4} parent=0 // loop_exit
    _

// kernel: seq2seq_forward.5
$region0: #{seq2seq_forward.5}
  #allocation0 [shape = 'u32[]', space=smem, size = 0x4, offset = 0x4, fixed_abs, tag = 'smem constant byte address 0x4 - core index']
  #allocation1 [shape = 'u32[144,128]{1,0:T(1,128)}', space=vmem, size = 0x12000, scoped, tag = 'internal scratch']
  #allocation2 [shape = 'f32[2,8,128]{2,1,0:T(8,128)}', space=vmem, size = 0x2000, scoped, tag = 'scratch operand']
  #allocation3 [shape = 'f32[2,8,128]{2,1,0:T(8,128)}', space=vmem, size = 0x2000, scoped, tag = 'scratch operand']
  #allocation4 [shape = 'f32[8,128]{1,0:T(8,128)}', space=vmem, size = 0x1000, scoped, tag = 'scratch operand']
  #allocation5 [shape = 's32[1]{0}', space=sflag, size = 0x4, scoped, tag = 'scoped memory for seq2seq_forward.5']
  #allocation6 [shape = 'u8[512]{0}', space=smem, size = 0x200, scoped, tag = 'prefetched SMEM operand 0']
  %s0 = inlined_call_operand.vmem [shape: s32[7], index: 0, kind: input, shape index: {}]
  %s1 = inlined_call_operand.vmem [shape: f32[7,8,128], index: 1, kind: input, shape index: {}]
  %s2 = inlined_call_operand.hbm [shape: f32[128,512], index: 2, kind: input, shape index: {}]
  %s3 = inlined_call_operand.vmem [shape: f32[2,128,512], index: 3, kind: input, shape index: {}]
  %s4 = inlined_call_operand.vmem [shape: f32[2,128,512], index: 4, kind: input, shape index: {}]
  %s5 = inlined_call_operand.vmem [shape: f32[2,1,512], index: 5, kind: input, shape index: {}]
  %s6 = inlined_call_operand.vmem [shape: f32[2,8,128], index: 6, kind: input, shape index: {}]
  %s7 = inlined_call_operand.vmem [shape: f32[2,8,128], index: 7, kind: input, shape index: {}]
  %s8 = inlined_call_operand.vmem [shape: f32[128,128], index: 8, kind: input, shape index: {}]
  %s9 = inlined_call_operand.vmem [shape: f32[1,128], index: 9, kind: input, shape index: {}]
  %s10 = inlined_call_operand.vmem [shape: f32[7,8,128], index: 10, kind: output, shape index: {}]
  %s11 = sld [smem:[#allocation0]]
  $region77: #{seq2seq_forward.5} parent=0
    _
  %s13 = ssub.s32 1, %s11
  %s14 = scalar_select 0, %s13, %s11
  %s15 = sshll.u32 %s0, 4
  %s16 = int_to_ptr.vmem [resolvable:$true] %s15
  %18 = dma.vmem_to_smem %s16, 16, [#allocation6], [#allocation5]
  %19 = dma.done [#allocation5], 16
  %20 = sfence
  $region1: #{seq2seq_forward.5} parent=0
    #allocation7 [shape = 'u8[262144]{0}', space=vmem, size = 0x40000, scoped, tag = 'input window, operand 2, single buffered']
    #allocation8 [shape = 's32[2]{0}', space=sflag, size = 0x8, scoped, tag = 'scoped memory for seq2seq_forward.5']
    %21 = vsyncpa [#allocation8], 0
    loop: start=0, step=1, limit=9
    $region2: #{seq2seq_forward.5} parent=1 // loop_pre_header
      _
    $region3: #{seq2seq_forward.5} parent=1 // loop_header
      %s23 = sphi 0, %s27
      %p24 = scmp.ge.s32.totalorder %s23, 9
      %s33 = sphi 0, %s35
      %s36 = sphi 0, %s33
      %s37 = sphi 0, %s36
      %s53 = sphi 0, %s37
      %s57 = sphi 0, %s57
      %s59 = sphi 0, %s57
      %s60 = sphi 0, %s59
      %s74 = sphi 0, %s60
      %s78 = sphi 0, %s78
      %s80 = sphi 0, %s78
      %s81 = sphi 0, %s80
      %s95 = sphi 0, %s81
      %s99 = sphi 0, %s99
      %s101 = sphi 0, %s99
      %s102 = sphi 0, %s101
      %s116 = sphi 0, %s102
      %s120 = sphi 0, %s120
      %s122 = sphi 0, %s120
      %s123 = sphi 0, %s122
      %s137 = sphi 0, %s123
      %s141 = sphi 0, %s141
      %s143 = sphi 0, %s141
      %s144 = sphi 0, %s143
      %s158 = sphi 0, %s144
      %s162 = sphi 0, %s162
      %s164 = sphi 0, %s162
      %s165 = sphi 0, %s164
      %s179 = sphi 0, %s165
      %s183 = sphi 0, %s183
      %s185 = sphi 0, %s183
      %s186 = sphi 0, %s185
      %s200 = sphi 0, %s186
      %s204 = sphi 0, %s204
      %s206 = sphi 0, %s204
      %s207 = sphi 0, %s206
      %s221 = sphi 0, %s207
      %s227 = sphi 0, %s229
      %s230 = sphi 0, %s227
      %s231 = sphi 0, %s230
      %s247 = sphi 0, %s231
    $region4: #{seq2seq_forward.5} parent=1 // loop_header_branch
      %26 = sbr.rel (%p24) target = $region8
    $region5: #{seq2seq_forward.5} parent=1 // loop_body
      %s28 = ssub.s32 %s23, 1
      %s29 = ssub.s32 %s23, 2
      %s30 = sadd.s32 %s23, 1
      %s31 = ssub.s32 %s23, %s30
      %p32 = scmp.eq.s32.totalorder %s31, 0
      %s34 = sadd.s32 %s33, 1
      %s35 = scalar_select %p32, %s33, %s34
      %p38 = pneg %p32
      %p39 = scmp.eq.s32.totalorder %s23, 6
      %p40 = por %p38, %p39
      %p41 = scmp.ne.s32.totalorder %s33, %s36
      %p42 = scmp.eq.s32.totalorder %s23, 0
      %p43 = por %p41, %p42
      %p44 = scmp.ne.s32.totalorder %s33, %s36
      %p45 = scmp.eq.s32.totalorder %s28, 6
      %p46 = por %p44, %p45
      %p47 = scmp.ne.s32.totalorder %s36, %s37
      %p48 = scmp.eq.s32.totalorder %s28, 0
      %p49 = por %p47, %p48
      %p50 = scmp.ne.s32.totalorder %s36, %s37
      %p51 = scmp.eq.s32.totalorder %s29, 6
      %p52 = por %p50, %p51
      %p54 = scmp.ne.s32.totalorder %s37, %s53
      %p55 = scmp.eq.s32.totalorder %s29, 0
      %p56 = por %p54, %p55
      %s58 = sadd.s32 %s57, 1
      %p61 = scmp.eq.s32.totalorder %s23, 6
      %p62 = scmp.ne.s32.totalorder %s57, %s59
      %p63 = scmp.eq.s32.totalorder %s23, 0
      %p64 = por %p62, %p63
      %p65 = scmp.ne.s32.totalorder %s57, %s59
      %p66 = scmp.eq.s32.totalorder %s28, 6
      %p67 = por %p65, %p66
      %p68 = scmp.ne.s32.totalorder %s59, %s60
      %p69 = scmp.eq.s32.totalorder %s28, 0
      %p70 = por %p68, %p69
      %p71 = scmp.ne.s32.totalorder %s59, %s60
      %p72 = scmp.eq.s32.totalorder %s29, 6
      %p73 = por %p71, %p72
      %p75 = scmp.ne.s32.totalorder %s60, %s74
      %p76 = scmp.eq.s32.totalorder %s29, 0
      %p77 = por %p75, %p76
      %s79 = sadd.s32 %s78, 1
      %p82 = scmp.eq.s32.totalorder %s23, 6
      %p83 = scmp.ne.s32.totalorder %s78, %s80
      %p84 = scmp.eq.s32.totalorder %s23, 0
      %p85 = por %p83, %p84
      %p86 = scmp.ne.s32.totalorder %s78, %s80
      %p87 = scmp.eq.s32.totalorder %s28, 6
      %p88 = por %p86, %p87
      %p89 = scmp.ne.s32.totalorder %s80, %s81
      %p90 = scmp.eq.s32.totalorder %s28, 0
      %p91 = por %p89, %p90
      %p92 = scmp.ne.s32.totalorder %s80, %s81
      %p93 = scmp.eq.s32.totalorder %s29, 6
      %p94 = por %p92, %p93
      %p96 = scmp.ne.s32.totalorder %s81, %s95
      %p97 = scmp.eq.s32.totalorder %s29, 0
      %p98 = por %p96, %p97
      %s100 = sadd.s32 %s99, 1
      %p103 = scmp.eq.s32.totalorder %s23, 6
      %p104 = scmp.ne.s32.totalorder %s99, %s101
      %p105 = scmp.eq.s32.totalorder %s23, 0
      %p106 = por %p104, %p105
      %p107 = scmp.ne.s32.totalorder %s99, %s101
      %p108 = scmp.eq.s32.totalorder %s28, 6
      %p109 = por %p107, %p108
      %p110 = scmp.ne.s32.totalorder %s101, %s102
      %p111 = scmp.eq.s32.totalorder %s28, 0
      %p112 = por %p110, %p111
      %p113 = scmp.ne.s32.totalorder %s101, %s102
      %p114 = scmp.eq.s32.totalorder %s29, 6
      %p115 = por %p113, %p114
      %p117 = scmp.ne.s32.totalorder %s102, %s116
      %p118 = scmp.eq.s32.totalorder %s29, 0
      %p119 = por %p117, %p118
      %s121 = sadd.s32 %s120, 1
      %p124 = scmp.eq.s32.totalorder %s23, 6
      %p125 = scmp.ne.s32.totalorder %s120, %s122
      %p126 = scmp.eq.s32.totalorder %s23, 0
      %p127 = por %p125, %p126
      %p128 = scmp.ne.s32.totalorder %s120, %s122
      %p129 = scmp.eq.s32.totalorder %s28, 6
      %p130 = por %p128, %p129
      %p131 = scmp.ne.s32.totalorder %s122, %s123
      %p132 = scmp.eq.s32.totalorder %s28, 0
      %p133 = por %p131, %p132
      %p134 = scmp.ne.s32.totalorder %s122, %s123
      %p135 = scmp.eq.s32.totalorder %s29, 6
      %p136 = por %p134, %p135
      %p138 = scmp.ne.s32.totalorder %s123, %s137
      %p139 = scmp.eq.s32.totalorder %s29, 0
      %p140 = por %p138, %p139
      %s142 = sadd.s32 %s141, 1
      %p145 = scmp.eq.s32.totalorder %s23, 6
      %p146 = scmp.ne.s32.totalorder %s141, %s143
      %p147 = scmp.eq.s32.totalorder %s23, 0
      %p148 = por %p146, %p147
      %p149 = scmp.ne.s32.totalorder %s141, %s143
      %p150 = scmp.eq.s32.totalorder %s28, 6
      %p151 = por %p149, %p150
      %p152 = scmp.ne.s32.totalorder %s143, %s144
      %p153 = scmp.eq.s32.totalorder %s28, 0
      %p154 = por %p152, %p153
      %p155 = scmp.ne.s32.totalorder %s143, %s144
      %p156 = scmp.eq.s32.totalorder %s29, 6
      %p157 = por %p155, %p156
      %p159 = scmp.ne.s32.totalorder %s144, %s158
      %p160 = scmp.eq.s32.totalorder %s29, 0
      %p161 = por %p159, %p160
      %s163 = sadd.s32 %s162, 1
      %p166 = scmp.eq.s32.totalorder %s23, 6
      %p167 = scmp.ne.s32.totalorder %s162, %s164
      %p168 = scmp.eq.s32.totalorder %s23, 0
      %p169 = por %p167, %p168
      %p170 = scmp.ne.s32.totalorder %s162, %s164
      %p171 = scmp.eq.s32.totalorder %s28, 6
      %p172 = por %p170, %p171
      %p173 = scmp.ne.s32.totalorder %s164, %s165
      %p174 = scmp.eq.s32.totalorder %s28, 0
      %p175 = por %p173, %p174
      %p176 = scmp.ne.s32.totalorder %s164, %s165
      %p177 = scmp.eq.s32.totalorder %s29, 6
      %p178 = por %p176, %p177
      %p180 = scmp.ne.s32.totalorder %s165, %s179
      %p181 = scmp.eq.s32.totalorder %s29, 0
      %p182 = por %p180, %p181
      %s184 = sadd.s32 %s183, 1
      %p187 = scmp.eq.s32.totalorder %s23, 6
      %p188 = scmp.ne.s32.totalorder %s183, %s185
      %p189 = scmp.eq.s32.totalorder %s23, 0
      %p190 = por %p188, %p189
      %p191 = scmp.ne.s32.totalorder %s183, %s185
      %p192 = scmp.eq.s32.totalorder %s28, 6
      %p193 = por %p191, %p192
      %p194 = scmp.ne.s32.totalorder %s185, %s186
      %p195 = scmp.eq.s32.totalorder %s28, 0
      %p196 = por %p194, %p195
      %p197 = scmp.ne.s32.totalorder %s185, %s186
      %p198 = scmp.eq.s32.totalorder %s29, 6
      %p199 = por %p197, %p198
      %p201 = scmp.ne.s32.totalorder %s186, %s200
      %p202 = scmp.eq.s32.totalorder %s29, 0
      %p203 = por %p201, %p202
      %s205 = sadd.s32 %s204, 1
      %p208 = scmp.eq.s32.totalorder %s23, 6
      %p209 = scmp.ne.s32.totalorder %s204, %s206
      %p210 = scmp.eq.s32.totalorder %s23, 0
      %p211 = por %p209, %p210
      %p212 = scmp.ne.s32.totalorder %s204, %s206
      %p213 = scmp.eq.s32.totalorder %s28, 6
      %p214 = por %p212, %p213
      %p215 = scmp.ne.s32.totalorder %s206, %s207
      %p216 = scmp.eq.s32.totalorder %s28, 0
      %p217 = por %p215, %p216
      %p218 = scmp.ne.s32.totalorder %s206, %s207
      %p219 = scmp.eq.s32.totalorder %s29, 6
      %p220 = por %p218, %p219
      %p222 = scmp.ne.s32.totalorder %s207, %s221
      %p223 = scmp.eq.s32.totalorder %s29, 0
      %p224 = por %p222, %p223
      %s225 = ssub.s32 %s23, %s30
      %p226 = scmp.eq.s32.totalorder %s225, 0
      %s228 = sadd.s32 %s227, 1
      %s229 = scalar_select %p226, %s227, %s228
      %p232 = pneg %p226
      %p233 = scmp.eq.s32.totalorder %s23, 6
      %p234 = por %p232, %p233
      %p235 = scmp.ne.s32.totalorder %s227, %s230
      %p236 = scmp.eq.s32.totalorder %s23, 0
      %p237 = por %p235, %p236
      %p238 = scmp.ne.s32.totalorder %s227, %s230
      %p239 = scmp.eq.s32.totalorder %s28, 6
      %p240 = por %p238, %p239
      %p241 = scmp.ne.s32.totalorder %s230, %s231
      %p242 = scmp.eq.s32.totalorder %s28, 0
      %p243 = por %p241, %p242
      %p244 = scmp.ne.s32.totalorder %s230, %s231
      %p245 = scmp.eq.s32.totalorder %s29, 6
      %p246 = por %p244, %p245
      %p248 = scmp.ne.s32.totalorder %s231, %s247
      %p249 = scmp.eq.s32.totalorder %s29, 0
      %p250 = por %p248, %p249
      %p251 = scmp.le.s32.totalorder 1, %s23
      %p252 = scmp.lt.s32.totalorder %s23, 8
      %p253 = pnand %p251, %p252
      %p254 = pneg %p253
      // Predicated region
      $region9: #{seq2seq_forward.5} parent=5 // pred_check
        _
      $region10: #{seq2seq_forward.5} parent=5 // pred_check_branch
        %256 = sbr.rel (%p253) target = $region12
      $region11: #{seq2seq_forward.5} parent=5 // pred_region
        %s257 = ssub.s32 %s23, 1
        // Predicated region
        $region13: #{seq2seq_forward.5} parent=11 // pred_check
          %p258 = pneg %p70
        $region14: #{seq2seq_forward.5} parent=11 // pred_check_branch
          %260 = sbr.rel (%p258) target = $region16
        $region15: #{seq2seq_forward.5} parent=11 // pred_region
          %s262 = ssub.s32 8192, 8192
          %263 = vsyncadd [#allocation8], %s262
          %s264 = sshll.u32 [#allocation7], 4
          %s265 = int_to_ptr.vmem [resolvable:$true] %s264
          %270 = dma.hbm_to_vmem [thread:$0]  %s2, 8192, %s265, [#allocation8], 512, 512, 32
        $region16: #{seq2seq_forward.5} parent=11 // pred_fallthru
          _
        // Predicated region
        $region17: #{seq2seq_forward.5} parent=11 // pred_check
          %p271 = pneg %p91
        $region18: #{seq2seq_forward.5} parent=11 // pred_check_branch
          %273 = sbr.rel (%p271) target = $region20
        $region19: #{seq2seq_forward.5} parent=11 // pred_region
          _
        $region20: #{seq2seq_forward.5} parent=11 // pred_fallthru
          _
        // Predicated region
        $region21: #{seq2seq_forward.5} parent=11 // pred_check
          %p274 = pneg %p112
        $region22: #{seq2seq_forward.5} parent=11 // pred_check_branch
          %276 = sbr.rel (%p274) target = $region24
        $region23: #{seq2seq_forward.5} parent=11 // pred_region
          _
        $region24: #{seq2seq_forward.5} parent=11 // pred_fallthru
          _
        // Predicated region
        $region25: #{seq2seq_forward.5} parent=11 // pred_check
          %p277 = pneg %p133
        $region26: #{seq2seq_forward.5} parent=11 // pred_check_branch
          %279 = sbr.rel (%p277) target = $region28
        $region27: #{seq2seq_forward.5} parent=11 // pred_region
          _
        $region28: #{seq2seq_forward.5} parent=11 // pred_fallthru
          _
        // Predicated region
        $region29: #{seq2seq_forward.5} parent=11 // pred_check
          %p280 = pneg %p154
        $region30: #{seq2seq_forward.5} parent=11 // pred_check_branch
          %282 = sbr.rel (%p280) target = $region32
        $region31: #{seq2seq_forward.5} parent=11 // pred_region
          _
        $region32: #{seq2seq_forward.5} parent=11 // pred_fallthru
          _
        // Predicated region
        $region33: #{seq2seq_forward.5} parent=11 // pred_check
          %p283 = pneg %p175
        $region34: #{seq2seq_forward.5} parent=11 // pred_check_branch
          %285 = sbr.rel (%p283) target = $region36
        $region35: #{seq2seq_forward.5} parent=11 // pred_region
          _
        $region36: #{seq2seq_forward.5} parent=11 // pred_fallthru
          _
        // Predicated region
        $region37: #{seq2seq_forward.5} parent=11 // pred_check
          %p286 = pneg %p196
        $region38: #{seq2seq_forward.5} parent=11 // pred_check_branch
          %288 = sbr.rel (%p286) target = $region40
        $region39: #{seq2seq_forward.5} parent=11 // pred_region
          _
        $region40: #{seq2seq_forward.5} parent=11 // pred_fallthru
          _
        // Predicated region
        $region41: #{seq2seq_forward.5} parent=11 // pred_check
          %p289 = pneg %p217
        $region42: #{seq2seq_forward.5} parent=11 // pred_check_branch
          %291 = sbr.rel (%p289) target = $region44
        $region43: #{seq2seq_forward.5} parent=11 // pred_region
          _
        $region44: #{seq2seq_forward.5} parent=11 // pred_fallthru
          _
      $region12: #{seq2seq_forward.5} parent=5 // pred_fallthru
        _
      %p292 = scmp.lt.s32.totalorder %s23, 7
      // Predicated region
      $region45: #{seq2seq_forward.5} parent=5 // pred_check
        %p293 = pneg %p292
      $region46: #{seq2seq_forward.5} parent=5 // pred_check_branch
        %295 = sbr.rel (%p293) target = $region48
      $region47: #{seq2seq_forward.5} parent=5 // pred_region
        // Predicated region
        $region49: #{seq2seq_forward.5} parent=47 // pred_check
          %p296 = pneg %p43
        $region50: #{seq2seq_forward.5} parent=47 // pred_check_branch
          %298 = sbr.rel (%p296) target = $region52
        $region51: #{seq2seq_forward.5} parent=47 // pred_region
          %p299 = scmp.lt.s32.totalorder %s23, 6
          %s300 = scalar_select %p299, %s23, 6
          %s301 = smul.addr %s300, 8
          %s302 = scalar_lea.vmem %s1, %s301
        $region52: #{seq2seq_forward.5} parent=47 // pred_fallthru
          _
      $region48: #{seq2seq_forward.5} parent=5 // pred_fallthru
        _
      %p303 = scmp.le.s32.totalorder 1, %s23
      %p304 = scmp.lt.s32.totalorder %s23, 8
      %p305 = pnand %p303, %p304
      %p306 = pneg %p305
      // Predicated region
      $region53: #{seq2seq_forward.5} parent=5 // pred_check
        _
      $region54: #{seq2seq_forward.5} parent=5 // pred_check_branch
        %308 = sbr.rel (%p305) target = $region56
      $region55: #{seq2seq_forward.5} parent=5 // pred_region
        %s309 = ssub.s32 %s23, 1
        // Predicated region
        $region57: #{seq2seq_forward.5} parent=55 // pred_check
          %p310 = pneg %p70
        $region58: #{seq2seq_forward.5} parent=55 // pred_check_branch
          %312 = sbr.rel (%p310) target = $region60
        $region59: #{seq2seq_forward.5} parent=55 // pred_region
          %313 = dma.done [#allocation8], 8192
        $region60: #{seq2seq_forward.5} parent=55 // pred_fallthru
          _
        %p314 = scmp.lt.s32.totalorder %s28, 6
        %s315 = scalar_select %p314, %s28, 6
        %s316 = smul.addr %s315, 8
        %s317 = scalar_lea.vmem %s1, %s316
        %p318 = pneg %p49
        %p319 = pneg %p46
        %p320 = pneg %p70
        %p321 = pneg %p67
        %p322 = pneg %p91
        %p323 = pneg %p88
        %p324 = pneg %p112
        %p325 = pneg %p109
        %p326 = pneg %p133
        %p327 = pneg %p130
        %p328 = pneg %p154
        %p329 = pneg %p151
        %p330 = pneg %p175
        %p331 = pneg %p172
        %p332 = pneg %p196
        %p333 = pneg %p193
        %p334 = pneg %p217
        %p335 = pneg %p214
        %p336 = pneg %p243
        %p337 = pneg %p240
        %p338 = scmp.lt.s32.totalorder %s28, 6
        %s339 = scalar_select %p338, %s28, 6
        %s340 = smul.addr %s339, 8
        %s341 = scalar_lea.vmem %s10, %s340
        %p342 = scmp.lt.s32.totalorder %s28, 6
        %s343 = scalar_select %p342, %s28, 6
        %s344 = smul.addr %s343, 8
        %s345 = scalar_lea.vmem %s1, %s344
        %p346 = scmp.lt.s32.totalorder %s28, 6
        %s347 = scalar_select %p346, %s28, 6
        %s348 = smul.addr %s347, 8
        %s349 = scalar_lea.vmem %s10, %s348
        %p350 = scmp.eq.s32.totalorder %s28, 0
        // Predicated region
        $region61: #{seq2seq_forward.5} parent=55 // pred_check
          %p351 = pneg %p350
        $region62: #{seq2seq_forward.5} parent=55 // pred_check_branch
          %353 = sbr.rel (%p351) target = $region64
        $region63: #{seq2seq_forward.5} parent=55 // pred_region
          %v354 = vld [vmem:[%s6] sm:$0xff]
          %v355 = vld [vmem:[%s6 + $0x8] sm:$0xff]
          %356 = vst [vmem:[#allocation2] sm:$0xff] %v354
          %357 = vst [vmem:[#allocation2 + $0x8] sm:$0xff] %v355
          %v358 = vld [vmem:[%s7] sm:$0xff]
          %v359 = vld [vmem:[%s7 + $0x8] sm:$0xff]
          %360 = vst [vmem:[#allocation3] sm:$0xff] %v358
          %361 = vst [vmem:[#allocation3 + $0x8] sm:$0xff] %v359
          %362 = vst [vmem:[#allocation4] sm:$0xff] 0.0
        $region64: #{seq2seq_forward.5} parent=55 // pred_fallthru
          _
        %v363 = vlaneseq
        %v364 = vand.u32 %v363, 127
        %v365 = vcvt.s32.f32 %v364
        %vm366 = vcmp.lt.s32.totalorder %v364, 16
        %v367 = vld [vmem:[#allocation4] sm:$0xff]
        %v368 = vsel %vm366, %v367, -1e+30
        %369 = vmax.xlane.f32.xlu0 %v368
        %v370 = vpop.xlane.xlu0 %369
        %vm371 = vcmp.eq.f32.partialorder %v368, %v370
        %v372 = vsel %vm371, %v365, 128.0
        %373 = vmin.xlane.f32.xlu0 %v372
        %v374 = vpop.xlane.xlu0 %373
        %vm375 = vcmp.eq.f32.partialorder %v365, %v374
        %v376 = vsel %vm375, 1, 0
        %v377 = vcvt.s32.f32 %v376
        %s378 = sld [smem:[#allocation6 + %s28]]
        %p379 = scmp.gt.s32.totalorder %s378, 0
        %s380 = scalar_select %p379, 1, 0
        %s381 = scvt.s32.f32 %s380
        %v382 = vld [vmem:[%s345] sm:$0xff]
        %v383 = vstv %s381
        %v384 = vmul.f32 %v383, %v382
        %s385 = ssub.f32 1.0, %s381
        %v386 = vstv %s385
        %v387 = vmul.f32 %v386, %v377
        %v388 = vadd.f32 %v384, %v387
        %v389 = vld [vmem:[#allocation7] sm:$0xff]
        %v390 = vld [vmem:[#allocation7 + $0x8] sm:$0xff]
        %v391 = vld [vmem:[#allocation7 + $0x10] sm:$0xff]
        %v392 = vld [vmem:[#allocation7 + $0x18] sm:$0xff]
        %v393 = vld [vmem:[#allocation7 + $0x20] sm:$0xff]
        %v394 = vld [vmem:[#allocation7 + $0x28] sm:$0xff]
        %v395 = vld [vmem:[#allocation7 + $0x30] sm:$0xff]
        %v396 = vld [vmem:[#allocation7 + $0x38] sm:$0xff]
        %v397 = vld [vmem:[#allocation7 + $0x40] sm:$0xff]
        %v398 = vld [vmem:[#allocation7 + $0x48] sm:$0xff]
        %v399 = vld [vmem:[#allocation7 + $0x50] sm:$0xff]
        %v400 = vld [vmem:[#allocation7 + $0x58] sm:$0xff]
        %v401 = vld [vmem:[#allocation7 + $0x60] sm:$0xff]
        %v402 = vld [vmem:[#allocation7 + $0x68] sm:$0xff]
        %v403 = vld [vmem:[#allocation7 + $0x70] sm:$0xff]
        %v404 = vld [vmem:[#allocation7 + $0x78] sm:$0xff]
        %v405 = vld [vmem:[#allocation7 + $0x80] sm:$0xff]
        %v406 = vld [vmem:[#allocation7 + $0x88] sm:$0xff]
        %v407 = vld [vmem:[#allocation7 + $0x90] sm:$0xff]
        %v408 = vld [vmem:[#allocation7 + $0x98] sm:$0xff]
        %v409 = vld [vmem:[#allocation7 + $0xa0] sm:$0xff]
        %v410 = vld [vmem:[#allocation7 + $0xa8] sm:$0xff]
        %v411 = vld [vmem:[#allocation7 + $0xb0] sm:$0xff]
        %v412 = vld [vmem:[#allocation7 + $0xb8] sm:$0xff]
        %v413 = vld [vmem:[#allocation7 + $0xc0] sm:$0xff]
        %v414 = vld [vmem:[#allocation7 + $0xc8] sm:$0xff]
        %v415 = vld [vmem:[#allocation7 + $0xd0] sm:$0xff]
        %v416 = vld [vmem:[#allocation7 + $0xd8] sm:$0xff]
        %v417 = vld [vmem:[#allocation7 + $0xe0] sm:$0xff]
        %v418 = vld [vmem:[#allocation7 + $0xe8] sm:$0xff]
        %v419 = vld [vmem:[#allocation7 + $0xf0] sm:$0xff]
        %v420 = vld [vmem:[#allocation7 + $0xf8] sm:$0xff]
        %v421 = vld [vmem:[#allocation7 + $0x100] sm:$0xff]
        %v422 = vld [vmem:[#allocation7 + $0x108] sm:$0xff]
        %v423 = vld [vmem:[#allocation7 + $0x110] sm:$0xff]
        %v424 = vld [vmem:[#allocation7 + $0x118] sm:$0xff]
        %v425 = vld [vmem:[#allocation7 + $0x120] sm:$0xff]
        %v426 = vld [vmem:[#allocation7 + $0x128] sm:$0xff]
        %v427 = vld [vmem:[#allocation7 + $0x130] sm:$0xff]
        %v428 = vld [vmem:[#allocation7 + $0x138] sm:$0xff]
        %v429 = vld [vmem:[#allocation7 + $0x140] sm:$0xff]
        %v430 = vld [vmem:[#allocation7 + $0x148] sm:$0xff]
        %v431 = vld [vmem:[#allocation7 + $0x150] sm:$0xff]
        %v432 = vld [vmem:[#allocation7 + $0x158] sm:$0xff]
        %v433 = vld [vmem:[#allocation7 + $0x160] sm:$0xff]
        %v434 = vld [vmem:[#allocation7 + $0x168] sm:$0xff]
        %v435 = vld [vmem:[#allocation7 + $0x170] sm:$0xff]
        %v436 = vld [vmem:[#allocation7 + $0x178] sm:$0xff]
        %v437 = vld [vmem:[#allocation7 + $0x180] sm:$0xff]
        %v438 = vld [vmem:[#allocation7 + $0x188] sm:$0xff]
        %v439 = vld [vmem:[#allocation7 + $0x190] sm:$0xff]
        %v440 = vld [vmem:[#allocation7 + $0x198] sm:$0xff]
        %v441 = vld [vmem:[#allocation7 + $0x1a0] sm:$0xff]
        %v442 = vld [vmem:[#allocation7 + $0x1a8] sm:$0xff]
        %v443 = vld [vmem:[#allocation7 + $0x1b0] sm:$0xff]
        %v444 = vld [vmem:[#allocation7 + $0x1b8] sm:$0xff]
        %v445 = vld [vmem:[#allocation7 + $0x1c0] sm:$0xff]
        %v446 = vld [vmem:[#allocation7 + $0x1c8] sm:$0xff]
        %v447 = vld [vmem:[#allocation7 + $0x1d0] sm:$0xff]
        %v448 = vld [vmem:[#allocation7 + $0x1d8] sm:$0xff]
        %v449 = vld [vmem:[#allocation7 + $0x1e0] sm:$0xff]
        %v450 = vld [vmem:[#allocation7 + $0x1e8] sm:$0xff]
        %v451 = vld [vmem:[#allocation7 + $0x1f0] sm:$0xff]
        %v452 = vld [vmem:[#allocation7 + $0x1f8] sm:$0xff]
        %v453 = vld [vmem:[#allocation2] sm:$0xff]
        %v454 = vld [vmem:[%s4] sm:$0xff]
        %v455 = vld [vmem:[%s4 + $0x8] sm:$0xff]
        %v456 = vld [vmem:[%s4 + $0x10] sm:$0xff]
        %v457 = vld [vmem:[%s4 + $0x18] sm:$0xff]
        %v458 = vld [vmem:[%s4 + $0x20] sm:$0xff]
        %v459 = vld [vmem:[%s4 + $0x28] sm:$0xff]
        %v460 = vld [vmem:[%s4 + $0x30] sm:$0xff]
        %v461 = vld [vmem:[%s4 + $0x38] sm:$0xff]
        %v462 = vld [vmem:[%s4 + $0x40] sm:$0xff]
        %v463 = vld [vmem:[%s4 + $0x48] sm:$0xff]
        %v464 = vld [vmem:[%s4 + $0x50] sm:$0xff]
        %v465 = vld [vmem:[%s4 + $0x58] sm:$0xff]
        %v466 = vld [vmem:[%s4 + $0x60] sm:$0xff]
        %v467 = vld [vmem:[%s4 + $0x68] sm:$0xff]
        %v468 = vld [vmem:[%s4 + $0x70] sm:$0xff]
        %v469 = vld [vmem:[%s4 + $0x78] sm:$0xff]
        %v470 = vld [vmem:[%s4 + $0x80] sm:$0xff]
        %v471 = vld [vmem:[%s4 + $0x88] sm:$0xff]
        %v472 = vld [vmem:[%s4 + $0x90] sm:$0xff]
        %v473 = vld [vmem:[%s4 + $0x98] sm:$0xff]
        %v474 = vld [vmem:[%s4 + $0xa0] sm:$0xff]
        %v475 = vld [vmem:[%s4 + $0xa8] sm:$0xff]
        %v476 = vld [vmem:[%s4 + $0xb0] sm:$0xff]
        %v477 = vld [vmem:[%s4 + $0xb8] sm:$0xff]
        %v478 = vld [vmem:[%s4 + $0xc0] sm:$0xff]
        %v479 = vld [vmem:[%s4 + $0xc8] sm:$0xff]
        %v480 = vld [vmem:[%s4 + $0xd0] sm:$0xff]
        %v481 = vld [vmem:[%s4 + $0xd8] sm:$0xff]
        %v482 = vld [vmem:[%s4 + $0xe0] sm:$0xff]
        %v483 = vld [vmem:[%s4 + $0xe8] sm:$0xff]
        %v484 = vld [vmem:[%s4 + $0xf0] sm:$0xff]
        %v485 = vld [vmem:[%s4 + $0xf8] sm:$0xff]
        %v486 = vld [vmem:[%s4 + $0x100] sm:$0xff]
        %v487 = vld [vmem:[%s4 + $0x108] sm:$0xff]
        %v488 = vld [vmem:[%s4 + $0x110] sm:$0xff]
        %v489 = vld [vmem:[%s4 + $0x118] sm:$0xff]
        %v490 = vld [vmem:[%s4 + $0x120] sm:$0xff]
        %v491 = vld [vmem:[%s4 + $0x128] sm:$0xff]
        %v492 = vld [vmem:[%s4 + $0x130] sm:$0xff]
        %v493 = vld [vmem:[%s4 + $0x138] sm:$0xff]
        %v494 = vld [vmem:[%s4 + $0x140] sm:$0xff]
        %v495 = vld [vmem:[%s4 + $0x148] sm:$0xff]
        %v496 = vld [vmem:[%s4 + $0x150] sm:$0xff]
        %v497 = vld [vmem:[%s4 + $0x158] sm:$0xff]
        %v498 = vld [vmem:[%s4 + $0x160] sm:$0xff]
        %v499 = vld [vmem:[%s4 + $0x168] sm:$0xff]
        %v500 = vld [vmem:[%s4 + $0x170] sm:$0xff]
        %v501 = vld [vmem:[%s4 + $0x178] sm:$0xff]
        %v502 = vld [vmem:[%s4 + $0x180] sm:$0xff]
        %v503 = vld [vmem:[%s4 + $0x188] sm:$0xff]
        %v504 = vld [vmem:[%s4 + $0x190] sm:$0xff]
        %v505 = vld [vmem:[%s4 + $0x198] sm:$0xff]
        %v506 = vld [vmem:[%s4 + $0x1a0] sm:$0xff]
        %v507 = vld [vmem:[%s4 + $0x1a8] sm:$0xff]
        %v508 = vld [vmem:[%s4 + $0x1b0] sm:$0xff]
        %v509 = vld [vmem:[%s4 + $0x1b8] sm:$0xff]
        %v510 = vld [vmem:[%s4 + $0x1c0] sm:$0xff]
        %v511 = vld [vmem:[%s4 + $0x1c8] sm:$0xff]
        %v512 = vld [vmem:[%s4 + $0x1d0] sm:$0xff]
        %v513 = vld [vmem:[%s4 + $0x1d8] sm:$0xff]
        %v514 = vld [vmem:[%s4 + $0x1e0] sm:$0xff]
        %v515 = vld [vmem:[%s4 + $0x1e8] sm:$0xff]
        %v516 = vld [vmem:[%s4 + $0x1f0] sm:$0xff]
        %v517 = vld [vmem:[%s4 + $0x1f8] sm:$0xff]
        %518 = vmatprep.subr.mxu0 %v515
        %519 = vmatpush1.msra.mxu0 %v514
        %520 = vmatprep.subr.mxu0 %v511
        %521 = vmatpush1.msra.mxu0 %v510
        %522 = vmatprep.subr.mxu0 %v507
        %523 = vmatpush1.msra.mxu0 %v506
        %524 = vmatprep.subr.mxu0 %v503
        %525 = vmatpush1.msra.mxu0 %v502
        %526 = vmatprep.subr.mxu0 %v499
        %527 = vmatpush1.msra.mxu0 %v498
        %528 = vmatprep.subr.mxu0 %v495
        %529 = vmatpush1.msra.mxu0 %v494
        %530 = vmatprep.subr.mxu0 %v491
        %531 = vmatpush1.msra.mxu0 %v490
        %532 = vmatprep.subr.mxu0 %v487
        %533 = vmatpush1.msra.mxu0 %v486
        %534 = vmatprep.subr.mxu0 %v483
        %535 = vmatpush1.msra.mxu0 %v482
        %536 = vmatprep.subr.mxu0 %v479
        %537 = vmatpush1.msra.mxu0 %v478
        %538 = vmatprep.subr.mxu0 %v475
        %539 = vmatpush1.msra.mxu0 %v474
        %540 = vmatprep.subr.mxu0 %v471
        %541 = vmatpush1.msra.mxu0 %v470
        %542 = vmatprep.subr.mxu0 %v467
        %543 = vmatpush1.msra.mxu0 %v466
        %544 = vmatprep.subr.mxu0 %v463
        %545 = vmatpush1.msra.mxu0 %v462
        %546 = vmatprep.subr.mxu0 %v459
        %547 = vmatpush1.msra.mxu0 %v458
        %548 = vmatprep.subr.mxu0 %v455
        %549 = vmatpush1.msra.mxu0 %v454
        %550 = vmatprep.subr.mxu0 0.0
        %551 = vmatpush2.msra.mxu0 0.0
        %552 = vmatprep.subr.mxu0 0.0
        %553 = vmatpush2.msra.mxu0 0.0
        %554 = vmatprep.subr.mxu0 0.0
        %555 = vmatpush2.msra.mxu0 0.0
        %556 = vmatprep.subr.mxu0 0.0
        %557 = vmatpush2.msra.mxu0 0.0
        %558 = vmatprep.subr.mxu0 0.0
        %559 = vmatpush2.msra.mxu0 0.0
        %560 = vmatprep.subr.mxu0 0.0
        %561 = vmatpush2.msra.mxu0 0.0
        %562 = vmatprep.subr.mxu0 0.0
        %563 = vmatpush2.msra.mxu0 0.0
        %564 = vmatprep.subr.mxu0 0.0
        %565 = vmatpush2.msra.mxu0 0.0
        %566 = vmatprep.subr.mxu0 0.0
        %567 = vmatpush2.msra.mxu0 0.0
        %568 = vmatprep.subr.mxu0 0.0
        %569 = vmatpush2.msra.mxu0 0.0
        %570 = vmatprep.subr.mxu0 0.0
        %571 = vmatpush2.msra.mxu0 0.0
        %572 = vmatprep.subr.mxu0 0.0
        %573 = vmatpush2.msra.mxu0 0.0
        %574 = vmatprep.subr.mxu0 0.0
        %575 = vmatpush2.msra.mxu0 0.0
        %576 = vmatprep.subr.mxu0 0.0
        %577 = vmatpush2.msra.mxu0 0.0
        %578 = vmatprep.subr.mxu0 0.0
        %579 = vmatpush2.msra.mxu0 0.0
        %580 = vmatprep.subr.mxu0 0.0
        %581 = vmatpush2.msra.mxu0 0.0
        %582 = vmatprep.mubr.f32.mxu0 0.0
        %583 = vmatmul.mubr.f32.gmra.mxu0 %v453
        %v584 = vpop.f32.mrf.mxu0
        %v585 = vadd.f32 0.0, %v584
        %v586 = vpop.f32.mrf.mxu0
        %v587 = vadd.f32 0.0, %v586
        %588 = vdwg.mxu0
        %589 = vmatprep.subr.mxu0 %v517
        %590 = vmatpush1.msra.mxu0 %v516
        %591 = vmatprep.subr.mxu0 %v513
        %592 = vmatpush1.msra.mxu0 %v512
        %593 = vmatprep.subr.mxu0 %v509
        %594 = vmatpush1.msra.mxu0 %v508
        %595 = vmatprep.subr.mxu0 %v505
        %596 = vmatpush1.msra.mxu0 %v504
        %597 = vmatprep.subr.mxu0 %v501
        %598 = vmatpush1.msra.mxu0 %v500
        %599 = vmatprep.subr.mxu0 %v497
        %600 = vmatpush1.msra.mxu0 %v496
        %601 = vmatprep.subr.mxu0 %v493
        %602 = vmatpush1.msra.mxu0 %v492
        %603 = vmatprep.subr.mxu0 %v489
        %604 = vmatpush1.msra.mxu0 %v488
        %605 = vmatprep.subr.mxu0 %v485
        %606 = vmatpush1.msra.mxu0 %v484
        %607 = vmatprep.subr.mxu0 %v481
        %608 = vmatpush1.msra.mxu0 %v480
        %609 = vmatprep.subr.mxu0 %v477
        %610 = vmatpush1.msra.mxu0 %v476
        %611 = vmatprep.subr.mxu0 %v473
        %612 = vmatpush1.msra.mxu0 %v472
        %613 = vmatprep.subr.mxu0 %v469
        %614 = vmatpush1.msra.mxu0 %v468
        %615 = vmatprep.subr.mxu0 %v465
        %616 = vmatpush1.msra.mxu0 %v464
        %617 = vmatprep.subr.mxu0 %v461
        %618 = vmatpush1.msra.mxu0 %v460
        %619 = vmatprep.subr.mxu0 %v457
        %620 = vmatpush1.msra.mxu0 %v456
        %621 = vmatprep.subr.mxu0 0.0
        %622 = vmatpush2.msra.mxu0 0.0
        %623 = vmatprep.subr.mxu0 0.0
        %624 = vmatpush2.msra.mxu0 0.0
        %625 = vmatprep.subr.mxu0 0.0
        %626 = vmatpush2.msra.mxu0 0.0
        %627 = vmatprep.subr.mxu0 0.0
        %628 = vmatpush2.msra.mxu0 0.0
        %629 = vmatprep.subr.mxu0 0.0
        %630 = vmatpush2.msra.mxu0 0.0
        %631 = vmatprep.subr.mxu0 0.0
        %632 = vmatpush2.msra.mxu0 0.0
        %633 = vmatprep.subr.mxu0 0.0
        %634 = vmatpush2.msra.mxu0 0.0
        %635 = vmatprep.subr.mxu0 0.0
        %636 = vmatpush2.msra.mxu0 0.0
        %637 = vmatprep.subr.mxu0 0.0
        %638 = vmatpush2.msra.mxu0 0.0
        %639 = vmatprep.subr.mxu0 0.0
        %640 = vmatpush2.msra.mxu0 0.0
        %641 = vmatprep.subr.mxu0 0.0
        %642 = vmatpush2.msra.mxu0 0.0
        %643 = vmatprep.subr.mxu0 0.0
        %644 = vmatpush2.msra.mxu0 0.0
        %645 = vmatprep.subr.mxu0 0.0
        %646 = vmatpush2.msra.mxu0 0.0
        %647 = vmatprep.subr.mxu0 0.0
        %648 = vmatpush2.msra.mxu0 0.0
        %649 = vmatprep.subr.mxu0 0.0
        %650 = vmatpush2.msra.mxu0 0.0
        %651 = vmatprep.subr.mxu0 0.0
        %652 = vmatpush2.msra.mxu0 0.0
        %653 = vmatprep.mubr.f32.mxu0 0.0
        %654 = vmatmul.mubr.f32.gmra.mxu0 %v453
        %v655 = vpop.f32.mrf.mxu0
        %v656 = vadd.f32 0.0, %v655
        %v657 = vpop.f32.mrf.mxu0
        %v658 = vadd.f32 0.0, %v657
        %659 = vdwg.mxu0
        %660 = vmatprep.subr.mxu0 %v450
        %661 = vmatpush1.msra.mxu0 %v449
        %662 = vmatprep.subr.mxu0 %v446
        %663 = vmatpush1.msra.mxu0 %v445
        %664 = vmatprep.subr.mxu0 %v442
        %665 = vmatpush1.msra.mxu0 %v441
        %666 = vmatprep.subr.mxu0 %v438
        %667 = vmatpush1.msra.mxu0 %v437
        %668 = vmatprep.subr.mxu0 %v434
        %669 = vmatpush1.msra.mxu0 %v433
        %670 = vmatprep.subr.mxu0 %v430
        %671 = vmatpush1.msra.mxu0 %v429
        %672 = vmatprep.subr.mxu0 %v426
        %673 = vmatpush1.msra.mxu0 %v425
        %674 = vmatprep.subr.mxu0 %v422
        %675 = vmatpush1.msra.mxu0 %v421
        %676 = vmatprep.subr.mxu0 %v418
        %677 = vmatpush1.msra.mxu0 %v417
        %678 = vmatprep.subr.mxu0 %v414
        %679 = vmatpush1.msra.mxu0 %v413
        %680 = vmatprep.subr.mxu0 %v410
        %681 = vmatpush1.msra.mxu0 %v409
        %682 = vmatprep.subr.mxu0 %v406
        %683 = vmatpush1.msra.mxu0 %v405
        %684 = vmatprep.subr.mxu0 %v402
        %685 = vmatpush1.msra.mxu0 %v401
        %686 = vmatprep.subr.mxu0 %v398
        %687 = vmatpush1.msra.mxu0 %v397
        %688 = vmatprep.subr.mxu0 %v394
        %689 = vmatpush1.msra.mxu0 %v393
        %690 = vmatprep.subr.mxu0 %v390
        %691 = vmatpush1.msra.mxu0 %v389
        %692 = vmatprep.subr.mxu0 0.0
        %693 = vmatpush2.msra.mxu0 0.0
        %694 = vmatprep.subr.mxu0 0.0
        %695 = vmatpush2.msra.mxu0 0.0
        %696 = vmatprep.subr.mxu0 0.0
        %697 = vmatpush2.msra.mxu0 0.0
        %698 = vmatprep.subr.mxu0 0.0
        %699 = vmatpush2.msra.mxu0 0.0
        %700 = vmatprep.subr.mxu0 0.0
        %701 = vmatpush2.msra.mxu0 0.0
        %702 = vmatprep.subr.mxu0 0.0
        %703 = vmatpush2.msra.mxu0 0.0
        %704 = vmatprep.subr.mxu0 0.0
        %705 = vmatpush2.msra.mxu0 0.0
        %706 = vmatprep.subr.mxu0 0.0
        %707 = vmatpush2.msra.mxu0 0.0
        %708 = vmatprep.subr.mxu0 0.0
        %709 = vmatpush2.msra.mxu0 0.0
        %710 = vmatprep.subr.mxu0 0.0
        %711 = vmatpush2.msra.mxu0 0.0
        %712 = vmatprep.subr.mxu0 0.0
        %713 = vmatpush2.msra.mxu0 0.0
        %714 = vmatprep.subr.mxu0 0.0
        %715 = vmatpush2.msra.mxu0 0.0
        %716 = vmatprep.subr.mxu0 0.0
        %717 = vmatpush2.msra.mxu0 0.0
        %718 = vmatprep.subr.mxu0 0.0
        %719 = vmatpush2.msra.mxu0 0.0
        %720 = vmatprep.subr.mxu0 0.0
        %721 = vmatpush2.msra.mxu0 0.0
        %722 = vmatprep.subr.mxu0 0.0
        %723 = vmatpush2.msra.mxu0 0.0
        %724 = vmatprep.mubr.f32.mxu0 0.0
        %725 = vmatmul.mubr.f32.gmra.mxu0 %v388
        %v726 = vpop.f32.mrf.mxu0
        %v727 = vadd.f32 %v585, %v726
        %v728 = vpop.f32.mrf.mxu0
        %v729 = vadd.f32 %v587, %v728
        %730 = vdwg.mxu0
        %731 = vmatprep.subr.mxu0 %v452
        %732 = vmatpush1.msra.mxu0 %v451
        %733 = vmatprep.subr.mxu0 %v448
        %734 = vmatpush1.msra.mxu0 %v447
        %735 = vmatprep.subr.mxu0 %v444
        %736 = vmatpush1.msra.mxu0 %v443
        %737 = vmatprep.subr.mxu0 %v440
        %738 = vmatpush1.msra.mxu0 %v439
        %739 = vmatprep.subr.mxu0 %v436
        %740 = vmatpush1.msra.mxu0 %v435
        %741 = vmatprep.subr.mxu0 %v432
        %742 = vmatpush1.msra.mxu0 %v431
        %743 = vmatprep.subr.mxu0 %v428
        %744 = vmatpush1.msra.mxu0 %v427
        %745 = vmatprep.subr.mxu0 %v424
        %746 = vmatpush1.msra.mxu0 %v423
        %747 = vmatprep.subr.mxu0 %v420
        %748 = vmatpush1.msra.mxu0 %v419
        %749 = vmatprep.subr.mxu0 %v416
        %750 = vmatpush1.msra.mxu0 %v415
        %751 = vmatprep.subr.mxu0 %v412
        %752 = vmatpush1.msra.mxu0 %v411
        %753 = vmatprep.subr.mxu0 %v408
        %754 = vmatpush1.msra.mxu0 %v407
        %755 = vmatprep.subr.mxu0 %v404
        %756 = vmatpush1.msra.mxu0 %v403
        %757 = vmatprep.subr.mxu0 %v400
        %758 = vmatpush1.msra.mxu0 %v399
        %759 = vmatprep.subr.mxu0 %v396
        %760 = vmatpush1.msra.mxu0 %v395
        %761 = vmatprep.subr.mxu0 %v392
        %762 = vmatpush1.msra.mxu0 %v391
        %763 = vmatprep.subr.mxu0 0.0
        %764 = vmatpush2.msra.mxu0 0.0
        %765 = vmatprep.subr.mxu0 0.0
        %766 = vmatpush2.msra.mxu0 0.0
        %767 = vmatprep.subr.mxu0 0.0
        %768 = vmatpush2.msra.mxu0 0.0
        %769 = vmatprep.subr.mxu0 0.0
        %770 = vmatpush2.msra.mxu0 0.0
        %771 = vmatprep.subr.mxu0 0.0
        %772 = vmatpush2.msra.mxu0 0.0
        %773 = vmatprep.subr.mxu0 0.0
        %774 = vmatpush2.msra.mxu0 0.0
        %775 = vmatprep.subr.mxu0 0.0
        %776 = vmatpush2.msra.mxu0 0.0
        %777 = vmatprep.subr.mxu0 0.0
        %778 = vmatpush2.msra.mxu0 0.0
        %779 = vmatprep.subr.mxu0 0.0
        %780 = vmatpush2.msra.mxu0 0.0
        %781 = vmatprep.subr.mxu0 0.0
        %782 = vmatpush2.msra.mxu0 0.0
        %783 = vmatprep.subr.mxu0 0.0
        %784 = vmatpush2.msra.mxu0 0.0
        %785 = vmatprep.subr.mxu0 0.0
        %786 = vmatpush2.msra.mxu0 0.0
        %787 = vmatprep.subr.mxu0 0.0
        %788 = vmatpush2.msra.mxu0 0.0
        %789 = vmatprep.subr.mxu0 0.0
        %790 = vmatpush2.msra.mxu0 0.0
        %791 = vmatprep.subr.mxu0 0.0
        %792 = vmatpush2.msra.mxu0 0.0
        %793 = vmatprep.subr.mxu0 0.0
        %794 = vmatpush2.msra.mxu0 0.0
        %795 = vmatprep.mubr.f32.mxu0 0.0
        %796 = vmatmul.mubr.f32.gmra.mxu0 %v388
        %v797 = vpop.f32.mrf.mxu0
        %v798 = vadd.f32 %v656, %v797
        %v799 = vpop.f32.mrf.mxu0
        %v800 = vadd.f32 %v658, %v799
        %801 = vdwg.mxu0
        %v802 = vld [vmem:[%s5] sm:$0xf]
        %v804 = vlaneseq
        %v805 = vshrl.u32 %v804, 7
        %v806 = vsub.s32 0, %v805
        %v807 = vrot.slane %v802, %v806
        %v808 = vlaneseq
        %v809 = vshrl.u32 %v808, 7
        %v810 = vsub.s32 1, %v809
        %v811 = vrot.slane %v802, %v810
        %v812 = vlaneseq
        %v813 = vshrl.u32 %v812, 7
        %v814 = vsub.s32 2, %v813
        %v815 = vrot.slane %v802, %v814
        %v816 = vlaneseq
        %v817 = vshrl.u32 %v816, 7
        %v818 = vsub.s32 3, %v817
        %v819 = vrot.slane %v802, %v818
        %v824 = vadd.f32 %v727, %v807
        %v825 = vadd.f32 %v729, %v811
        %v826 = vadd.f32 %v798, %v815
        %v827 = vadd.f32 %v800, %v819
        %v828 = vld [vmem:[#allocation3] sm:$0xff]
        %v829 = vxor.u32 %v824, 2147483648
        %v830 = vmul.f32 %v829, 1.442695
        %v831 = vpow.pop %v830
        %v832 = vadd.f32 %v831, 1.0
        %v833 = vrcp.pop %v832
        %v834 = vmul.f32 1.0, %v833
        %v835 = vxor.u32 %v825, 2147483648
        %v836 = vmul.f32 %v835, 1.442695
        %v837 = vpow.pop %v836
        %v838 = vadd.f32 %v837, 1.0
        %v839 = vrcp.pop %v838
        %v840 = vmul.f32 1.0, %v839
        %v841 = vtanh.pop %v826
        %v842 = vxor.u32 %v827, 2147483648
        %v843 = vmul.f32 %v842, 1.442695
        %v844 = vpow.pop %v843
        %v845 = vadd.f32 %v844, 1.0
        %v846 = vrcp.pop %v845
        %v847 = vmul.f32 1.0, %v846
        %v848 = vmul.f32 %v840, %v828
        %v849 = vmul.f32 %v834, %v841
        %v850 = vadd.f32 %v848, %v849
        %v851 = vtanh.pop %v850
        %v852 = vmul.f32 %v847, %v851
        %853 = vst [vmem:[#allocation2] sm:$0xff] %v852
        %854 = vst [vmem:[#allocation3] sm:$0xff] %v850
        %s855 = scalar_lea.vmem %s3, 512
        %v856 = vld [vmem:[%s855] sm:$0xff]
        %v857 = vld [vmem:[%s855 + $0x8] sm:$0xff]
        %v858 = vld [vmem:[%s855 + $0x10] sm:$0xff]
        %v859 = vld [vmem:[%s855 + $0x18] sm:$0xff]
        %v860 = vld [vmem:[%s855 + $0x20] sm:$0xff]
        %v861 = vld [vmem:[%s855 + $0x28] sm:$0xff]
        %v862 = vld [vmem:[%s855 + $0x30] sm:$0xff]
        %v863 = vld [vmem:[%s855 + $0x38] sm:$0xff]
        %v864 = vld [vmem:[%s855 + $0x40] sm:$0xff]
        %v865 = vld [vmem:[%s855 + $0x48] sm:$0xff]
        %v866 = vld [vmem:[%s855 + $0x50] sm:$0xff]
        %v867 = vld [vmem:[%s855 + $0x58] sm:$0xff]
        %v868 = vld [vmem:[%s855 + $0x60] sm:$0xff]
        %v869 = vld [vmem:[%s855 + $0x68] sm:$0xff]
        %v870 = vld [vmem:[%s855 + $0x70] sm:$0xff]
        %v871 = vld [vmem:[%s855 + $0x78] sm:$0xff]
        %v872 = vld [vmem:[%s855 + $0x80] sm:$0xff]
        %v873 = vld [vmem:[%s855 + $0x88] sm:$0xff]
        %v874 = vld [vmem:[%s855 + $0x90] sm:$0xff]
        %v875 = vld [vmem:[%s855 + $0x98] sm:$0xff]
        %v876 = vld [vmem:[%s855 + $0xa0] sm:$0xff]
        %v877 = vld [vmem:[%s855 + $0xa8] sm:$0xff]
        %v878 = vld [vmem:[%s855 + $0xb0] sm:$0xff]
        %v879 = vld [vmem:[%s855 + $0xb8] sm:$0xff]
        %v880 = vld [vmem:[%s855 + $0xc0] sm:$0xff]
        %v881 = vld [vmem:[%s855 + $0xc8] sm:$0xff]
        %v882 = vld [vmem:[%s855 + $0xd0] sm:$0xff]
        %v883 = vld [vmem:[%s855 + $0xd8] sm:$0xff]
        %v884 = vld [vmem:[%s855 + $0xe0] sm:$0xff]
        %v885 = vld [vmem:[%s855 + $0xe8] sm:$0xff]
        %v886 = vld [vmem:[%s855 + $0xf0] sm:$0xff]
        %v887 = vld [vmem:[%s855 + $0xf8] sm:$0xff]
        %v888 = vld [vmem:[%s855 + $0x100] sm:$0xff]
        %v889 = vld [vmem:[%s855 + $0x108] sm:$0xff]
        %v890 = vld [vmem:[%s855 + $0x110] sm:$0xff]
        %v891 = vld [vmem:[%s855 + $0x118] sm:$0xff]
        %v892 = vld [vmem:[%s855 + $0x120] sm:$0xff]
        %v893 = vld [vmem:[%s855 + $0x128] sm:$0xff]
        %v894 = vld [vmem:[%s855 + $0x130] sm:$0xff]
        %v895 = vld [vmem:[%s855 + $0x138] sm:$0xff]
        %v896 = vld [vmem:[%s855 + $0x140] sm:$0xff]
        %v897 = vld [vmem:[%s855 + $0x148] sm:$0xff]
        %v898 = vld [vmem:[%s855 + $0x150] sm:$0xff]
        %v899 = vld [vmem:[%s855 + $0x158] sm:$0xff]
        %v900 = vld [vmem:[%s855 + $0x160] sm:$0xff]
        %v901 = vld [vmem:[%s855 + $0x168] sm:$0xff]
        %v902 = vld [vmem:[%s855 + $0x170] sm:$0xff]
        %v903 = vld [vmem:[%s855 + $0x178] sm:$0xff]
        %v904 = vld [vmem:[%s855 + $0x180] sm:$0xff]
        %v905 = vld [vmem:[%s855 + $0x188] sm:$0xff]
        %v906 = vld [vmem:[%s855 + $0x190] sm:$0xff]
        %v907 = vld [vmem:[%s855 + $0x198] sm:$0xff]
        %v908 = vld [vmem:[%s855 + $0x1a0] sm:$0xff]
        %v909 = vld [vmem:[%s855 + $0x1a8] sm:$0xff]
        %v910 = vld [vmem:[%s855 + $0x1b0] sm:$0xff]
        %v911 = vld [vmem:[%s855 + $0x1b8] sm:$0xff]
        %v912 = vld [vmem:[%s855 + $0x1c0] sm:$0xff]
        %v913 = vld [vmem:[%s855 + $0x1c8] sm:$0xff]
        %v914 = vld [vmem:[%s855 + $0x1d0] sm:$0xff]
        %v915 = vld [vmem:[%s855 + $0x1d8] sm:$0xff]
        %v916 = vld [vmem:[%s855 + $0x1e0] sm:$0xff]
        %v917 = vld [vmem:[%s855 + $0x1e8] sm:$0xff]
        %v918 = vld [vmem:[%s855 + $0x1f0] sm:$0xff]
        %v919 = vld [vmem:[%s855 + $0x1f8] sm:$0xff]
        %s920 = scalar_lea.vmem [#allocation2], 8
        %v921 = vld [vmem:[%s920] sm:$0xff]
        %s922 = scalar_lea.vmem %s4, 512
        %v923 = vld [vmem:[%s922] sm:$0xff]
        %v924 = vld [vmem:[%s922 + $0x8] sm:$0xff]
        %v925 = vld [vmem:[%s922 + $0x10] sm:$0xff]
        %v926 = vld [vmem:[%s922 + $0x18] sm:$0xff]
        %v927 = vld [vmem:[%s922 + $0x20] sm:$0xff]
        %v928 = vld [vmem:[%s922 + $0x28] sm:$0xff]
        %v929 = vld [vmem:[%s922 + $0x30] sm:$0xff]
        %v930 = vld [vmem:[%s922 + $0x38] sm:$0xff]
        %v931 = vld [vmem:[%s922 + $0x40] sm:$0xff]
        %v932 = vld [vmem:[%s922 + $0x48] sm:$0xff]
        %v933 = vld [vmem:[%s922 + $0x50] sm:$0xff]
        %v934 = vld [vmem:[%s922 + $0x58] sm:$0xff]
        %v935 = vld [vmem:[%s922 + $0x60] sm:$0xff]
        %v936 = vld [vmem:[%s922 + $0x68] sm:$0xff]
        %v937 = vld [vmem:[%s922 + $0x70] sm:$0xff]
        %v938 = vld [vmem:[%s922 + $0x78] sm:$0xff]
        %v939 = vld [vmem:[%s922 + $0x80] sm:$0xff]
        %v940 = vld [vmem:[%s922 + $0x88] sm:$0xff]
        %v941 = vld [vmem:[%s922 + $0x90] sm:$0xff]
        %v942 = vld [vmem:[%s922 + $0x98] sm:$0xff]
        %v943 = vld [vmem:[%s922 + $0xa0] sm:$0xff]
        %v944 = vld [vmem:[%s922 + $0xa8] sm:$0xff]
        %v945 = vld [vmem:[%s922 + $0xb0] sm:$0xff]
        %v946 = vld [vmem:[%s922 + $0xb8] sm:$0xff]
        %v947 = vld [vmem:[%s922 + $0xc0] sm:$0xff]
        %v948 = vld [vmem:[%s922 + $0xc8] sm:$0xff]
        %v949 = vld [vmem:[%s922 + $0xd0] sm:$0xff]
        %v950 = vld [vmem:[%s922 + $0xd8] sm:$0xff]
        %v951 = vld [vmem:[%s922 + $0xe0] sm:$0xff]
        %v952 = vld [vmem:[%s922 + $0xe8] sm:$0xff]
        %v953 = vld [vmem:[%s922 + $0xf0] sm:$0xff]
        %v954 = vld [vmem:[%s922 + $0xf8] sm:$0xff]
        %v955 = vld [vmem:[%s922 + $0x100] sm:$0xff]
        %v956 = vld [vmem:[%s922 + $0x108] sm:$0xff]
        %v957 = vld [vmem:[%s922 + $0x110] sm:$0xff]
        %v958 = vld [vmem:[%s922 + $0x118] sm:$0xff]
        %v959 = vld [vmem:[%s922 + $0x120] sm:$0xff]
        %v960 = vld [vmem:[%s922 + $0x128] sm:$0xff]
        %v961 = vld [vmem:[%s922 + $0x130] sm:$0xff]
        %v962 = vld [vmem:[%s922 + $0x138] sm:$0xff]
        %v963 = vld [vmem:[%s922 + $0x140] sm:$0xff]
        %v964 = vld [vmem:[%s922 + $0x148] sm:$0xff]
        %v965 = vld [vmem:[%s922 + $0x150] sm:$0xff]
        %v966 = vld [vmem:[%s922 + $0x158] sm:$0xff]
        %v967 = vld [vmem:[%s922 + $0x160] sm:$0xff]
        %v968 = vld [vmem:[%s922 + $0x168] sm:$0xff]
        %v969 = vld [vmem:[%s922 + $0x170] sm:$0xff]
        %v970 = vld [vmem:[%s922 + $0x178] sm:$0xff]
        %v971 = vld [vmem:[%s922 + $0x180] sm:$0xff]
        %v972 = vld [vmem:[%s922 + $0x188] sm:$0xff]
        %v973 = vld [vmem:[%s922 + $0x190] sm:$0xff]
        %v974 = vld [vmem:[%s922 + $0x198] sm:$0xff]
        %v975 = vld [vmem:[%s922 + $0x1a0] sm:$0xff]
        %v976 = vld [vmem:[%s922 + $0x1a8] sm:$0xff]
        %v977 = vld [vmem:[%s922 + $0x1b0] sm:$0xff]
        %v978 = vld [vmem:[%s922 + $0x1b8] sm:$0xff]
        %v979 = vld [vmem:[%s922 + $0x1c0] sm:$0xff]
        %v980 = vld [vmem:[%s922 + $0x1c8] sm:$0xff]
        %v981 = vld [vmem:[%s922 + $0x1d0] sm:$0xff]
        %v982 = vld [vmem:[%s922 + $0x1d8] sm:$0xff]
        %v983 = vld [vmem:[%s922 + $0x1e0] sm:$0xff]
        %v984 = vld [vmem:[%s922 + $0x1e8] sm:$0xff]
        %v985 = vld [vmem:[%s922 + $0x1f0] sm:$0xff]
        %v986 = vld [vmem:[%s922 + $0x1f8] sm:$0xff]
        %987 = vmatprep.subr.mxu0 %v984
        %988 = vmatpush1.msra.mxu0 %v983
        %989 = vmatprep.subr.mxu0 %v980
        %990 = vmatpush1.msra.mxu0 %v979
        %991 = vmatprep.subr.mxu0 %v976
        %992 = vmatpush1.msra.mxu0 %v975
        %993 = vmatprep.subr.mxu0 %v972
        %994 = vmatpush1.msra.mxu0 %v971
        %995 = vmatprep.subr.mxu0 %v968
        %996 = vmatpush1.msra.mxu0 %v967
        %997 = vmatprep.subr.mxu0 %v964
        %998 = vmatpush1.msra.mxu0 %v963
        %999 = vmatprep.subr.mxu0 %v960
        %1000 = vmatpush1.msra.mxu0 %v959
        %1001 = vmatprep.subr.mxu0 %v956
        %1002 = vmatpush1.msra.mxu0 %v955
        %1003 = vmatprep.subr.mxu0 %v952
        %1004 = vmatpush1.msra.mxu0 %v951
        %1005 = vmatprep.subr.mxu0 %v948
        %1006 = vmatpush1.msra.mxu0 %v947
        %1007 = vmatprep.subr.mxu0 %v944
        %1008 = vmatpush1.msra.mxu0 %v943
        %1009 = vmatprep.subr.mxu0 %v940
        %1010 = vmatpush1.msra.mxu0 %v939
        %1011 = vmatprep.subr.mxu0 %v936
        %1012 = vmatpush1.msra.mxu0 %v935
        %1013 = vmatprep.subr.mxu0 %v932
        %1014 = vmatpush1.msra.mxu0 %v931
        %1015 = vmatprep.subr.mxu0 %v928
        %1016 = vmatpush1.msra.mxu0 %v927
        %1017 = vmatprep.subr.mxu0 %v924
        %1018 = vmatpush1.msra.mxu0 %v923
        %1019 = vmatprep.subr.mxu0 0.0
        %1020 = vmatpush2.msra.mxu0 0.0
        %1021 = vmatprep.subr.mxu0 0.0
        %1022 = vmatpush2.msra.mxu0 0.0
        %1023 = vmatprep.subr.mxu0 0.0
        %1024 = vmatpush2.msra.mxu0 0.0
        %1025 = vmatprep.subr.mxu0 0.0
        %1026 = vmatpush2.msra.mxu0 0.0
        %1027 = vmatprep.subr.mxu0 0.0
        %1028 = vmatpush2.msra.mxu0 0.0
        %1029 = vmatprep.subr.mxu0 0.0
        %1030 = vmatpush2.msra.mxu0 0.0
        %1031 = vmatprep.subr.mxu0 0.0
        %1032 = vmatpush2.msra.mxu0 0.0
        %1033 = vmatprep.subr.mxu0 0.0
        %1034 = vmatpush2.msra.mxu0 0.0
        %1035 = vmatprep.subr.mxu0 0.0
        %1036 = vmatpush2.msra.mxu0 0.0
        %1037 = vmatprep.subr.mxu0 0.0
        %1038 = vmatpush2.msra.mxu0 0.0
        %1039 = vmatprep.subr.mxu0 0.0
        %1040 = vmatpush2.msra.mxu0 0.0
        %1041 = vmatprep.subr.mxu0 0.0
        %1042 = vmatpush2.msra.mxu0 0.0
        %1043 = vmatprep.subr.mxu0 0.0
        %1044 = vmatpush2.msra.mxu0 0.0
        %1045 = vmatprep.subr.mxu0 0.0
        %1046 = vmatpush2.msra.mxu0 0.0
        %1047 = vmatprep.subr.mxu0 0.0
        %1048 = vmatpush2.msra.mxu0 0.0
        %1049 = vmatprep.subr.mxu0 0.0
        %1050 = vmatpush2.msra.mxu0 0.0
        %1051 = vmatprep.mubr.f32.mxu0 0.0
        %1052 = vmatmul.mubr.f32.gmra.mxu0 %v921
        %v1053 = vpop.f32.mrf.mxu0
        %v1054 = vadd.f32 0.0, %v1053
        %v1055 = vpop.f32.mrf.mxu0
        %v1056 = vadd.f32 0.0, %v1055
        %1057 = vdwg.mxu0
        %1058 = vmatprep.subr.mxu0 %v986
        %1059 = vmatpush1.msra.mxu0 %v985
        %1060 = vmatprep.subr.mxu0 %v982
        %1061 = vmatpush1.msra.mxu0 %v981
        %1062 = vmatprep.subr.mxu0 %v978
        %1063 = vmatpush1.msra.mxu0 %v977
        %1064 = vmatprep.subr.mxu0 %v974
        %1065 = vmatpush1.msra.mxu0 %v973
        %1066 = vmatprep.subr.mxu0 %v970
        %1067 = vmatpush1.msra.mxu0 %v969
        %1068 = vmatprep.subr.mxu0 %v966
        %1069 = vmatpush1.msra.mxu0 %v965
        %1070 = vmatprep.subr.mxu0 %v962
        %1071 = vmatpush1.msra.mxu0 %v961
        %1072 = vmatprep.subr.mxu0 %v958
        %1073 = vmatpush1.msra.mxu0 %v957
        %1074 = vmatprep.subr.mxu0 %v954
        %1075 = vmatpush1.msra.mxu0 %v953
        %1076 = vmatprep.subr.mxu0 %v950
        %1077 = vmatpush1.msra.mxu0 %v949
        %1078 = vmatprep.subr.mxu0 %v946
        %1079 = vmatpush1.msra.mxu0 %v945
        %1080 = vmatprep.subr.mxu0 %v942
        %1081 = vmatpush1.msra.mxu0 %v941
        %1082 = vmatprep.subr.mxu0 %v938
        %1083 = vmatpush1.msra.mxu0 %v937
        %1084 = vmatprep.subr.mxu0 %v934
        %1085 = vmatpush1.msra.mxu0 %v933
        %1086 = vmatprep.subr.mxu0 %v930
        %1087 = vmatpush1.msra.mxu0 %v929
        %1088 = vmatprep.subr.mxu0 %v926
        %1089 = vmatpush1.msra.mxu0 %v925
        %1090 = vmatprep.subr.mxu0 0.0
        %1091 = vmatpush2.msra.mxu0 0.0
        %1092 = vmatprep.subr.mxu0 0.0
        %1093 = vmatpush2.msra.mxu0 0.0
        %1094 = vmatprep.subr.mxu0 0.0
        %1095 = vmatpush2.msra.mxu0 0.0
        %1096 = vmatprep.subr.mxu0 0.0
        %1097 = vmatpush2.msra.mxu0 0.0
        %1098 = vmatprep.subr.mxu0 0.0
        %1099 = vmatpush2.msra.mxu0 0.0
        %1100 = vmatprep.subr.mxu0 0.0
        %1101 = vmatpush2.msra.mxu0 0.0
        %1102 = vmatprep.subr.mxu0 0.0
        %1103 = vmatpush2.msra.mxu0 0.0
        %1104 = vmatprep.subr.mxu0 0.0
        %1105 = vmatpush2.msra.mxu0 0.0
        %1106 = vmatprep.subr.mxu0 0.0
        %1107 = vmatpush2.msra.mxu0 0.0
        %1108 = vmatprep.subr.mxu0 0.0
        %1109 = vmatpush2.msra.mxu0 0.0
        %1110 = vmatprep.subr.mxu0 0.0
        %1111 = vmatpush2.msra.mxu0 0.0
        %1112 = vmatprep.subr.mxu0 0.0
        %1113 = vmatpush2.msra.mxu0 0.0
        %1114 = vmatprep.subr.mxu0 0.0
        %1115 = vmatpush2.msra.mxu0 0.0
        %1116 = vmatprep.subr.mxu0 0.0
        %1117 = vmatpush2.msra.mxu0 0.0
        %1118 = vmatprep.subr.mxu0 0.0
        %1119 = vmatpush2.msra.mxu0 0.0
        %1120 = vmatprep.subr.mxu0 0.0
        %1121 = vmatpush2.msra.mxu0 0.0
        %1122 = vmatprep.mubr.f32.mxu0 0.0
        %1123 = vmatmul.mubr.f32.gmra.mxu0 %v921
        %v1124 = vpop.f32.mrf.mxu0
        %v1125 = vadd.f32 0.0, %v1124
        %v1126 = vpop.f32.mrf.mxu0
        %v1127 = vadd.f32 0.0, %v1126
        %1128 = vdwg.mxu0
        %1129 = vmatprep.subr.mxu0 %v917
        %1130 = vmatpush1.msra.mxu0 %v916
        %1131 = vmatprep.subr.mxu0 %v913
        %1132 = vmatpush1.msra.mxu0 %v912
        %1133 = vmatprep.subr.mxu0 %v909
        %1134 = vmatpush1.msra.mxu0 %v908
        %1135 = vmatprep.subr.mxu0 %v905
        %1136 = vmatpush1.msra.mxu0 %v904
        %1137 = vmatprep.subr.mxu0 %v901
        %1138 = vmatpush1.msra.mxu0 %v900
        %1139 = vmatprep.subr.mxu0 %v897
        %1140 = vmatpush1.msra.mxu0 %v896
        %1141 = vmatprep.subr.mxu0 %v893
        %1142 = vmatpush1.msra.mxu0 %v892
        %1143 = vmatprep.subr.mxu0 %v889
        %1144 = vmatpush1.msra.mxu0 %v888
        %1145 = vmatprep.subr.mxu0 %v885
        %1146 = vmatpush1.msra.mxu0 %v884
        %1147 = vmatprep.subr.mxu0 %v881
        %1148 = vmatpush1.msra.mxu0 %v880
        %1149 = vmatprep.subr.mxu0 %v877
        %1150 = vmatpush1.msra.mxu0 %v876
        %1151 = vmatprep.subr.mxu0 %v873
        %1152 = vmatpush1.msra.mxu0 %v872
        %1153 = vmatprep.subr.mxu0 %v869
        %1154 = vmatpush1.msra.mxu0 %v868
        %1155 = vmatprep.subr.mxu0 %v865
        %1156 = vmatpush1.msra.mxu0 %v864
        %1157 = vmatprep.subr.mxu0 %v861
        %1158 = vmatpush1.msra.mxu0 %v860
        %1159 = vmatprep.subr.mxu0 %v857
        %1160 = vmatpush1.msra.mxu0 %v856
        %1161 = vmatprep.subr.mxu0 0.0
        %1162 = vmatpush2.msra.mxu0 0.0
        %1163 = vmatprep.subr.mxu0 0.0
        %1164 = vmatpush2.msra.mxu0 0.0
        %1165 = vmatprep.subr.mxu0 0.0
        %1166 = vmatpush2.msra.mxu0 0.0
        %1167 = vmatprep.subr.mxu0 0.0
        %1168 = vmatpush2.msra.mxu0 0.0
        %1169 = vmatprep.subr.mxu0 0.0
        %1170 = vmatpush2.msra.mxu0 0.0
        %1171 = vmatprep.subr.mxu0 0.0
        %1172 = vmatpush2.msra.mxu0 0.0
        %1173 = vmatprep.subr.mxu0 0.0
        %1174 = vmatpush2.msra.mxu0 0.0
        %1175 = vmatprep.subr.mxu0 0.0
        %1176 = vmatpush2.msra.mxu0 0.0
        %1177 = vmatprep.subr.mxu0 0.0
        %1178 = vmatpush2.msra.mxu0 0.0
        %1179 = vmatprep.subr.mxu0 0.0
        %1180 = vmatpush2.msra.mxu0 0.0
        %1181 = vmatprep.subr.mxu0 0.0
        %1182 = vmatpush2.msra.mxu0 0.0
        %1183 = vmatprep.subr.mxu0 0.0
        %1184 = vmatpush2.msra.mxu0 0.0
        %1185 = vmatprep.subr.mxu0 0.0
        %1186 = vmatpush2.msra.mxu0 0.0
        %1187 = vmatprep.subr.mxu0 0.0
        %1188 = vmatpush2.msra.mxu0 0.0
        %1189 = vmatprep.subr.mxu0 0.0
        %1190 = vmatpush2.msra.mxu0 0.0
        %1191 = vmatprep.subr.mxu0 0.0
        %1192 = vmatpush2.msra.mxu0 0.0
        %1193 = vmatprep.mubr.f32.mxu0 0.0
        %1194 = vmatmul.mubr.f32.gmra.mxu0 %v852
        %v1195 = vpop.f32.mrf.mxu0
        %v1196 = vadd.f32 %v1054, %v1195
        %v1197 = vpop.f32.mrf.mxu0
        %v1198 = vadd.f32 %v1056, %v1197
        %1199 = vdwg.mxu0
        %1200 = vmatprep.subr.mxu0 %v919
        %1201 = vmatpush1.msra.mxu0 %v918
        %1202 = vmatprep.subr.mxu0 %v915
        %1203 = vmatpush1.msra.mxu0 %v914
        %1204 = vmatprep.subr.mxu0 %v911
        %1205 = vmatpush1.msra.mxu0 %v910
        %1206 = vmatprep.subr.mxu0 %v907
        %1207 = vmatpush1.msra.mxu0 %v906
        %1208 = vmatprep.subr.mxu0 %v903
        %1209 = vmatpush1.msra.mxu0 %v902
        %1210 = vmatprep.subr.mxu0 %v899
        %1211 = vmatpush1.msra.mxu0 %v898
        %1212 = vmatprep.subr.mxu0 %v895
        %1213 = vmatpush1.msra.mxu0 %v894
        %1214 = vmatprep.subr.mxu0 %v891
        %1215 = vmatpush1.msra.mxu0 %v890
        %1216 = vmatprep.subr.mxu0 %v887
        %1217 = vmatpush1.msra.mxu0 %v886
        %1218 = vmatprep.subr.mxu0 %v883
        %1219 = vmatpush1.msra.mxu0 %v882
        %1220 = vmatprep.subr.mxu0 %v879
        %1221 = vmatpush1.msra.mxu0 %v878
        %1222 = vmatprep.subr.mxu0 %v875
        %1223 = vmatpush1.msra.mxu0 %v874
        %1224 = vmatprep.subr.mxu0 %v871
        %1225 = vmatpush1.msra.mxu0 %v870
        %1226 = vmatprep.subr.mxu0 %v867
        %1227 = vmatpush1.msra.mxu0 %v866
        %1228 = vmatprep.subr.mxu0 %v863
        %1229 = vmatpush1.msra.mxu0 %v862
        %1230 = vmatprep.subr.mxu0 %v859
        %1231 = vmatpush1.msra.mxu0 %v858
        %1232 = vmatprep.subr.mxu0 0.0
        %1233 = vmatpush2.msra.mxu0 0.0
        %1234 = vmatprep.subr.mxu0 0.0
        %1235 = vmatpush2.msra.mxu0 0.0
        %1236 = vmatprep.subr.mxu0 0.0
        %1237 = vmatpush2.msra.mxu0 0.0
        %1238 = vmatprep.subr.mxu0 0.0
        %1239 = vmatpush2.msra.mxu0 0.0
        %1240 = vmatprep.subr.mxu0 0.0
        %1241 = vmatpush2.msra.mxu0 0.0
        %1242 = vmatprep.subr.mxu0 0.0
        %1243 = vmatpush2.msra.mxu0 0.0
        %1244 = vmatprep.subr.mxu0 0.0
        %1245 = vmatpush2.msra.mxu0 0.0
        %1246 = vmatprep.subr.mxu0 0.0
        %1247 = vmatpush2.msra.mxu0 0.0
        %1248 = vmatprep.subr.mxu0 0.0
        %1249 = vmatpush2.msra.mxu0 0.0
        %1250 = vmatprep.subr.mxu0 0.0
        %1251 = vmatpush2.msra.mxu0 0.0
        %1252 = vmatprep.subr.mxu0 0.0
        %1253 = vmatpush2.msra.mxu0 0.0
        %1254 = vmatprep.subr.mxu0 0.0
        %1255 = vmatpush2.msra.mxu0 0.0
        %1256 = vmatprep.subr.mxu0 0.0
        %1257 = vmatpush2.msra.mxu0 0.0
        %1258 = vmatprep.subr.mxu0 0.0
        %1259 = vmatpush2.msra.mxu0 0.0
        %1260 = vmatprep.subr.mxu0 0.0
        %1261 = vmatpush2.msra.mxu0 0.0
        %1262 = vmatprep.subr.mxu0 0.0
        %1263 = vmatpush2.msra.mxu0 0.0
        %1264 = vmatprep.mubr.f32.mxu0 0.0
        %1265 = vmatmul.mubr.f32.gmra.mxu0 %v852
        %v1266 = vpop.f32.mrf.mxu0
        %v1267 = vadd.f32 %v1125, %v1266
        %v1268 = vpop.f32.mrf.mxu0
        %v1269 = vadd.f32 %v1127, %v1268
        %1270 = vdwg.mxu0
        %s1271 = scalar_lea.vmem %s5, 4
        %v1272 = vld [vmem:[%s1271] sm:$0xf]
        %v1274 = vlaneseq
        %v1275 = vshrl.u32 %v1274, 7
        %v1276 = vsub.s32 0, %v1275
        %v1277 = vrot.slane %v1272, %v1276
        %v1278 = vlaneseq
        %v1279 = vshrl.u32 %v1278, 7
        %v1280 = vsub.s32 1, %v1279
        %v1281 = vrot.slane %v1272, %v1280
        %v1282 = vlaneseq
        %v1283 = vshrl.u32 %v1282, 7
        %v1284 = vsub.s32 2, %v1283
        %v1285 = vrot.slane %v1272, %v1284
        %v1286 = vlaneseq
        %v1287 = vshrl.u32 %v1286, 7
        %v1288 = vsub.s32 3, %v1287
        %v1289 = vrot.slane %v1272, %v1288
        %v1294 = vadd.f32 %v1196, %v1277
        %v1295 = vadd.f32 %v1198, %v1281
        %v1296 = vadd.f32 %v1267, %v1285
        %v1297 = vadd.f32 %v1269, %v1289
        %s1298 = scalar_lea.vmem [#allocation3], 8
        %v1299 = vld [vmem:[%s1298] sm:$0xff]
        %v1300 = vxor.u32 %v1294, 2147483648
        %v1301 = vmul.f32 %v1300, 1.442695
        %v1302 = vpow.pop %v1301
        %v1303 = vadd.f32 %v1302, 1.0
        %v1304 = vrcp.pop %v1303
        %v1305 = vmul.f32 1.0, %v1304
        %v1306 = vxor.u32 %v1295, 2147483648
        %v1307 = vmul.f32 %v1306, 1.442695
        %v1308 = vpow.pop %v1307
        %v1309 = vadd.f32 %v1308, 1.0
        %v1310 = vrcp.pop %v1309
        %v1311 = vmul.f32 1.0, %v1310
        %v1312 = vtanh.pop %v1296
        %v1313 = vxor.u32 %v1297, 2147483648
        %v1314 = vmul.f32 %v1313, 1.442695
        %v1315 = vpow.pop %v1314
        %v1316 = vadd.f32 %v1315, 1.0
        %v1317 = vrcp.pop %v1316
        %v1318 = vmul.f32 1.0, %v1317
        %v1319 = vmul.f32 %v1311, %v1299
        %v1320 = vmul.f32 %v1305, %v1312
        %v1321 = vadd.f32 %v1319, %v1320
        %v1322 = vtanh.pop %v1321
        %v1323 = vmul.f32 %v1318, %v1322
        %1324 = vst [vmem:[%s920] sm:$0xff] %v1323
        %1325 = vst [vmem:[%s1298] sm:$0xff] %v1321
        %v1326 = vld [vmem:[%s8] sm:$0xff]
        %v1327 = vld [vmem:[%s8 + $0x8] sm:$0xff]
        %v1328 = vld [vmem:[%s8 + $0x10] sm:$0xff]
        %v1329 = vld [vmem:[%s8 + $0x18] sm:$0xff]
        %v1330 = vld [vmem:[%s8 + $0x20] sm:$0xff]
        %v1331 = vld [vmem:[%s8 + $0x28] sm:$0xff]
        %v1332 = vld [vmem:[%s8 + $0x30] sm:$0xff]
        %v1333 = vld [vmem:[%s8 + $0x38] sm:$0xff]
        %v1334 = vld [vmem:[%s8 + $0x40] sm:$0xff]
        %v1335 = vld [vmem:[%s8 + $0x48] sm:$0xff]
        %v1336 = vld [vmem:[%s8 + $0x50] sm:$0xff]
        %v1337 = vld [vmem:[%s8 + $0x58] sm:$0xff]
        %v1338 = vld [vmem:[%s8 + $0x60] sm:$0xff]
        %v1339 = vld [vmem:[%s8 + $0x68] sm:$0xff]
        %v1340 = vld [vmem:[%s8 + $0x70] sm:$0xff]
        %v1341 = vld [vmem:[%s8 + $0x78] sm:$0xff]
        %v1342 = vld [vmem:[%s9] sm:$0x1]
        %v1344 = vlaneseq
        %v1345 = vshrl.u32 %v1344, 7
        %v1346 = vsub.s32 0, %v1345
        %v1347 = vrot.slane %v1342, %v1346
        %1349 = vmatprep.subr.mxu0 0.0
        %1350 = vmatpush1.msra.mxu0 %v1341
        %1351 = vmatprep.subr.mxu0 0.0
        %1352 = vmatpush1.msra.mxu0 %v1340
        %1353 = vmatprep.subr.mxu0 0.0
        %1354 = vmatpush1.msra.mxu0 %v1339
        %1355 = vmatprep.subr.mxu0 0.0
        %1356 = vmatpush1.msra.mxu0 %v1338
        %1357 = vmatprep.subr.mxu0 0.0
        %1358 = vmatpush1.msra.mxu0 %v1337
        %1359 = vmatprep.subr.mxu0 0.0
        %1360 = vmatpush1.msra.mxu0 %v1336
        %1361 = vmatprep.subr.mxu0 0.0
        %1362 = vmatpush1.msra.mxu0 %v1335
        %1363 = vmatprep.subr.mxu0 0.0
        %1364 = vmatpush1.msra.mxu0 %v1334
        %1365 = vmatprep.subr.mxu0 0.0
        %1366 = vmatpush1.msra.mxu0 %v1333
        %1367 = vmatprep.subr.mxu0 0.0
        %1368 = vmatpush1.msra.mxu0 %v1332
        %1369 = vmatprep.subr.mxu0 0.0
        %1370 = vmatpush1.msra.mxu0 %v1331
        %1371 = vmatprep.subr.mxu0 0.0
        %1372 = vmatpush1.msra.mxu0 %v1330
        %1373 = vmatprep.subr.mxu0 0.0
        %1374 = vmatpush1.msra.mxu0 %v1329
        %1375 = vmatprep.subr.mxu0 0.0
        %1376 = vmatpush1.msra.mxu0 %v1328
        %1377 = vmatprep.subr.mxu0 0.0
        %1378 = vmatpush1.msra.mxu0 %v1327
        %1379 = vmatprep.subr.mxu0 0.0
        %1380 = vmatpush1.msra.mxu0 %v1326
        %1381 = vmatprep.subr.mxu0 0.0
        %1382 = vmatpush2.msra.mxu0 0.0
        %1383 = vmatprep.subr.mxu0 0.0
        %1384 = vmatpush2.msra.mxu0 0.0
        %1385 = vmatprep.subr.mxu0 0.0
        %1386 = vmatpush2.msra.mxu0 0.0
        %1387 = vmatprep.subr.mxu0 0.0
        %1388 = vmatpush2.msra.mxu0 0.0
        %1389 = vmatprep.subr.mxu0 0.0
        %1390 = vmatpush2.msra.mxu0 0.0
        %1391 = vmatprep.subr.mxu0 0.0
        %1392 = vmatpush2.msra.mxu0 0.0
        %1393 = vmatprep.subr.mxu0 0.0
        %1394 = vmatpush2.msra.mxu0 0.0
        %1395 = vmatprep.subr.mxu0 0.0
        %1396 = vmatpush2.msra.mxu0 0.0
        %1397 = vmatprep.subr.mxu0 0.0
        %1398 = vmatpush2.msra.mxu0 0.0
        %1399 = vmatprep.subr.mxu0 0.0
        %1400 = vmatpush2.msra.mxu0 0.0
        %1401 = vmatprep.subr.mxu0 0.0
        %1402 = vmatpush2.msra.mxu0 0.0
        %1403 = vmatprep.subr.mxu0 0.0
        %1404 = vmatpush2.msra.mxu0 0.0
        %1405 = vmatprep.subr.mxu0 0.0
        %1406 = vmatpush2.msra.mxu0 0.0
        %1407 = vmatprep.subr.mxu0 0.0
        %1408 = vmatpush2.msra.mxu0 0.0
        %1409 = vmatprep.subr.mxu0 0.0
        %1410 = vmatpush2.msra.mxu0 0.0
        %1411 = vmatprep.subr.mxu0 0.0
        %1412 = vmatpush2.msra.mxu0 0.0
        %1413 = vmatprep.mubr.f32.mxu0 0.0
        %1414 = vmatmul.mubr.f32.gmra.mxu0 %v1323
        %v1415 = vpop.f32.mrf.mxu0
        %v1416 = vadd.f32 %v1347, %v1415
        %v1417 = vpop.f32.mrf.mxu0
        %1418 = vdwg.mxu0
        %1419 = vst [vmem:[%s349] sm:$0xff] %v1416
        %1420 = vst [vmem:[#allocation4] sm:$0xff] %v1416
        %p1421 = scmp.lt.s32.totalorder %s28, 6
        %s1422 = scalar_select %p1421, %s28, 6
        %s1423 = smul.addr %s1422, 8
        %s1424 = scalar_lea.vmem %s10, %s1423
        // Predicated region
        $region65: #{seq2seq_forward.5} parent=55 // pred_check
          %p1425 = pneg %p240
        $region66: #{seq2seq_forward.5} parent=55 // pred_check_branch
          %1427 = sbr.rel (%p1425) target = $region68
        $region67: #{seq2seq_forward.5} parent=55 // pred_region
          _
        $region68: #{seq2seq_forward.5} parent=55 // pred_fallthru
          _
      $region56: #{seq2seq_forward.5} parent=5 // pred_fallthru
        _
      %p1428 = scmp.le.s32.totalorder 2, %s23
      // Predicated region
      $region69: #{seq2seq_forward.5} parent=5 // pred_check
        %p1429 = pneg %p1428
      $region70: #{seq2seq_forward.5} parent=5 // pred_check_branch
        %1431 = sbr.rel (%p1429) target = $region72
      $region71: #{seq2seq_forward.5} parent=5 // pred_region
        %s1432 = ssub.s32 %s23, 2
        // Predicated region
        $region73: #{seq2seq_forward.5} parent=71 // pred_check
          %p1433 = pneg %p246
        $region74: #{seq2seq_forward.5} parent=71 // pred_check_branch
          %1435 = sbr.rel (%p1433) target = $region76
        $region75: #{seq2seq_forward.5} parent=71 // pred_region
          %p1436 = scmp.lt.s32.totalorder %s29, 6
          %s1437 = scalar_select %p1436, %s29, 6
          %s1438 = smul.addr %s1437, 8
          %s1439 = scalar_lea.vmem %s10, %s1438
        $region76: #{seq2seq_forward.5} parent=71 // pred_fallthru
          _
      $region72: #{seq2seq_forward.5} parent=5 // pred_fallthru
        _
    $region6: #{seq2seq_forward.5} parent=1 // loop_footer
      %s27 = sadd.s32 1, %s23
    $region7: #{seq2seq_forward.5} parent=1 // loop_footer_branch
      %22 = sbr.rel target = $region3
    $region8: #{seq2seq_forward.5} parent=1 // loop_exit
      _
    %1440 = vsyncpa [#allocation8], 1
    %s1441 = scalar_lea.sflag [#allocation8], 1
    %1442 = vsyncpa %s1441, 1

</llo_original>
